<compile_context>
chip_gen: v6e
topology: v6e:2x2x1
jax: 0.10.0
libtpu: 0.0.40
codegen_flags: <defaults>
</compile_context>

<pallas_src>
from functools import partial

import numpy as np
import jax
import jax.numpy as jnp
from jax.experimental import pallas as pl
from jax.experimental.pallas import tpu as pltpu

EPS = 1e-5
LANES = 128
# Leave headroom under v7x's 64 MiB physical VMEM (v5e/v6e have 128 MiB).
VMEM_LIMIT = 48 * 1024 * 1024


def _rup(x, m):
    return ((x + m - 1) // m) * m


def _choose_tm(m, bytes_per_row, target=2048, budget=16 << 20):
    """Row tile: as large as possible (2048 amortizes per-step overhead) while
    double-buffered per-step traffic stays well inside the scoped VMEM limit."""
    tm = min(target, max(8, _rup(m, 8)))
    while tm > 8 and 2 * tm * bytes_per_row > budget:
        tm //= 2
    return max(8, tm)


def _row_block(ho, wo, c, budget=512 << 10):
    """Output-row block for conv2: keeps the (rb, wo, 9*c) bf16 patch scratch
    small (fits v7x VMEM for realistic ResNet shapes) and gives the grid a
    second axis so it can pipeline / feed both TensorCores."""
    cap = max(1, budget // (wo * 9 * c * 2))
    rb = max(1, min(ho, cap))
    while ho % rb:
        rb -= 1
    return rb


# ----------------------------------------------------------------------------
# Per-tile BN partials: one (1, 2, C) block; sublane 0 = sum, sublane 1 = sumsq.
# Computed from the f32 MXU accumulator (before any bf16 cast of the output).
# ----------------------------------------------------------------------------
def _write_stats(y_f32, st_ref):
    s = jnp.sum(y_f32, axis=0, keepdims=True)
    q = jnp.sum(y_f32 * y_f32, axis=0, keepdims=True)
    st_ref[0] = jnp.concatenate([s, q], axis=0)


def _reduce_stats(st):
    return st[:, 0, :].sum(axis=0), st[:, 1, :].sum(axis=0)


def _bn_affine(s, q, m_true, gamma, beta):
    # TODO(synk): E[x^2]-E[x]^2 in f32 can cancel for very large row counts;
    # a Welford-style tile combine would be safer at production sizes.
    mean = s / m_true
    var = jnp.maximum(q / m_true - mean * mean, 0.0)   # biased variance (BN train)
    scale = gamma * jax.lax.rsqrt(var + EPS)
    shift = beta - mean * scale
    return scale, shift


# ----------------------------------------------------------------------------
# Kernel A: 1x1 conv as tiled matmul (+ BN partial stats). x is f32; the bf16
# cast for the MXU happens in-kernel (no separate pad/cast HBM pass).
# ----------------------------------------------------------------------------
def _matmul_stats_kernel(x_ref, w_ref, y_ref, st_ref):
    y = jnp.dot(x_ref[...].astype(jnp.bfloat16), w_ref[...],
                preferred_element_type=jnp.float32)
    y_ref[...] = y.astype(y_ref.dtype)
    _write_stats(y, st_ref)


def matmul_stats(x2d, w, *, tm):
    mp, kp = x2d.shape
    cout = w.shape[1]
    nt = mp // tm
    y, st = pl.pallas_call(
        _matmul_stats_kernel,
        grid=(nt,),
        in_specs=[
            pl.BlockSpec((tm, kp), lambda i: (i, 0)),
            pl.BlockSpec((kp, cout), lambda i: (0, 0)),      # weight resident
        ],
        out_specs=(
            pl.BlockSpec((tm, cout), lambda i: (i, 0)),
            pl.BlockSpec((1, 2, cout), lambda i: (i, 0, 0)),
        ),
        out_shape=(
            jax.ShapeDtypeStruct((mp, cout), jnp.bfloat16),
            jax.ShapeDtypeStruct((nt, 2, cout), jnp.float32),
        ),
        compiler_params=pltpu.CompilerParams(
            dimension_semantics=("parallel",), vmem_limit_bytes=VMEM_LIMIT),
        cost_estimate=pl.CostEstimate(
            flops=2 * mp * kp * cout, transcendentals=0,
            bytes_accessed=x2d.size * 4 + w.size * 2 + mp * cout * 2),
    )(x2d, w)
    s, q = _reduce_stats(st)
    return y, s, q


# ----------------------------------------------------------------------------
# Kernel B: fused bn1+ReLU + zero halo + 3x3 conv (+ BN partial stats).
# Grid = (batch, output-row blocks). The normalized, spatially padded image is
# staged once per image (r == 0) into a VMEM scratch; each row block slices its
# 9 taps into a (rb, wo, 9*Cp) bf16 patch and issues ONE lane-dense matmul.
# ----------------------------------------------------------------------------
def _conv3x3_fused_kernel(y1_ref, sc_ref, sh_ref, w_ref, y2_ref, st_ref,
                          apad_ref, patch_ref, *, h, w, wo, rb, stride):
    c = y1_ref.shape[-1]
    r = pl.program_id(1)

    @pl.when(r == 0)
    def _():
        # zero the 1-pixel halo (interior is fully rewritten for this image)
        zrow = jnp.zeros((1, w + 2, c), jnp.float32)
        apad_ref[0:1] = zrow
        apad_ref[h + 1:h + 2] = zrow
        zcol = jnp.zeros((h + 2, 1, c), jnp.float32)
        apad_ref[:, 0:1] = zcol
        apad_ref[:, w + 1:w + 2] = zcol
        # bn1 + ReLU fused while staging the padded activation block
        a = jnp.maximum(
            y1_ref[0].astype(jnp.float32) * sc_ref[...] + sh_ref[...], 0.0)
        apad_ref[1:h + 1, 1:w + 1, :] = a

    r0 = pl.multiple_of(r * rb, rb)
    for k in range(9):                                  # 9 taps, fully unrolled
        kh, kw = divmod(k, 3)
        if stride == 1:
            tap = apad_ref[pl.ds(r0 + kh, rb), kw:kw + wo, :]
        else:
            # TODO(synk): strided (stride > 1) tap extraction via strided pl.ds
            # is not exercised by the demo (stride=1) and is untested.
            tap = apad_ref[pl.ds(r0 * stride + kh, rb, stride),
                           pl.ds(kw, wo, stride), :]
        patch_ref[:, :, k * c:(k + 1) * c] = tap.astype(jnp.bfloat16)

    # TODO(synk): on v5e (1 vst slot) per-tap accumulation would beat the
    # im2col patch build; we keep the single K=9*Cp matmul (best on v6e/v7x).
    y = jnp.dot(patch_ref[...].reshape(rb * wo, 9 * c), w_ref[...],
                preferred_element_type=jnp.float32)
    y2_ref[0] = y.reshape(rb, wo, -1).astype(jnp.bfloat16)
    _write_stats(y, st_ref)


def conv3x3_fused(y1, sc1, sh1, w2mat, *, h, w, ho, wo, stride):
    n, _, _, c = y1.shape
    cout = w2mat.shape[1]
    rb = _row_block(ho, wo, c)
    nr = ho // rb
    y2, st = pl.pallas_call(
        partial(_conv3x3_fused_kernel, h=h, w=w, wo=wo, rb=rb, stride=stride),
        grid=(n, nr),
        in_specs=[
            pl.BlockSpec((1, h, w, c), lambda b, r: (b, 0, 0, 0)),   # resident per image
            pl.BlockSpec((1, c), lambda b, r: (0, 0)),
            pl.BlockSpec((1, c), lambda b, r: (0, 0)),
            pl.BlockSpec((9 * c, cout), lambda b, r: (0, 0)),        # resident weight
        ],
        out_specs=(
            pl.BlockSpec((1, rb, wo, cout), lambda b, r: (b, r, 0, 0)),
            pl.BlockSpec((1, 2, cout), lambda b, r: (b * nr + r, 0, 0)),
        ),
        out_shape=(
            jax.ShapeDtypeStruct((n, ho, wo, cout), jnp.bfloat16),
            jax.ShapeDtypeStruct((n * nr, 2, cout), jnp.float32),
        ),
        scratch_shapes=[
            pltpu.VMEM((h + 2, w + 2, c), jnp.float32),     # padded, normalized image
            pltpu.VMEM((rb, wo, 9 * c), jnp.bfloat16),      # per-row-block patch
        ],
        compiler_params=pltpu.CompilerParams(
            dimension_semantics=("parallel", "arbitrary"),
            vmem_limit_bytes=VMEM_LIMIT),
        cost_estimate=pl.CostEstimate(
            flops=2 * n * ho * wo * 9 * c * cout, transcendentals=0,
            bytes_accessed=y1.size * 2 + w2mat.size * 2 + n * ho * wo * cout * 2),
    )(y1, sc1.reshape(1, c), sh1.reshape(1, c), w2mat)
    s, q = _reduce_stats(st)
    return y2, s, q


# ----------------------------------------------------------------------------
# Kernel C: fused bn2+ReLU + 1x1 conv (+ BN partial stats). Padded-row masking
# (only needed so padded rows can't corrupt bn3 stats) is gated to the last
# tile; all other tiles take the unmasked fast path.
# ----------------------------------------------------------------------------
def _norm_matmul_stats_kernel(y_ref, sc_ref, sh_ref, w_ref, o_ref, st_ref,
                              *, tm, m_true):
    a = jnp.maximum(y_ref[...].astype(jnp.float32) * sc_ref[...] + sh_ref[...], 0.0)
    if m_true % tm != 0:
        i = pl.program_id(0)

        def _mask(v):
            rows = i * tm + jax.lax.broadcasted_iota(jnp.int32, v.shape, 0)
            return jnp.where(rows < m_true, v, 0.0)

        a = jax.lax.cond(i == pl.num_programs(0) - 1, _mask, lambda v: v, a)
    y = jnp.dot(a.astype(jnp.bfloat16), w_ref[...],
                preferred_element_type=jnp.float32)
    o_ref[...] = y.astype(o_ref.dtype)
    _write_stats(y, st_ref)


def norm_matmul_stats(y_prev, scale, shift, w, *, tm, m_true):
    mp, c = y_prev.shape
    cout = w.shape[1]
    nt = mp // tm
    y, st = pl.pallas_call(
        partial(_norm_matmul_stats_kernel, tm=tm, m_true=m_true),
        grid=(nt,),
        in_specs=[
            pl.BlockSpec((tm, c), lambda i: (i, 0)),
            pl.BlockSpec((1, c), lambda i: (0, 0)),
            pl.BlockSpec((1, c), lambda i: (0, 0)),
            pl.BlockSpec((c, cout), lambda i: (0, 0)),
        ],
        out_specs=(
            pl.BlockSpec((tm, cout), lambda i: (i, 0)),
            pl.BlockSpec((1, 2, cout), lambda i: (i, 0, 0)),
        ),
        out_shape=(
            jax.ShapeDtypeStruct((mp, cout), jnp.bfloat16),
            jax.ShapeDtypeStruct((nt, 2, cout), jnp.float32),
        ),
        compiler_params=pltpu.CompilerParams(
            dimension_semantics=("parallel",), vmem_limit_bytes=VMEM_LIMIT),
        cost_estimate=pl.CostEstimate(
            flops=2 * mp * c * cout, transcendentals=0,
            bytes_accessed=mp * c * 2 + c * cout * 2 + mp * cout * 2),
    )(y_prev, scale.reshape(1, c), shift.reshape(1, c), w)
    s, q = _reduce_stats(st)
    return y, s, q


# ----------------------------------------------------------------------------
# Kernel D: bn3 + scalar residual (+4) + ReLU.
# ----------------------------------------------------------------------------
def _norm_act_kernel(y_ref, sc_ref, sh_ref, o_ref, *, add_const):
    o_ref[...] = jnp.maximum(
        y_ref[...].astype(jnp.float32) * sc_ref[...] + sh_ref[...] + add_const, 0.0
    ).astype(o_ref.dtype)


def norm_act(y, scale, shift, *, tm, add_const, out_dtype):
    mp, c = y.shape
    nt = mp // tm
    return pl.pallas_call(
        partial(_norm_act_kernel, add_const=add_const),
        grid=(nt,),
        in_specs=[
            pl.BlockSpec((tm, c), lambda i: (i, 0)),
            pl.BlockSpec((1, c), lambda i: (0, 0)),
            pl.BlockSpec((1, c), lambda i: (0, 0)),
        ],
        out_specs=pl.BlockSpec((tm, c), lambda i: (i, 0)),
        out_shape=jax.ShapeDtypeStruct((mp, c), out_dtype),
        compiler_params=pltpu.CompilerParams(
            dimension_semantics=("parallel",), vmem_limit_bytes=VMEM_LIMIT),
    )(y, scale.reshape(1, c), shift.reshape(1, c))


# ----------------------------------------------------------------------------
# Wrapper: Bottleneck forward.  Layout / padding at the NCHW boundary is glue
# only; in a full ResNet the NHWC (channel-padded) layout would be carried
# between blocks and these boundary ops amortize away.
# ----------------------------------------------------------------------------
def bottleneck_forward(x_nchw, params, *, stride=1):
    # TODO(synk): only groups=1 and downsample=None (the module defaults) are
    # implemented; identity is the literal scalar 4 as in the module source.
    n, cin, h, w = x_nchw.shape
    width = params["w1"].shape[0]
    cout = params["w3"].shape[0]
    cin_p = _rup(cin, LANES)
    c_p = _rup(width, LANES)
    cout_p = _rup(cout, LANES)

    x = jnp.transpose(x_nchw, (0, 2, 3, 1))                       # NHWC, f32

    # --- stage 1: conv1 (1x1) + bn1 stats (bn1+relu fused into stage 2) ------
    m1 = n * h * w
    tm1 = _choose_tm(m1, cin_p * 4 + c_p * 2)
    m1p = _rup(m1, tm1)
    x2d = jnp.pad(x.reshape(m1, cin), ((0, m1p - m1), (0, cin_p - cin)))
    w1 = jnp.pad(params["w1"].reshape(width, cin).T,
                 ((0, cin_p - cin), (0, c_p - width))).astype(jnp.bfloat16)
    g1 = jnp.pad(params["g1"], (0, c_p - width))
    b1 = jnp.pad(params["b1"], (0, c_p - width))

    y1, s1, q1 = matmul_stats(x2d, w1, tm=tm1)
    sc1, sh1 = _bn_affine(s1, q1, m1, g1, b1)
    y1 = y1[:m1].reshape(n, h, w, c_p)

    # --- stage 2: (bn1+relu fused) conv2 (3x3, stride) + bn2 stats ------------
    ho = (h + 2 - 3) // stride + 1
    wo = (w + 2 - 3) // stride + 1
    m2 = n * ho * wo
    w2 = jnp.transpose(params["w2"], (2, 3, 1, 0))                 # (kh, kw, in, out)
    w2 = jnp.pad(w2, ((0, 0), (0, 0), (0, c_p - width), (0, c_p - width)))
    w2 = w2.reshape(9 * c_p, c_p).astype(jnp.bfloat16)
    g2 = jnp.pad(params["g2"], (0, c_p - width))
    b2 = jnp.pad(params["b2"], (0, c_p - width))

    y2, s2, q2 = conv3x3_fused(y1, sc1, sh1, w2, h=h, w=w, ho=ho, wo=wo,
                               stride=stride)
    sc2, sh2 = _bn_affine(s2, q2, m2, g2, b2)

    # --- stage 3: (bn2+relu fused) conv3 (1x1) + bn3 stats --------------------
    tm2 = _choose_tm(m2, c_p * 2 + cout_p * 2)
    m2p = _rup(m2, tm2)
    y2f = jnp.pad(y2.reshape(m2, c_p), ((0, m2p - m2), (0, 0)))
    w3 = jnp.pad(params["w3"].reshape(cout, width).T,
                 ((0, c_p - width), (0, cout_p - cout))).astype(jnp.bfloat16)
    g3 = jnp.pad(params["g3"], (0, cout_p - cout))
    b3 = jnp.pad(params["b3"], (0, cout_p - cout))

    y3, s3, q3 = norm_matmul_stats(y2f, sc2, sh2, w3, tm=tm2, m_true=m2)
    sc3, sh3 = _bn_affine(s3, q3, m2, g3, b3)

    # --- stage 4: bn3 + (+4) + relu -------------------------------------------
    out = norm_act(y3, sc3, sh3, tm=tm2, add_const=4.0, out_dtype=jnp.float32)
    out = out[:m2, :cout].reshape(n, ho, wo, cout)
    return jnp.transpose(out, (0, 3, 1, 2))                        # NCHW


# ----------------------------------------------------------------------------
# Pure-JAX reference (mirrors the PyTorch module, NCHW) for a sanity check.
# ----------------------------------------------------------------------------
def bottleneck_reference(x, params, *, stride=1):
    def conv(x, w, s=1, p=0):
        return jax.lax.conv_general_dilated(
            x, w, (s, s), [(p, p), (p, p)],
            dimension_numbers=("NCHW", "OIHW", "NCHW"))

    def bn(x, g, b):
        mean = jnp.mean(x, axis=(0, 2, 3), keepdims=True)
        var = jnp.mean((x - mean) ** 2, axis=(0, 2, 3), keepdims=True)
        return ((x - mean) * jax.lax.rsqrt(var + EPS)
                * g[None, :, None, None] + b[None, :, None, None])

    out = jax.nn.relu(bn(conv(x, params["w1"]), params["g1"], params["b1"]))
    out = jax.nn.relu(bn(conv(out, params["w2"], stride, 1),
                         params["g2"], params["b2"]))
    out = bn(conv(out, params["w3"]), params["g3"], params["b3"])
    return jax.nn.relu(out + 4.0)   # identity == 4 (downsample is None)


def make_params(key, in_channel, out_channel, groups=1, width_per_group=64):
    width = int(out_channel * (width_per_group / 64.0)) * groups
    cout = out_channel * 4  # expansion
    ks = jax.random.split(key, 9)
    return {
        "w1": 0.1 * jax.random.normal(ks[0], (width, in_channel, 1, 1), jnp.float32),
        "w2": 0.1 * jax.random.normal(ks[1], (width, width // groups, 3, 3), jnp.float32),
        "w3": 0.1 * jax.random.normal(ks[2], (cout, width, 1, 1), jnp.float32),
        "g1": 1.0 + 0.1 * jax.random.normal(ks[3], (width,), jnp.float32),
        "b1": 0.1 * jax.random.normal(ks[4], (width,), jnp.float32),
        "g2": 1.0 + 0.1 * jax.random.normal(ks[5], (width,), jnp.float32),
        "b2": 0.1 * jax.random.normal(ks[6], (width,), jnp.float32),
        "g3": 1.0 + 0.1 * jax.random.normal(ks[7], (cout,), jnp.float32),
        "b3": 0.1 * jax.random.normal(ks[8], (cout,), jnp.float32),
    }


if __name__ == "__main__":
    key = jax.random.PRNGKey(0)
    k_x, k_p = jax.random.split(key)

    in_channel, out_channel, stride = 4, 4, 1
    x = jax.random.normal(k_x, (2, in_channel, 16, 16), jnp.float32)   # NCHW
    params = make_params(k_p, in_channel, out_channel)

    fwd = jax.jit(partial(bottleneck_forward, stride=stride))
    out = jax.block_until_ready(fwd(x, params))

    ref = jax.block_until_ready(bottleneck_reference(x, params, stride=stride))
    np.testing.assert_allclose(np.asarray(out), np.asarray(ref),
                               rtol=5e-2, atol=7.5e-2)

    assert out.shape == (2, out_channel * 4, 16, 16)
    print("KERNEL_OK")
</pallas_src>

<mosaic_0001>
module attributes {stable_mosaic.version = 11 : i64} {
  func.func @_matmul_stats_kernel(%arg0: i32, %arg1: memref<512x128xf32, #tpu.memory_space<vmem>>, %arg2: memref<128x128xbf16, #tpu.memory_space<vmem>>, %arg3: memref<512x128xbf16, #tpu.memory_space<vmem>>, %arg4: memref<1x2x128xf32, #tpu.memory_space<vmem>>) attributes {dimension_semantics = [#tpu.dimension_semantics<parallel>], iteration_bounds = array<i64: 1>, scalar_prefetch = 0 : i64, scratch_operands = 0 : i64, tpu.core_type = #tpu.core_type<tc>, window_params = [{transform_indices = @transform_0, window_bounds = array<i64: 512, 128>}, {pipeline_mode = #tpu.pipeline_mode<synchronous>, transform_indices = @transform_1, window_bounds = array<i64: 128, 128>}, {transform_indices = @transform_2, window_bounds = array<i64: 512, 128>}, {transform_indices = @transform_3, window_bounds = array<i64: 1, 2, 128>}]} {
    %c0 = arith.constant 0 : index
    %c0_0 = arith.constant 0 : index
    %0 = vector.load %arg1[%c0, %c0_0] : memref<512x128xf32, #tpu.memory_space<vmem>>, vector<512x128xf32>
    %1 = arith.truncf %0 : vector<512x128xf32> to vector<512x128xbf16>
    %c0_1 = arith.constant 0 : index
    %c0_2 = arith.constant 0 : index
    %2 = vector.load %arg2[%c0_1, %c0_2] : memref<128x128xbf16, #tpu.memory_space<vmem>>, vector<128x128xbf16>
    %cst = arith.constant dense<0.000000e+00> : vector<512x128xf32>
    %3 = tpu.matmul %1, %2, %cst {dimension_numbers = #tpu.dot_dimension_numbers<[1], [0], [0], [1], [0, 0, 1, 1], [], []>} : vector<512x128xbf16>, vector<128x128xbf16>, vector<512x128xf32> -> vector<512x128xf32>
    %4 = arith.truncf %3 : vector<512x128xf32> to vector<512x128xbf16>
    %c0_3 = arith.constant 0 : index
    %c0_4 = arith.constant 0 : index
    %5 = vector.load %arg3[%c0_3, %c0_4] : memref<512x128xbf16, #tpu.memory_space<vmem>>, vector<512x128xbf16>
    tpu.vector_store %arg3[%c0_3, %c0_4], %4 {strides = array<i32>} : memref<512x128xbf16, #tpu.memory_space<vmem>>, vector<512x128xbf16>,
    %cst_5 = arith.constant dense<0.000000e+00> : vector<128xf32>
    %6 = vector.multi_reduction <add>, %3, %cst_5 [0] : vector<512x128xf32> to vector<128xf32>
    %7 = vector.shape_cast %6 : vector<128xf32> to vector<1x128xf32>
    %8 = arith.mulf %3, %3 : vector<512x128xf32>
    %cst_6 = arith.constant dense<0.000000e+00> : vector<128xf32>
    %9 = vector.multi_reduction <add>, %8, %cst_6 [0] : vector<512x128xf32> to vector<128xf32>
    %10 = vector.shape_cast %9 : vector<128xf32> to vector<1x128xf32>
    %11 = tpu.concatenate %7, %10 in 0 : vector<1x128xf32>, vector<1x128xf32> -> vector<2x128xf32>
    %c0_7 = arith.constant 0 : index
    %c0_8 = arith.constant 0 : index
    %c0_9 = arith.constant 0 : index
    %12 = vector.load %arg4[%c0_7, %c0_8, %c0_9] : memref<1x2x128xf32, #tpu.memory_space<vmem>>, vector<1x2x128xf32>
    %13 = vector.shape_cast %12 : vector<1x2x128xf32> to vector<2x128xf32>
    %14 = vector.shape_cast %11 : vector<2x128xf32> to vector<1x2x128xf32>
    tpu.vector_store %arg4[%c0_7, %c0_8, %c0_9], %14 {strides = array<i32>} : memref<1x2x128xf32, #tpu.memory_space<vmem>>, vector<1x2x128xf32>,
    return
  }
  func.func @transform_0(%arg0: i32) -> (i32, i32) {
    %c0_i32 = arith.constant 0 : i32
    %c0_i32_0 = arith.constant 0 : i32
    return %arg0, %c0_i32 : i32, i32
  }
  func.func @transform_1(%arg0: i32) -> (i32, i32) {
    %c0_i32 = arith.constant 0 : i32
    %c0_i32_0 = arith.constant 0 : i32
    %c0_i32_1 = arith.constant 0 : i32
    return %c0_i32, %c0_i32_0 : i32, i32
  }
  func.func @transform_2(%arg0: i32) -> (i32, i32) {
    %c0_i32 = arith.constant 0 : i32
    %c0_i32_0 = arith.constant 0 : i32
    return %arg0, %c0_i32 : i32, i32
  }
  func.func @transform_3(%arg0: i32) -> (i32, i32, i32) {
    %c0_i32 = arith.constant 0 : i32
    %c0_i32_0 = arith.constant 0 : i32
    %c0_i32_1 = arith.constant 0 : i32
    return %arg0, %c0_i32, %c0_i32_0 : i32, i32, i32
  }
}

module attributes {stable_mosaic.version = 11 : i64} {
  func.func @_norm_matmul_stats_kernel(%arg0: i32, %arg1: memref<512x128xbf16, #tpu.memory_space<vmem>>, %arg2: memref<1x128xf32, #tpu.memory_space<vmem>>, %arg3: memref<1x128xf32, #tpu.memory_space<vmem>>, %arg4: memref<128x128xbf16, #tpu.memory_space<vmem>>, %arg5: memref<512x128xbf16, #tpu.memory_space<vmem>>, %arg6: memref<1x2x128xf32, #tpu.memory_space<vmem>>) attributes {dimension_semantics = [#tpu.dimension_semantics<parallel>], iteration_bounds = array<i64: 1>, scalar_prefetch = 0 : i64, scratch_operands = 0 : i64, tpu.core_type = #tpu.core_type<tc>, window_params = [{transform_indices = @transform_0, window_bounds = array<i64: 512, 128>}, {pipeline_mode = #tpu.pipeline_mode<synchronous>, transform_indices = @transform_1, window_bounds = array<i64: 1, 128>}, {pipeline_mode = #tpu.pipeline_mode<synchronous>, transform_indices = @transform_2, window_bounds = array<i64: 1, 128>}, {pipeline_mode = #tpu.pipeline_mode<synchronous>, transform_indices = @transform_3, window_bounds = array<i64: 128, 128>}, {transform_indices = @transform_4, window_bounds = array<i64: 512, 128>}, {transform_indices = @transform_5, window_bounds = array<i64: 1, 2, 128>}]} {
    %c0 = arith.constant 0 : index
    %c0_0 = arith.constant 0 : index
    %0 = vector.load %arg1[%c0, %c0_0] : memref<512x128xbf16, #tpu.memory_space<vmem>>, vector<512x128xbf16>
    %1 = arith.extf %0 : vector<512x128xbf16> to vector<512x128xf32>
    %c0_1 = arith.constant 0 : index
    %c0_2 = arith.constant 0 : index
    %2 = vector.load %arg2[%c0_1, %c0_2] : memref<1x128xf32, #tpu.memory_space<vmem>>, vector<1x128xf32>
    %3 = vector.broadcast %2 : vector<1x128xf32> to vector<512x128xf32>
    %4 = arith.mulf %1, %3 : vector<512x128xf32>
    %c0_3 = arith.constant 0 : index
    %c0_4 = arith.constant 0 : index
    %5 = vector.load %arg3[%c0_3, %c0_4] : memref<1x128xf32, #tpu.memory_space<vmem>>, vector<1x128xf32>
    %6 = vector.broadcast %5 : vector<1x128xf32> to vector<512x128xf32>
    %7 = arith.addf %4, %6 : vector<512x128xf32>
    %cst = arith.constant 0.000000e+00 : f32
    %8 = vector.broadcast %cst : f32 to vector<512x128xf32>
    %9 = arith.maximumf %7, %8 : vector<512x128xf32>
    %10 = arith.truncf %9 : vector<512x128xf32> to vector<512x128xbf16>
    %c0_5 = arith.constant 0 : index
    %c0_6 = arith.constant 0 : index
    %11 = vector.load %arg4[%c0_5, %c0_6] : memref<128x128xbf16, #tpu.memory_space<vmem>>, vector<128x128xbf16>
    %cst_7 = arith.constant dense<0.000000e+00> : vector<512x128xf32>
    %12 = tpu.matmul %10, %11, %cst_7 {dimension_numbers = #tpu.dot_dimension_numbers<[1], [0], [0], [1], [0, 0, 1, 1], [], []>} : vector<512x128xbf16>, vector<128x128xbf16>, vector<512x128xf32> -> vector<512x128xf32>
    %13 = arith.truncf %12 : vector<512x128xf32> to vector<512x128xbf16>
    %c0_8 = arith.constant 0 : index
    %c0_9 = arith.constant 0 : index
    %14 = vector.load %arg5[%c0_8, %c0_9] : memref<512x128xbf16, #tpu.memory_space<vmem>>, vector<512x128xbf16>
    tpu.vector_store %arg5[%c0_8, %c0_9], %13 {strides = array<i32>} : memref<512x128xbf16, #tpu.memory_space<vmem>>, vector<512x128xbf16>,
    %cst_10 = arith.constant dense<0.000000e+00> : vector<128xf32>
    %15 = vector.multi_reduction <add>, %12, %cst_10 [0] : vector<512x128xf32> to vector<128xf32>
    %16 = vector.shape_cast %15 : vector<128xf32> to vector<1x128xf32>
    %17 = arith.mulf %12, %12 : vector<512x128xf32>
    %cst_11 = arith.constant dense<0.000000e+00> : vector<128xf32>
    %18 = vector.multi_reduction <add>, %17, %cst_11 [0] : vector<512x128xf32> to vector<128xf32>
    %19 = vector.shape_cast %18 : vector<128xf32> to vector<1x128xf32>
    %20 = tpu.concatenate %16, %19 in 0 : vector<1x128xf32>, vector<1x128xf32> -> vector<2x128xf32>
    %c0_12 = arith.constant 0 : index
    %c0_13 = arith.constant 0 : index
    %c0_14 = arith.constant 0 : index
    %21 = vector.load %arg6[%c0_12, %c0_13, %c0_14] : memref<1x2x128xf32, #tpu.memory_space<vmem>>, vector<1x2x128xf32>
    %22 = vector.shape_cast %21 : vector<1x2x128xf32> to vector<2x128xf32>
    %23 = vector.shape_cast %20 : vector<2x128xf32> to vector<1x2x128xf32>
    tpu.vector_store %arg6[%c0_12, %c0_13, %c0_14], %23 {strides = array<i32>} : memref<1x2x128xf32, #tpu.memory_space<vmem>>, vector<1x2x128xf32>,
    return
  }
  func.func @transform_0(%arg0: i32) -> (i32, i32) {
    %c0_i32 = arith.constant 0 : i32
    %c0_i32_0 = arith.constant 0 : i32
    return %arg0, %c0_i32 : i32, i32
  }
  func.func @transform_1(%arg0: i32) -> (i32, i32) {
    %c0_i32 = arith.constant 0 : i32
    %c0_i32_0 = arith.constant 0 : i32
    %c0_i32_1 = arith.constant 0 : i32
    return %c0_i32, %c0_i32_0 : i32, i32
  }
  func.func @transform_2(%arg0: i32) -> (i32, i32) {
    %c0_i32 = arith.constant 0 : i32
    %c0_i32_0 = arith.constant 0 : i32
    %c0_i32_1 = arith.constant 0 : i32
    return %c0_i32, %c0_i32_0 : i32, i32
  }
  func.func @transform_3(%arg0: i32) -> (i32, i32) {
    %c0_i32 = arith.constant 0 : i32
    %c0_i32_0 = arith.constant 0 : i32
    %c0_i32_1 = arith.constant 0 : i32
    return %c0_i32, %c0_i32_0 : i32, i32
  }
  func.func @transform_4(%arg0: i32) -> (i32, i32) {
    %c0_i32 = arith.constant 0 : i32
    %c0_i32_0 = arith.constant 0 : i32
    return %arg0, %c0_i32 : i32, i32
  }
  func.func @transform_5(%arg0: i32) -> (i32, i32, i32) {
    %c0_i32 = arith.constant 0 : i32
    %c0_i32_0 = arith.constant 0 : i32
    %c0_i32_1 = arith.constant 0 : i32
    return %arg0, %c0_i32, %c0_i32_0 : i32, i32, i32
  }
}

module attributes {stable_mosaic.version = 11 : i64} {
  func.func @_conv3x3_fused_kernel(%arg0: i32, %arg1: i32, %arg2: memref<1x16x16x128xbf16, #tpu.memory_space<vmem>>, %arg3: memref<1x128xf32, #tpu.memory_space<vmem>>, %arg4: memref<1x128xf32, #tpu.memory_space<vmem>>, %arg5: memref<1152x128xbf16, #tpu.memory_space<vmem>>, %arg6: memref<1x8x16x128xbf16, #tpu.memory_space<vmem>>, %arg7: memref<1x2x128xf32, #tpu.memory_space<vmem>>, %arg8: memref<18x18x128xf32, #tpu.memory_space<vmem>>, %arg9: memref<8x16x1152xbf16, #tpu.memory_space<vmem>>) attributes {dimension_semantics = [#tpu.dimension_semantics<parallel>, #tpu.dimension_semantics<arbitrary>], iteration_bounds = array<i64: 2, 2>, scalar_prefetch = 0 : i64, scratch_operands = 2 : i64, tpu.core_type = #tpu.core_type<tc>, window_params = [{transform_indices = @transform_0, window_bounds = array<i64: 1, 16, 16, 128>}, {pipeline_mode = #tpu.pipeline_mode<synchronous>, transform_indices = @transform_1, window_bounds = array<i64: 1, 128>}, {pipeline_mode = #tpu.pipeline_mode<synchronous>, transform_indices = @transform_2, window_bounds = array<i64: 1, 128>}, {pipeline_mode = #tpu.pipeline_mode<synchronous>, transform_indices = @transform_3, window_bounds = array<i64: 1152, 128>}, {transform_indices = @transform_4, window_bounds = array<i64: 1, 8, 16, 128>}, {transform_indices = @transform_5, window_bounds = array<i64: 1, 2, 128>}]} {
    %c0_i32 = arith.constant 0 : i32
    %0 = arith.cmpi eq, %arg1, %c0_i32 : i32
    %1 = arith.extui %0 : i1 to i32
    %c0_i32_0 = arith.constant 0 : i32
    %2 = arith.cmpi ne, %1, %c0_i32_0 : i32
    scf.if %2 {
      %cst_56 = arith.constant 0.000000e+00 : f32
      %68 = vector.broadcast %cst_56 : f32 to vector<1x18x128xf32>
      %c0_57 = arith.constant 0 : index
      %c0_58 = arith.constant 0 : index
      %c0_59 = arith.constant 0 : index
      %69 = vector.load %arg8[%c0_57, %c0_58, %c0_59] : memref<18x18x128xf32, #tpu.memory_space<vmem>>, vector<1x18x128xf32>
      tpu.vector_store %arg8[%c0_57, %c0_58, %c0_59], %68 {strides = array<i32>} : memref<18x18x128xf32, #tpu.memory_space<vmem>>, vector<1x18x128xf32>,
      %c17 = arith.constant 17 : index
      %c0_60 = arith.constant 0 : index
      %c0_61 = arith.constant 0 : index
      %70 = vector.load %arg8[%c17, %c0_60, %c0_61] : memref<18x18x128xf32, #tpu.memory_space<vmem>>, vector<1x18x128xf32>
      tpu.vector_store %arg8[%c17, %c0_60, %c0_61], %68 {strides = array<i32>} : memref<18x18x128xf32, #tpu.memory_space<vmem>>, vector<1x18x128xf32>,
      %cst_62 = arith.constant 0.000000e+00 : f32
      %71 = vector.broadcast %cst_62 : f32 to vector<18x1x128xf32>
      %c0_63 = arith.constant 0 : index
      %c0_64 = arith.constant 0 : index
      %c0_65 = arith.constant 0 : index
      %72 = vector.load %arg8[%c0_63, %c0_64, %c0_65] : memref<18x18x128xf32, #tpu.memory_space<vmem>>, vector<18x1x128xf32>
      tpu.vector_store %arg8[%c0_63, %c0_64, %c0_65], %71 {strides = array<i32>} : memref<18x18x128xf32, #tpu.memory_space<vmem>>, vector<18x1x128xf32>,
      %c0_66 = arith.constant 0 : index
      %c17_67 = arith.constant 17 : index
      %c0_68 = arith.constant 0 : index
      %73 = vector.load %arg8[%c0_66, %c17_67, %c0_68] : memref<18x18x128xf32, #tpu.memory_space<vmem>>, vector<18x1x128xf32>
      tpu.vector_store %arg8[%c0_66, %c17_67, %c0_68], %71 {strides = array<i32>} : memref<18x18x128xf32, #tpu.memory_space<vmem>>, vector<18x1x128xf32>,
      %c0_69 = arith.constant 0 : index
      %c0_70 = arith.constant 0 : index
      %c0_71 = arith.constant 0 : index
      %c0_72 = arith.constant 0 : index
      %74 = vector.load %arg2[%c0_69, %c0_70, %c0_71, %c0_72] : memref<1x16x16x128xbf16, #tpu.memory_space<vmem>>, vector<1x16x16x128xbf16>
      %75 = vector.shape_cast %74 : vector<1x16x16x128xbf16> to vector<16x16x128xbf16>
      %76 = arith.extf %75 : vector<16x16x128xbf16> to vector<16x16x128xf32>
      %c0_73 = arith.constant 0 : index
      %c0_74 = arith.constant 0 : index
      %77 = vector.load %arg3[%c0_73, %c0_74] : memref<1x128xf32, #tpu.memory_space<vmem>>, vector<1x128xf32>
      %78 = vector.shape_cast %77 : vector<1x128xf32> to vector<1x1x128xf32>
      %79 = vector.broadcast %78 : vector<1x1x128xf32> to vector<16x16x128xf32>
      %80 = arith.mulf %76, %79 : vector<16x16x128xf32>
      %c0_75 = arith.constant 0 : index
      %c0_76 = arith.constant 0 : index
      %81 = vector.load %arg4[%c0_75, %c0_76] : memref<1x128xf32, #tpu.memory_space<vmem>>, vector<1x128xf32>
      %82 = vector.shape_cast %81 : vector<1x128xf32> to vector<1x1x128xf32>
      %83 = vector.broadcast %82 : vector<1x1x128xf32> to vector<16x16x128xf32>
      %84 = arith.addf %80, %83 : vector<16x16x128xf32>
      %cst_77 = arith.constant 0.000000e+00 : f32
      %85 = vector.broadcast %cst_77 : f32 to vector<16x16x128xf32>
      %86 = arith.maximumf %84, %85 : vector<16x16x128xf32>
      %c1_78 = arith.constant 1 : index
      %c1_79 = arith.constant 1 : index
      %c0_80 = arith.constant 0 : index
      %87 = vector.load %arg8[%c1_78, %c1_79, %c0_80] : memref<18x18x128xf32, #tpu.memory_space<vmem>>, vector<16x16x128xf32>
      tpu.vector_store %arg8[%c1_78, %c1_79, %c0_80], %86 {strides = array<i32>} : memref<18x18x128xf32, #tpu.memory_space<vmem>>, vector<16x16x128xf32>,
    } else {
    }
    %c8_i32 = arith.constant 8 : i32
    %3 = arith.muli %arg1, %c8_i32 : i32
    %4 = tpu.assume_multiple %3, 8 : i32
    %c0_i32_1 = arith.constant 0 : i32
    %5 = arith.addi %4, %c0_i32_1 : i32
    %6 = arith.index_cast %5 : i32 to index
    %c0 = arith.constant 0 : index
    %c0_2 = arith.constant 0 : index
    %7 = vector.load %arg8[%6, %c0, %c0_2] : memref<18x18x128xf32, #tpu.memory_space<vmem>>, vector<8x16x128xf32>
    %8 = arith.truncf %7 : vector<8x16x128xf32> to vector<8x16x128xbf16>
    %c0_3 = arith.constant 0 : index
    %c0_4 = arith.constant 0 : index
    %c0_5 = arith.constant 0 : index
    %9 = vector.load %arg9[%c0_3, %c0_4, %c0_5] : memref<8x16x1152xbf16, #tpu.memory_space<vmem>>, vector<8x16x128xbf16>
    tpu.vector_store %arg9[%c0_3, %c0_4, %c0_5], %8 {strides = array<i32>} : memref<8x16x1152xbf16, #tpu.memory_space<vmem>>, vector<8x16x128xbf16>,
    %c0_i32_6 = arith.constant 0 : i32
    %10 = arith.addi %4, %c0_i32_6 : i32
    %11 = arith.index_cast %10 : i32 to index
    %c1 = arith.constant 1 : index
    %c0_7 = arith.constant 0 : index
    %12 = vector.load %arg8[%11, %c1, %c0_7] : memref<18x18x128xf32, #tpu.memory_space<vmem>>, vector<8x16x128xf32>
    %13 = arith.truncf %12 : vector<8x16x128xf32> to vector<8x16x128xbf16>
    %c0_8 = arith.constant 0 : index
    %c0_9 = arith.constant 0 : index
    %c128 = arith.constant 128 : index
    %14 = vector.load %arg9[%c0_8, %c0_9, %c128] : memref<8x16x1152xbf16, #tpu.memory_space<vmem>>, vector<8x16x128xbf16>
    tpu.vector_store %arg9[%c0_8, %c0_9, %c128], %13 {strides = array<i32>} : memref<8x16x1152xbf16, #tpu.memory_space<vmem>>, vector<8x16x128xbf16>,
    %c0_i32_10 = arith.constant 0 : i32
    %15 = arith.addi %4, %c0_i32_10 : i32
    %16 = arith.index_cast %15 : i32 to index
    %c2 = arith.constant 2 : index
    %c0_11 = arith.constant 0 : index
    %17 = vector.load %arg8[%16, %c2, %c0_11] : memref<18x18x128xf32, #tpu.memory_space<vmem>>, vector<8x16x128xf32>
    %18 = arith.truncf %17 : vector<8x16x128xf32> to vector<8x16x128xbf16>
    %c0_12 = arith.constant 0 : index
    %c0_13 = arith.constant 0 : index
    %c256 = arith.constant 256 : index
    %19 = vector.load %arg9[%c0_12, %c0_13, %c256] : memref<8x16x1152xbf16, #tpu.memory_space<vmem>>, vector<8x16x128xbf16>
    tpu.vector_store %arg9[%c0_12, %c0_13, %c256], %18 {strides = array<i32>} : memref<8x16x1152xbf16, #tpu.memory_space<vmem>>, vector<8x16x128xbf16>,
    %c1_i32 = arith.constant 1 : i32
    %20 = arith.addi %4, %c1_i32 : i32
    %21 = arith.index_cast %20 : i32 to index
    %c0_14 = arith.constant 0 : index
    %c0_15 = arith.constant 0 : index
    %22 = vector.load %arg8[%21, %c0_14, %c0_15] : memref<18x18x128xf32, #tpu.memory_space<vmem>>, vector<8x16x128xf32>
    %23 = arith.truncf %22 : vector<8x16x128xf32> to vector<8x16x128xbf16>
    %c0_16 = arith.constant 0 : index
    %c0_17 = arith.constant 0 : index
    %c384 = arith.constant 384 : index
    %24 = vector.load %arg9[%c0_16, %c0_17, %c384] : memref<8x16x1152xbf16, #tpu.memory_space<vmem>>, vector<8x16x128xbf16>
    tpu.vector_store %arg9[%c0_16, %c0_17, %c384], %23 {strides = array<i32>} : memref<8x16x1152xbf16, #tpu.memory_space<vmem>>, vector<8x16x128xbf16>,
    %c1_i32_18 = arith.constant 1 : i32
    %25 = arith.addi %4, %c1_i32_18 : i32
    %26 = arith.index_cast %25 : i32 to index
    %c1_19 = arith.constant 1 : index
    %c0_20 = arith.constant 0 : index
    %27 = vector.load %arg8[%26, %c1_19, %c0_20] : memref<18x18x128xf32, #tpu.memory_space<vmem>>, vector<8x16x128xf32>
    %28 = arith.truncf %27 : vector<8x16x128xf32> to vector<8x16x128xbf16>
    %c0_21 = arith.constant 0 : index
    %c0_22 = arith.constant 0 : index
    %c512 = arith.constant 512 : index
    %29 = vector.load %arg9[%c0_21, %c0_22, %c512] : memref<8x16x1152xbf16, #tpu.memory_space<vmem>>, vector<8x16x128xbf16>
    tpu.vector_store %arg9[%c0_21, %c0_22, %c512], %28 {strides = array<i32>} : memref<8x16x1152xbf16, #tpu.memory_space<vmem>>, vector<8x16x128xbf16>,
    %c1_i32_23 = arith.constant 1 : i32
    %30 = arith.addi %4, %c1_i32_23 : i32
    %31 = arith.index_cast %30 : i32 to index
    %c2_24 = arith.constant 2 : index
    %c0_25 = arith.constant 0 : index
    %32 = vector.load %arg8[%31, %c2_24, %c0_25] : memref<18x18x128xf32, #tpu.memory_space<vmem>>, vector<8x16x128xf32>
    %33 = arith.truncf %32 : vector<8x16x128xf32> to vector<8x16x128xbf16>
    %c0_26 = arith.constant 0 : index
    %c0_27 = arith.constant 0 : index
    %c640 = arith.constant 640 : index
    %34 = vector.load %arg9[%c0_26, %c0_27, %c640] : memref<8x16x1152xbf16, #tpu.memory_space<vmem>>, vector<8x16x128xbf16>
    tpu.vector_store %arg9[%c0_26, %c0_27, %c640], %33 {strides = array<i32>} : memref<8x16x1152xbf16, #tpu.memory_space<vmem>>, vector<8x16x128xbf16>,
    %c2_i32 = arith.constant 2 : i32
    %35 = arith.addi %4, %c2_i32 : i32
    %36 = arith.index_cast %35 : i32 to index
    %c0_28 = arith.constant 0 : index
    %c0_29 = arith.constant 0 : index
    %37 = vector.load %arg8[%36, %c0_28, %c0_29] : memref<18x18x128xf32, #tpu.memory_space<vmem>>, vector<8x16x128xf32>
    %38 = arith.truncf %37 : vector<8x16x128xf32> to vector<8x16x128xbf16>
    %c0_30 = arith.constant 0 : index
    %c0_31 = arith.constant 0 : index
    %c768 = arith.constant 768 : index
    %39 = vector.load %arg9[%c0_30, %c0_31, %c768] : memref<8x16x1152xbf16, #tpu.memory_space<vmem>>, vector<8x16x128xbf16>
    tpu.vector_store %arg9[%c0_30, %c0_31, %c768], %38 {strides = array<i32>} : memref<8x16x1152xbf16, #tpu.memory_space<vmem>>, vector<8x16x128xbf16>,
    %c2_i32_32 = arith.constant 2 : i32
    %40 = arith.addi %4, %c2_i32_32 : i32
    %41 = arith.index_cast %40 : i32 to index
    %c1_33 = arith.constant 1 : index
    %c0_34 = arith.constant 0 : index
    %42 = vector.load %arg8[%41, %c1_33, %c0_34] : memref<18x18x128xf32, #tpu.memory_space<vmem>>, vector<8x16x128xf32>
    %43 = arith.truncf %42 : vector<8x16x128xf32> to vector<8x16x128xbf16>
    %c0_35 = arith.constant 0 : index
    %c0_36 = arith.constant 0 : index
    %c896 = arith.constant 896 : index
    %44 = vector.load %arg9[%c0_35, %c0_36, %c896] : memref<8x16x1152xbf16, #tpu.memory_space<vmem>>, vector<8x16x128xbf16>
    tpu.vector_store %arg9[%c0_35, %c0_36, %c896], %43 {strides = array<i32>} : memref<8x16x1152xbf16, #tpu.memory_space<vmem>>, vector<8x16x128xbf16>,
    %c2_i32_37 = arith.constant 2 : i32
    %45 = arith.addi %4, %c2_i32_37 : i32
    %46 = arith.index_cast %45 : i32 to index
    %c2_38 = arith.constant 2 : index
    %c0_39 = arith.constant 0 : index
    %47 = vector.load %arg8[%46, %c2_38, %c0_39] : memref<18x18x128xf32, #tpu.memory_space<vmem>>, vector<8x16x128xf32>
    %48 = arith.truncf %47 : vector<8x16x128xf32> to vector<8x16x128xbf16>
    %c0_40 = arith.constant 0 : index
    %c0_41 = arith.constant 0 : index
    %c1024 = arith.constant 1024 : index
    %49 = vector.load %arg9[%c0_40, %c0_41, %c1024] : memref<8x16x1152xbf16, #tpu.memory_space<vmem>>, vector<8x16x128xbf16>
    tpu.vector_store %arg9[%c0_40, %c0_41, %c1024], %48 {strides = array<i32>} : memref<8x16x1152xbf16, #tpu.memory_space<vmem>>, vector<8x16x128xbf16>,
    %c0_42 = arith.constant 0 : index
    %c0_43 = arith.constant 0 : index
    %c0_44 = arith.constant 0 : index
    %50 = vector.load %arg9[%c0_42, %c0_43, %c0_44] : memref<8x16x1152xbf16, #tpu.memory_space<vmem>>, vector<8x16x1152xbf16>
    %51 = vector.shape_cast %50 : vector<8x16x1152xbf16> to vector<128x1152xbf16>
    %c0_45 = arith.constant 0 : index
    %c0_46 = arith.constant 0 : index
    %52 = vector.load %arg5[%c0_45, %c0_46] : memref<1152x128xbf16, #tpu.memory_space<vmem>>, vector<1152x128xbf16>
    %cst = arith.constant dense<0.000000e+00> : vector<128x128xf32>
    %53 = tpu.matmul %51, %52, %cst {dimension_numbers = #tpu.dot_dimension_numbers<[1], [0], [0], [1], [0, 0, 1, 1], [], []>} : vector<128x1152xbf16>, vector<1152x128xbf16>, vector<128x128xf32> -> vector<128x128xf32>
    %54 = vector.shape_cast %53 : vector<128x128xf32> to vector<8x16x128xf32>
    %55 = arith.truncf %54 : vector<8x16x128xf32> to vector<8x16x128xbf16>
    %c0_47 = arith.constant 0 : index
    %c0_48 = arith.constant 0 : index
    %c0_49 = arith.constant 0 : index
    %c0_50 = arith.constant 0 : index
    %56 = vector.load %arg6[%c0_47, %c0_48, %c0_49, %c0_50] : memref<1x8x16x128xbf16, #tpu.memory_space<vmem>>, vector<1x8x16x128xbf16>
    %57 = vector.shape_cast %56 : vector<1x8x16x128xbf16> to vector<8x16x128xbf16>
    %58 = vector.shape_cast %55 : vector<8x16x128xbf16> to vector<1x8x16x128xbf16>
    tpu.vector_store %arg6[%c0_47, %c0_48, %c0_49, %c0_50], %58 {strides = array<i32>} : memref<1x8x16x128xbf16, #tpu.memory_space<vmem>>, vector<1x8x16x128xbf16>,
    %cst_51 = arith.constant dense<0.000000e+00> : vector<128xf32>
    %59 = vector.multi_reduction <add>, %53, %cst_51 [0] : vector<128x128xf32> to vector<128xf32>
    %60 = vector.shape_cast %59 : vector<128xf32> to vector<1x128xf32>
    %61 = arith.mulf %53, %53 : vector<128x128xf32>
    %cst_52 = arith.constant dense<0.000000e+00> : vector<128xf32>
    %62 = vector.multi_reduction <add>, %61, %cst_52 [0] : vector<128x128xf32> to vector<128xf32>
    %63 = vector.shape_cast %62 : vector<128xf32> to vector<1x128xf32>
    %64 = tpu.concatenate %60, %63 in 0 : vector<1x128xf32>, vector<1x128xf32> -> vector<2x128xf32>
    %c0_53 = arith.constant 0 : index
    %c0_54 = arith.constant 0 : index
    %c0_55 = arith.constant 0 : index
    %65 = vector.load %arg7[%c0_53, %c0_54, %c0_55] : memref<1x2x128xf32, #tpu.memory_space<vmem>>, vector<1x2x128xf32>
    %66 = vector.shape_cast %65 : vector<1x2x128xf32> to vector<2x128xf32>
    %67 = vector.shape_cast %64 : vector<2x128xf32> to vector<1x2x128xf32>
    tpu.vector_store %arg7[%c0_53, %c0_54, %c0_55], %67 {strides = array<i32>} : memref<1x2x128xf32, #tpu.memory_space<vmem>>, vector<1x2x128xf32>,
    return
  }
  func.func @transform_0(%arg0: i32, %arg1: i32) -> (i32, i32, i32, i32) {
    %c0_i32 = arith.constant 0 : i32
    %c0_i32_0 = arith.constant 0 : i32
    %c0_i32_1 = arith.constant 0 : i32
    %c0_i32_2 = arith.constant 0 : i32
    return %arg0, %c0_i32, %c0_i32_0, %c0_i32_1 : i32, i32, i32, i32
  }
  func.func @transform_1(%arg0: i32, %arg1: i32) -> (i32, i32) {
    %c0_i32 = arith.constant 0 : i32
    %c0_i32_0 = arith.constant 0 : i32
    %c0_i32_1 = arith.constant 0 : i32
    return %c0_i32, %c0_i32_0 : i32, i32
  }
  func.func @transform_2(%arg0: i32, %arg1: i32) -> (i32, i32) {
    %c0_i32 = arith.constant 0 : i32
    %c0_i32_0 = arith.constant 0 : i32
    %c0_i32_1 = arith.constant 0 : i32
    return %c0_i32, %c0_i32_0 : i32, i32
  }
  func.func @transform_3(%arg0: i32, %arg1: i32) -> (i32, i32) {
    %c0_i32 = arith.constant 0 : i32
    %c0_i32_0 = arith.constant 0 : i32
    %c0_i32_1 = arith.constant 0 : i32
    return %c0_i32, %c0_i32_0 : i32, i32
  }
  func.func @transform_4(%arg0: i32, %arg1: i32) -> (i32, i32, i32, i32) {
    %c0_i32 = arith.constant 0 : i32
    %c0_i32_0 = arith.constant 0 : i32
    %c0_i32_1 = arith.constant 0 : i32
    return %arg0, %arg1, %c0_i32, %c0_i32_0 : i32, i32, i32, i32
  }
  func.func @transform_5(%arg0: i32, %arg1: i32) -> (i32, i32, i32) {
    %c2_i32 = arith.constant 2 : i32
    %0 = arith.muli %arg0, %c2_i32 : i32
    %1 = arith.addi %0, %arg1 : i32
    %c0_i32 = arith.constant 0 : i32
    %c0_i32_0 = arith.constant 0 : i32
    %c0_i32_1 = arith.constant 0 : i32
    return %1, %c0_i32, %c0_i32_0 : i32, i32, i32
  }
}

module attributes {stable_mosaic.version = 11 : i64} {
  func.func @_norm_act_kernel(%arg0: i32, %arg1: memref<512x128xbf16, #tpu.memory_space<vmem>>, %arg2: memref<1x128xf32, #tpu.memory_space<vmem>>, %arg3: memref<1x128xf32, #tpu.memory_space<vmem>>, %arg4: memref<512x128xf32, #tpu.memory_space<vmem>>) attributes {dimension_semantics = [#tpu.dimension_semantics<parallel>], iteration_bounds = array<i64: 1>, scalar_prefetch = 0 : i64, scratch_operands = 0 : i64, tpu.core_type = #tpu.core_type<tc>, window_params = [{transform_indices = @transform_0, window_bounds = array<i64: 512, 128>}, {pipeline_mode = #tpu.pipeline_mode<synchronous>, transform_indices = @transform_1, window_bounds = array<i64: 1, 128>}, {pipeline_mode = #tpu.pipeline_mode<synchronous>, transform_indices = @transform_2, window_bounds = array<i64: 1, 128>}, {transform_indices = @transform_3, window_bounds = array<i64: 512, 128>}]} {
    %c0 = arith.constant 0 : index
    %c0_0 = arith.constant 0 : index
    %0 = vector.load %arg1[%c0, %c0_0] : memref<512x128xbf16, #tpu.memory_space<vmem>>, vector<512x128xbf16>
    %1 = arith.extf %0 : vector<512x128xbf16> to vector<512x128xf32>
    %c0_1 = arith.constant 0 : index
    %c0_2 = arith.constant 0 : index
    %2 = vector.load %arg2[%c0_1, %c0_2] : memref<1x128xf32, #tpu.memory_space<vmem>>, vector<1x128xf32>
    %3 = vector.broadcast %2 : vector<1x128xf32> to vector<512x128xf32>
    %4 = arith.mulf %1, %3 : vector<512x128xf32>
    %c0_3 = arith.constant 0 : index
    %c0_4 = arith.constant 0 : index
    %5 = vector.load %arg3[%c0_3, %c0_4] : memref<1x128xf32, #tpu.memory_space<vmem>>, vector<1x128xf32>
    %6 = vector.broadcast %5 : vector<1x128xf32> to vector<512x128xf32>
    %7 = arith.addf %4, %6 : vector<512x128xf32>
    %cst = arith.constant 4.000000e+00 : f32
    %8 = vector.broadcast %cst : f32 to vector<512x128xf32>
    %9 = arith.addf %7, %8 : vector<512x128xf32>
    %cst_5 = arith.constant 0.000000e+00 : f32
    %10 = vector.broadcast %cst_5 : f32 to vector<512x128xf32>
    %11 = arith.maximumf %9, %10 : vector<512x128xf32>
    %c0_6 = arith.constant 0 : index
    %c0_7 = arith.constant 0 : index
    %12 = vector.load %arg4[%c0_6, %c0_7] : memref<512x128xf32, #tpu.memory_space<vmem>>, vector<512x128xf32>
    tpu.vector_store %arg4[%c0_6, %c0_7], %11 {strides = array<i32>} : memref<512x128xf32, #tpu.memory_space<vmem>>, vector<512x128xf32>,
    return
  }
  func.func @transform_0(%arg0: i32) -> (i32, i32) {
    %c0_i32 = arith.constant 0 : i32
    %c0_i32_0 = arith.constant 0 : i32
    return %arg0, %c0_i32 : i32, i32
  }
  func.func @transform_1(%arg0: i32) -> (i32, i32) {
    %c0_i32 = arith.constant 0 : i32
    %c0_i32_0 = arith.constant 0 : i32
    %c0_i32_1 = arith.constant 0 : i32
    return %c0_i32, %c0_i32_0 : i32, i32
  }
  func.func @transform_2(%arg0: i32) -> (i32, i32) {
    %c0_i32 = arith.constant 0 : i32
    %c0_i32_0 = arith.constant 0 : i32
    %c0_i32_1 = arith.constant 0 : i32
    return %c0_i32, %c0_i32_0 : i32, i32
  }
  func.func @transform_3(%arg0: i32) -> (i32, i32) {
    %c0_i32 = arith.constant 0 : i32
    %c0_i32_0 = arith.constant 0 : i32
    return %arg0, %c0_i32 : i32, i32
  }
}

</mosaic_0001>

<llo_original>
// kernel: bottleneck_forward.7
$region0: #{bottleneck_forward.7}
  #allocation0 [shape = 'u32[]', space=smem, size = 0x4, offset = 0x4, fixed_abs, tag = 'smem constant byte address 0x4 - core index']
  #allocation1 [shape = 'u32[144,128]{1,0:T(1,128)}', space=vmem, size = 0x12000, scoped, tag = 'internal scratch']
  %s0 = inlined_call_operand.vmem [shape: bf16[512,128], index: 0, kind: input, shape index: {}]
  %s1 = inlined_call_operand.vmem [shape: f32[1,128], index: 1, kind: input, shape index: {}]
  %s2 = inlined_call_operand.vmem [shape: f32[1,128], index: 2, kind: input, shape index: {}]
  %s3 = inlined_call_operand.vmem [shape: f32[512,128], index: 3, kind: output, shape index: {}]
  %s4 = sld [smem:[#allocation0]]
  $region22: #{bottleneck_forward.7} parent=0
    _
  %s6 = ssub.s32 1, %s4
  %s7 = scalar_select 0, %s6, %s4
  // Predicated region
  $region2: #{bottleneck_forward.7} parent=0 // pred_check
    _
  $region3: #{bottleneck_forward.7} parent=0 // pred_check_branch
    %9 = sbr.rel (0) target = $region5
  $region4: #{bottleneck_forward.7} parent=0 // pred_region
    _
  $region5: #{bottleneck_forward.7} parent=0 // pred_fallthru
    _
  // Predicated region
  $region6: #{bottleneck_forward.7} parent=0 // pred_check
    _
  $region7: #{bottleneck_forward.7} parent=0 // pred_check_branch
    %11 = sbr.rel (0) target = $region9
  $region8: #{bottleneck_forward.7} parent=0 // pred_region
    _
  $region9: #{bottleneck_forward.7} parent=0 // pred_fallthru
    _
  // Predicated region
  $region10: #{bottleneck_forward.7} parent=0 // pred_check
    _
  $region11: #{bottleneck_forward.7} parent=0 // pred_check_branch
    %13 = sbr.rel (0) target = $region13
  $region12: #{bottleneck_forward.7} parent=0 // pred_region
    _
  $region13: #{bottleneck_forward.7} parent=0 // pred_fallthru
    _
  %v14 = vld [vmem:[%s0] sm:$0xf]
  %v15 = vld [vmem:[%s0 + $0x4] sm:$0xf]
  %v16 = vld [vmem:[%s0 + $0x8] sm:$0xf]
  %v17 = vld [vmem:[%s0 + $0xc] sm:$0xf]
  %v18 = vld [vmem:[%s0 + $0x10] sm:$0xf]
  %v19 = vld [vmem:[%s0 + $0x14] sm:$0xf]
  %v20 = vld [vmem:[%s0 + $0x18] sm:$0xf]
  %v21 = vld [vmem:[%s0 + $0x1c] sm:$0xf]
  %v22 = vld [vmem:[%s0 + $0x20] sm:$0xf]
  %v23 = vld [vmem:[%s0 + $0x24] sm:$0xf]
  %v24 = vld [vmem:[%s0 + $0x28] sm:$0xf]
  %v25 = vld [vmem:[%s0 + $0x2c] sm:$0xf]
  %v26 = vld [vmem:[%s0 + $0x30] sm:$0xf]
  %v27 = vld [vmem:[%s0 + $0x34] sm:$0xf]
  %v28 = vld [vmem:[%s0 + $0x38] sm:$0xf]
  %v29 = vld [vmem:[%s0 + $0x3c] sm:$0xf]
  %v30 = vld [vmem:[%s0 + $0x40] sm:$0xf]
  %v31 = vld [vmem:[%s0 + $0x44] sm:$0xf]
  %v32 = vld [vmem:[%s0 + $0x48] sm:$0xf]
  %v33 = vld [vmem:[%s0 + $0x4c] sm:$0xf]
  %v34 = vld [vmem:[%s0 + $0x50] sm:$0xf]
  %v35 = vld [vmem:[%s0 + $0x54] sm:$0xf]
  %v36 = vld [vmem:[%s0 + $0x58] sm:$0xf]
  %v37 = vld [vmem:[%s0 + $0x5c] sm:$0xf]
  %v38 = vld [vmem:[%s0 + $0x60] sm:$0xf]
  %v39 = vld [vmem:[%s0 + $0x64] sm:$0xf]
  %v40 = vld [vmem:[%s0 + $0x68] sm:$0xf]
  %v41 = vld [vmem:[%s0 + $0x6c] sm:$0xf]
  %v42 = vld [vmem:[%s0 + $0x70] sm:$0xf]
  %v43 = vld [vmem:[%s0 + $0x74] sm:$0xf]
  %v44 = vld [vmem:[%s0 + $0x78] sm:$0xf]
  %v45 = vld [vmem:[%s0 + $0x7c] sm:$0xf]
  %v46 = vld [vmem:[%s0 + $0x80] sm:$0xf]
  %v47 = vld [vmem:[%s0 + $0x84] sm:$0xf]
  %v48 = vld [vmem:[%s0 + $0x88] sm:$0xf]
  %v49 = vld [vmem:[%s0 + $0x8c] sm:$0xf]
  %v50 = vld [vmem:[%s0 + $0x90] sm:$0xf]
  %v51 = vld [vmem:[%s0 + $0x94] sm:$0xf]
  %v52 = vld [vmem:[%s0 + $0x98] sm:$0xf]
  %v53 = vld [vmem:[%s0 + $0x9c] sm:$0xf]
  %v54 = vld [vmem:[%s0 + $0xa0] sm:$0xf]
  %v55 = vld [vmem:[%s0 + $0xa4] sm:$0xf]
  %v56 = vld [vmem:[%s0 + $0xa8] sm:$0xf]
  %v57 = vld [vmem:[%s0 + $0xac] sm:$0xf]
  %v58 = vld [vmem:[%s0 + $0xb0] sm:$0xf]
  %v59 = vld [vmem:[%s0 + $0xb4] sm:$0xf]
  %v60 = vld [vmem:[%s0 + $0xb8] sm:$0xf]
  %v61 = vld [vmem:[%s0 + $0xbc] sm:$0xf]
  %v62 = vld [vmem:[%s0 + $0xc0] sm:$0xf]
  %v63 = vld [vmem:[%s0 + $0xc4] sm:$0xf]
  %v64 = vld [vmem:[%s0 + $0xc8] sm:$0xf]
  %v65 = vld [vmem:[%s0 + $0xcc] sm:$0xf]
  %v66 = vld [vmem:[%s0 + $0xd0] sm:$0xf]
  %v67 = vld [vmem:[%s0 + $0xd4] sm:$0xf]
  %v68 = vld [vmem:[%s0 + $0xd8] sm:$0xf]
  %v69 = vld [vmem:[%s0 + $0xdc] sm:$0xf]
  %v70 = vld [vmem:[%s0 + $0xe0] sm:$0xf]
  %v71 = vld [vmem:[%s0 + $0xe4] sm:$0xf]
  %v72 = vld [vmem:[%s0 + $0xe8] sm:$0xf]
  %v73 = vld [vmem:[%s0 + $0xec] sm:$0xf]
  %v74 = vld [vmem:[%s0 + $0xf0] sm:$0xf]
  %v75 = vld [vmem:[%s0 + $0xf4] sm:$0xf]
  %v76 = vld [vmem:[%s0 + $0xf8] sm:$0xf]
  %v77 = vld [vmem:[%s0 + $0xfc] sm:$0xf]
  %v78 = vunpack.c.l.bf16 %v14
  %v79 = vunpack.c.l.bf16 %v15
  %v80 = vunpack.c.l.bf16 %v16
  %v81 = vunpack.c.l.bf16 %v17
  %v82 = vunpack.c.l.bf16 %v18
  %v83 = vunpack.c.l.bf16 %v19
  %v84 = vunpack.c.l.bf16 %v20
  %v85 = vunpack.c.l.bf16 %v21
  %v86 = vunpack.c.l.bf16 %v22
  %v87 = vunpack.c.l.bf16 %v23
  %v88 = vunpack.c.l.bf16 %v24
  %v89 = vunpack.c.l.bf16 %v25
  %v90 = vunpack.c.l.bf16 %v26
  %v91 = vunpack.c.l.bf16 %v27
  %v92 = vunpack.c.l.bf16 %v28
  %v93 = vunpack.c.l.bf16 %v29
  %v94 = vunpack.c.l.bf16 %v30
  %v95 = vunpack.c.l.bf16 %v31
  %v96 = vunpack.c.l.bf16 %v32
  %v97 = vunpack.c.l.bf16 %v33
  %v98 = vunpack.c.l.bf16 %v34
  %v99 = vunpack.c.l.bf16 %v35
  %v100 = vunpack.c.l.bf16 %v36
  %v101 = vunpack.c.l.bf16 %v37
  %v102 = vunpack.c.l.bf16 %v38
  %v103 = vunpack.c.l.bf16 %v39
  %v104 = vunpack.c.l.bf16 %v40
  %v105 = vunpack.c.l.bf16 %v41
  %v106 = vunpack.c.l.bf16 %v42
  %v107 = vunpack.c.l.bf16 %v43
  %v108 = vunpack.c.l.bf16 %v44
  %v109 = vunpack.c.l.bf16 %v45
  %v110 = vunpack.c.l.bf16 %v46
  %v111 = vunpack.c.l.bf16 %v47
  %v112 = vunpack.c.l.bf16 %v48
  %v113 = vunpack.c.l.bf16 %v49
  %v114 = vunpack.c.l.bf16 %v50
  %v115 = vunpack.c.l.bf16 %v51
  %v116 = vunpack.c.l.bf16 %v52
  %v117 = vunpack.c.l.bf16 %v53
  %v118 = vunpack.c.l.bf16 %v54
  %v119 = vunpack.c.l.bf16 %v55
  %v120 = vunpack.c.l.bf16 %v56
  %v121 = vunpack.c.l.bf16 %v57
  %v122 = vunpack.c.l.bf16 %v58
  %v123 = vunpack.c.l.bf16 %v59
  %v124 = vunpack.c.l.bf16 %v60
  %v125 = vunpack.c.l.bf16 %v61
  %v126 = vunpack.c.l.bf16 %v62
  %v127 = vunpack.c.l.bf16 %v63
  %v128 = vunpack.c.l.bf16 %v64
  %v129 = vunpack.c.l.bf16 %v65
  %v130 = vunpack.c.l.bf16 %v66
  %v131 = vunpack.c.l.bf16 %v67
  %v132 = vunpack.c.l.bf16 %v68
  %v133 = vunpack.c.l.bf16 %v69
  %v134 = vunpack.c.l.bf16 %v70
  %v135 = vunpack.c.l.bf16 %v71
  %v136 = vunpack.c.l.bf16 %v72
  %v137 = vunpack.c.l.bf16 %v73
  %v138 = vunpack.c.l.bf16 %v74
  %v139 = vunpack.c.l.bf16 %v75
  %v140 = vunpack.c.l.bf16 %v76
  %v141 = vunpack.c.l.bf16 %v77
  %v142 = vld [vmem:[%s1] sm:$0x1]
  %v144 = vlaneseq
  %v145 = vshrl.u32 %v144, 7
  %v146 = vsub.s32 0, %v145
  %v147 = vrot.slane %v142, %v146
  %v149 = vmul.f32 %v78, %v147
  %v150 = vmul.f32 %v79, %v147
  %v151 = vmul.f32 %v80, %v147
  %v152 = vmul.f32 %v81, %v147
  %v153 = vmul.f32 %v82, %v147
  %v154 = vmul.f32 %v83, %v147
  %v155 = vmul.f32 %v84, %v147
  %v156 = vmul.f32 %v85, %v147
  %v157 = vmul.f32 %v86, %v147
  %v158 = vmul.f32 %v87, %v147
  %v159 = vmul.f32 %v88, %v147
  %v160 = vmul.f32 %v89, %v147
  %v161 = vmul.f32 %v90, %v147
  %v162 = vmul.f32 %v91, %v147
  %v163 = vmul.f32 %v92, %v147
  %v164 = vmul.f32 %v93, %v147
  %v165 = vmul.f32 %v94, %v147
  %v166 = vmul.f32 %v95, %v147
  %v167 = vmul.f32 %v96, %v147
  %v168 = vmul.f32 %v97, %v147
  %v169 = vmul.f32 %v98, %v147
  %v170 = vmul.f32 %v99, %v147
  %v171 = vmul.f32 %v100, %v147
  %v172 = vmul.f32 %v101, %v147
  %v173 = vmul.f32 %v102, %v147
  %v174 = vmul.f32 %v103, %v147
  %v175 = vmul.f32 %v104, %v147
  %v176 = vmul.f32 %v105, %v147
  %v177 = vmul.f32 %v106, %v147
  %v178 = vmul.f32 %v107, %v147
  %v179 = vmul.f32 %v108, %v147
  %v180 = vmul.f32 %v109, %v147
  %v181 = vmul.f32 %v110, %v147
  %v182 = vmul.f32 %v111, %v147
  %v183 = vmul.f32 %v112, %v147
  %v184 = vmul.f32 %v113, %v147
  %v185 = vmul.f32 %v114, %v147
  %v186 = vmul.f32 %v115, %v147
  %v187 = vmul.f32 %v116, %v147
  %v188 = vmul.f32 %v117, %v147
  %v189 = vmul.f32 %v118, %v147
  %v190 = vmul.f32 %v119, %v147
  %v191 = vmul.f32 %v120, %v147
  %v192 = vmul.f32 %v121, %v147
  %v193 = vmul.f32 %v122, %v147
  %v194 = vmul.f32 %v123, %v147
  %v195 = vmul.f32 %v124, %v147
  %v196 = vmul.f32 %v125, %v147
  %v197 = vmul.f32 %v126, %v147
  %v198 = vmul.f32 %v127, %v147
  %v199 = vmul.f32 %v128, %v147
  %v200 = vmul.f32 %v129, %v147
  %v201 = vmul.f32 %v130, %v147
  %v202 = vmul.f32 %v131, %v147
  %v203 = vmul.f32 %v132, %v147
  %v204 = vmul.f32 %v133, %v147
  %v205 = vmul.f32 %v134, %v147
  %v206 = vmul.f32 %v135, %v147
  %v207 = vmul.f32 %v136, %v147
  %v208 = vmul.f32 %v137, %v147
  %v209 = vmul.f32 %v138, %v147
  %v210 = vmul.f32 %v139, %v147
  %v211 = vmul.f32 %v140, %v147
  %v212 = vmul.f32 %v141, %v147
  %v213 = vld [vmem:[%s2] sm:$0x1]
  %v215 = vlaneseq
  %v216 = vshrl.u32 %v215, 7
  %v217 = vsub.s32 0, %v216
  %v218 = vrot.slane %v213, %v217
  %v220 = vadd.f32 %v149, %v218
  %v221 = vadd.f32 %v150, %v218
  %v222 = vadd.f32 %v151, %v218
  %v223 = vadd.f32 %v152, %v218
  %v224 = vadd.f32 %v153, %v218
  %v225 = vadd.f32 %v154, %v218
  %v226 = vadd.f32 %v155, %v218
  %v227 = vadd.f32 %v156, %v218
  %v228 = vadd.f32 %v157, %v218
  %v229 = vadd.f32 %v158, %v218
  %v230 = vadd.f32 %v159, %v218
  %v231 = vadd.f32 %v160, %v218
  %v232 = vadd.f32 %v161, %v218
  %v233 = vadd.f32 %v162, %v218
  %v234 = vadd.f32 %v163, %v218
  %v235 = vadd.f32 %v164, %v218
  %v236 = vadd.f32 %v165, %v218
  %v237 = vadd.f32 %v166, %v218
  %v238 = vadd.f32 %v167, %v218
  %v239 = vadd.f32 %v168, %v218
  %v240 = vadd.f32 %v169, %v218
  %v241 = vadd.f32 %v170, %v218
  %v242 = vadd.f32 %v171, %v218
  %v243 = vadd.f32 %v172, %v218
  %v244 = vadd.f32 %v173, %v218
  %v245 = vadd.f32 %v174, %v218
  %v246 = vadd.f32 %v175, %v218
  %v247 = vadd.f32 %v176, %v218
  %v248 = vadd.f32 %v177, %v218
  %v249 = vadd.f32 %v178, %v218
  %v250 = vadd.f32 %v179, %v218
  %v251 = vadd.f32 %v180, %v218
  %v252 = vadd.f32 %v181, %v218
  %v253 = vadd.f32 %v182, %v218
  %v254 = vadd.f32 %v183, %v218
  %v255 = vadd.f32 %v184, %v218
  %v256 = vadd.f32 %v185, %v218
  %v257 = vadd.f32 %v186, %v218
  %v258 = vadd.f32 %v187, %v218
  %v259 = vadd.f32 %v188, %v218
  %v260 = vadd.f32 %v189, %v218
  %v261 = vadd.f32 %v190, %v218
  %v262 = vadd.f32 %v191, %v218
  %v263 = vadd.f32 %v192, %v218
  %v264 = vadd.f32 %v193, %v218
  %v265 = vadd.f32 %v194, %v218
  %v266 = vadd.f32 %v195, %v218
  %v267 = vadd.f32 %v196, %v218
  %v268 = vadd.f32 %v197, %v218
  %v269 = vadd.f32 %v198, %v218
  %v270 = vadd.f32 %v199, %v218
  %v271 = vadd.f32 %v200, %v218
  %v272 = vadd.f32 %v201, %v218
  %v273 = vadd.f32 %v202, %v218
  %v274 = vadd.f32 %v203, %v218
  %v275 = vadd.f32 %v204, %v218
  %v276 = vadd.f32 %v205, %v218
  %v277 = vadd.f32 %v206, %v218
  %v278 = vadd.f32 %v207, %v218
  %v279 = vadd.f32 %v208, %v218
  %v280 = vadd.f32 %v209, %v218
  %v281 = vadd.f32 %v210, %v218
  %v282 = vadd.f32 %v211, %v218
  %v283 = vadd.f32 %v212, %v218
  %v284 = vadd.f32 %v220, 4.0
  %v285 = vadd.f32 %v221, 4.0
  %v286 = vadd.f32 %v222, 4.0
  %v287 = vadd.f32 %v223, 4.0
  %v288 = vadd.f32 %v224, 4.0
  %v289 = vadd.f32 %v225, 4.0
  %v290 = vadd.f32 %v226, 4.0
  %v291 = vadd.f32 %v227, 4.0
  %v292 = vadd.f32 %v228, 4.0
  %v293 = vadd.f32 %v229, 4.0
  %v294 = vadd.f32 %v230, 4.0
  %v295 = vadd.f32 %v231, 4.0
  %v296 = vadd.f32 %v232, 4.0
  %v297 = vadd.f32 %v233, 4.0
  %v298 = vadd.f32 %v234, 4.0
  %v299 = vadd.f32 %v235, 4.0
  %v300 = vadd.f32 %v236, 4.0
  %v301 = vadd.f32 %v237, 4.0
  %v302 = vadd.f32 %v238, 4.0
  %v303 = vadd.f32 %v239, 4.0
  %v304 = vadd.f32 %v240, 4.0
  %v305 = vadd.f32 %v241, 4.0
  %v306 = vadd.f32 %v242, 4.0
  %v307 = vadd.f32 %v243, 4.0
  %v308 = vadd.f32 %v244, 4.0
  %v309 = vadd.f32 %v245, 4.0
  %v310 = vadd.f32 %v246, 4.0
  %v311 = vadd.f32 %v247, 4.0
  %v312 = vadd.f32 %v248, 4.0
  %v313 = vadd.f32 %v249, 4.0
  %v314 = vadd.f32 %v250, 4.0
  %v315 = vadd.f32 %v251, 4.0
  %v316 = vadd.f32 %v252, 4.0
  %v317 = vadd.f32 %v253, 4.0
  %v318 = vadd.f32 %v254, 4.0
  %v319 = vadd.f32 %v255, 4.0
  %v320 = vadd.f32 %v256, 4.0
  %v321 = vadd.f32 %v257, 4.0
  %v322 = vadd.f32 %v258, 4.0
  %v323 = vadd.f32 %v259, 4.0
  %v324 = vadd.f32 %v260, 4.0
  %v325 = vadd.f32 %v261, 4.0
  %v326 = vadd.f32 %v262, 4.0
  %v327 = vadd.f32 %v263, 4.0
  %v328 = vadd.f32 %v264, 4.0
  %v329 = vadd.f32 %v265, 4.0
  %v330 = vadd.f32 %v266, 4.0
  %v331 = vadd.f32 %v267, 4.0
  %v332 = vadd.f32 %v268, 4.0
  %v333 = vadd.f32 %v269, 4.0
  %v334 = vadd.f32 %v270, 4.0
  %v335 = vadd.f32 %v271, 4.0
  %v336 = vadd.f32 %v272, 4.0
  %v337 = vadd.f32 %v273, 4.0
  %v338 = vadd.f32 %v274, 4.0
  %v339 = vadd.f32 %v275, 4.0
  %v340 = vadd.f32 %v276, 4.0
  %v341 = vadd.f32 %v277, 4.0
  %v342 = vadd.f32 %v278, 4.0
  %v343 = vadd.f32 %v279, 4.0
  %v344 = vadd.f32 %v280, 4.0
  %v345 = vadd.f32 %v281, 4.0
  %v346 = vadd.f32 %v282, 4.0
  %v347 = vadd.f32 %v283, 4.0
  %v348 = vmax.f32 %v284, 0.0
  %v349 = vmax.f32 %v285, 0.0
  %v350 = vmax.f32 %v286, 0.0
  %v351 = vmax.f32 %v287, 0.0
  %v352 = vmax.f32 %v288, 0.0
  %v353 = vmax.f32 %v289, 0.0
  %v354 = vmax.f32 %v290, 0.0
  %v355 = vmax.f32 %v291, 0.0
  %v356 = vmax.f32 %v292, 0.0
  %v357 = vmax.f32 %v293, 0.0
  %v358 = vmax.f32 %v294, 0.0
  %v359 = vmax.f32 %v295, 0.0
  %v360 = vmax.f32 %v296, 0.0
  %v361 = vmax.f32 %v297, 0.0
  %v362 = vmax.f32 %v298, 0.0
  %v363 = vmax.f32 %v299, 0.0
  %v364 = vmax.f32 %v300, 0.0
  %v365 = vmax.f32 %v301, 0.0
  %v366 = vmax.f32 %v302, 0.0
  %v367 = vmax.f32 %v303, 0.0
  %v368 = vmax.f32 %v304, 0.0
  %v369 = vmax.f32 %v305, 0.0
  %v370 = vmax.f32 %v306, 0.0
  %v371 = vmax.f32 %v307, 0.0
  %v372 = vmax.f32 %v308, 0.0
  %v373 = vmax.f32 %v309, 0.0
  %v374 = vmax.f32 %v310, 0.0
  %v375 = vmax.f32 %v311, 0.0
  %v376 = vmax.f32 %v312, 0.0
  %v377 = vmax.f32 %v313, 0.0
  %v378 = vmax.f32 %v314, 0.0
  %v379 = vmax.f32 %v315, 0.0
  %v380 = vmax.f32 %v316, 0.0
  %v381 = vmax.f32 %v317, 0.0
  %v382 = vmax.f32 %v318, 0.0
  %v383 = vmax.f32 %v319, 0.0
  %v384 = vmax.f32 %v320, 0.0
  %v385 = vmax.f32 %v321, 0.0
  %v386 = vmax.f32 %v322, 0.0
  %v387 = vmax.f32 %v323, 0.0
  %v388 = vmax.f32 %v324, 0.0
  %v389 = vmax.f32 %v325, 0.0
  %v390 = vmax.f32 %v326, 0.0
  %v391 = vmax.f32 %v327, 0.0
  %v392 = vmax.f32 %v328, 0.0
  %v393 = vmax.f32 %v329, 0.0
  %v394 = vmax.f32 %v330, 0.0
  %v395 = vmax.f32 %v331, 0.0
  %v396 = vmax.f32 %v332, 0.0
  %v397 = vmax.f32 %v333, 0.0
  %v398 = vmax.f32 %v334, 0.0
  %v399 = vmax.f32 %v335, 0.0
  %v400 = vmax.f32 %v336, 0.0
  %v401 = vmax.f32 %v337, 0.0
  %v402 = vmax.f32 %v338, 0.0
  %v403 = vmax.f32 %v339, 0.0
  %v404 = vmax.f32 %v340, 0.0
  %v405 = vmax.f32 %v341, 0.0
  %v406 = vmax.f32 %v342, 0.0
  %v407 = vmax.f32 %v343, 0.0
  %v408 = vmax.f32 %v344, 0.0
  %v409 = vmax.f32 %v345, 0.0
  %v410 = vmax.f32 %v346, 0.0
  %v411 = vmax.f32 %v347, 0.0
  %412 = vst [vmem:[%s3] sm:$0xff] %v348
  %413 = vst [vmem:[%s3 + $0x8] sm:$0xff] %v349
  %414 = vst [vmem:[%s3 + $0x10] sm:$0xff] %v350
  %415 = vst [vmem:[%s3 + $0x18] sm:$0xff] %v351
  %416 = vst [vmem:[%s3 + $0x20] sm:$0xff] %v352
  %417 = vst [vmem:[%s3 + $0x28] sm:$0xff] %v353
  %418 = vst [vmem:[%s3 + $0x30] sm:$0xff] %v354
  %419 = vst [vmem:[%s3 + $0x38] sm:$0xff] %v355
  %420 = vst [vmem:[%s3 + $0x40] sm:$0xff] %v356
  %421 = vst [vmem:[%s3 + $0x48] sm:$0xff] %v357
  %422 = vst [vmem:[%s3 + $0x50] sm:$0xff] %v358
  %423 = vst [vmem:[%s3 + $0x58] sm:$0xff] %v359
  %424 = vst [vmem:[%s3 + $0x60] sm:$0xff] %v360
  %425 = vst [vmem:[%s3 + $0x68] sm:$0xff] %v361
  %426 = vst [vmem:[%s3 + $0x70] sm:$0xff] %v362
  %427 = vst [vmem:[%s3 + $0x78] sm:$0xff] %v363
  %428 = vst [vmem:[%s3 + $0x80] sm:$0xff] %v364
  %429 = vst [vmem:[%s3 + $0x88] sm:$0xff] %v365
  %430 = vst [vmem:[%s3 + $0x90] sm:$0xff] %v366
  %431 = vst [vmem:[%s3 + $0x98] sm:$0xff] %v367
  %432 = vst [vmem:[%s3 + $0xa0] sm:$0xff] %v368
  %433 = vst [vmem:[%s3 + $0xa8] sm:$0xff] %v369
  %434 = vst [vmem:[%s3 + $0xb0] sm:$0xff] %v370
  %435 = vst [vmem:[%s3 + $0xb8] sm:$0xff] %v371
  %436 = vst [vmem:[%s3 + $0xc0] sm:$0xff] %v372
  %437 = vst [vmem:[%s3 + $0xc8] sm:$0xff] %v373
  %438 = vst [vmem:[%s3 + $0xd0] sm:$0xff] %v374
  %439 = vst [vmem:[%s3 + $0xd8] sm:$0xff] %v375
  %440 = vst [vmem:[%s3 + $0xe0] sm:$0xff] %v376
  %441 = vst [vmem:[%s3 + $0xe8] sm:$0xff] %v377
  %442 = vst [vmem:[%s3 + $0xf0] sm:$0xff] %v378
  %443 = vst [vmem:[%s3 + $0xf8] sm:$0xff] %v379
  %444 = vst [vmem:[%s3 + $0x100] sm:$0xff] %v380
  %445 = vst [vmem:[%s3 + $0x108] sm:$0xff] %v381
  %446 = vst [vmem:[%s3 + $0x110] sm:$0xff] %v382
  %447 = vst [vmem:[%s3 + $0x118] sm:$0xff] %v383
  %448 = vst [vmem:[%s3 + $0x120] sm:$0xff] %v384
  %449 = vst [vmem:[%s3 + $0x128] sm:$0xff] %v385
  %450 = vst [vmem:[%s3 + $0x130] sm:$0xff] %v386
  %451 = vst [vmem:[%s3 + $0x138] sm:$0xff] %v387
  %452 = vst [vmem:[%s3 + $0x140] sm:$0xff] %v388
  %453 = vst [vmem:[%s3 + $0x148] sm:$0xff] %v389
  %454 = vst [vmem:[%s3 + $0x150] sm:$0xff] %v390
  %455 = vst [vmem:[%s3 + $0x158] sm:$0xff] %v391
  %456 = vst [vmem:[%s3 + $0x160] sm:$0xff] %v392
  %457 = vst [vmem:[%s3 + $0x168] sm:$0xff] %v393
  %458 = vst [vmem:[%s3 + $0x170] sm:$0xff] %v394
  %459 = vst [vmem:[%s3 + $0x178] sm:$0xff] %v395
  %460 = vst [vmem:[%s3 + $0x180] sm:$0xff] %v396
  %461 = vst [vmem:[%s3 + $0x188] sm:$0xff] %v397
  %462 = vst [vmem:[%s3 + $0x190] sm:$0xff] %v398
  %463 = vst [vmem:[%s3 + $0x198] sm:$0xff] %v399
  %464 = vst [vmem:[%s3 + $0x1a0] sm:$0xff] %v400
  %465 = vst [vmem:[%s3 + $0x1a8] sm:$0xff] %v401
  %466 = vst [vmem:[%s3 + $0x1b0] sm:$0xff] %v402
  %467 = vst [vmem:[%s3 + $0x1b8] sm:$0xff] %v403
  %468 = vst [vmem:[%s3 + $0x1c0] sm:$0xff] %v404
  %469 = vst [vmem:[%s3 + $0x1c8] sm:$0xff] %v405
  %470 = vst [vmem:[%s3 + $0x1d0] sm:$0xff] %v406
  %471 = vst [vmem:[%s3 + $0x1d8] sm:$0xff] %v407
  %472 = vst [vmem:[%s3 + $0x1e0] sm:$0xff] %v408
  %473 = vst [vmem:[%s3 + $0x1e8] sm:$0xff] %v409
  %474 = vst [vmem:[%s3 + $0x1f0] sm:$0xff] %v410
  %475 = vst [vmem:[%s3 + $0x1f8] sm:$0xff] %v411
  // Predicated region
  $region14: #{bottleneck_forward.7} parent=0 // pred_check
    _
  $region15: #{bottleneck_forward.7} parent=0 // pred_check_branch
    %477 = sbr.rel (0) target = $region17
  $region16: #{bottleneck_forward.7} parent=0 // pred_region
    _
  $region17: #{bottleneck_forward.7} parent=0 // pred_fallthru
    _
  // Predicated region
  $region18: #{bottleneck_forward.7} parent=0 // pred_check
    _
  $region19: #{bottleneck_forward.7} parent=0 // pred_check_branch
    %479 = sbr.rel (0) target = $region21
  $region20: #{bottleneck_forward.7} parent=0 // pred_region
    _
  $region21: #{bottleneck_forward.7} parent=0 // pred_fallthru
    _

// kernel: bottleneck_forward.4
$region0: #{bottleneck_forward.4}
  #allocation0 [shape = 'u32[]', space=smem, size = 0x4, offset = 0x4, fixed_abs, tag = 'smem constant byte address 0x4 - core index']
  #allocation1 [shape = 'u32[144,128]{1,0:T(1,128)}', space=vmem, size = 0x12000, scoped, tag = 'internal scratch']
  %s0 = inlined_call_operand.vmem [shape: f32[512,128], index: 0, kind: input, shape index: {}]
  %s1 = inlined_call_operand.vmem [shape: bf16[128,128], index: 1, kind: input, shape index: {}]
  %s2 = inlined_call_operand.vmem [shape: bf16[512,128], index: 2, kind: output, shape index: {0}]
  %s3 = inlined_call_operand.vmem [shape: f32[1,2,128], index: 3, kind: output, shape index: {1}]
  %4 = xla_tuple %s2, %s3
  %s5 = sld [smem:[#allocation0]]
  $region26: #{bottleneck_forward.4} parent=0
    _
  %s7 = ssub.s32 1, %s5
  %s8 = scalar_select 0, %s7, %s5
  // Predicated region
  $region2: #{bottleneck_forward.4} parent=0 // pred_check
    _
  $region3: #{bottleneck_forward.4} parent=0 // pred_check_branch
    %10 = sbr.rel (0) target = $region5
  $region4: #{bottleneck_forward.4} parent=0 // pred_region
    _
  $region5: #{bottleneck_forward.4} parent=0 // pred_fallthru
    _
  // Predicated region
  $region6: #{bottleneck_forward.4} parent=0 // pred_check
    _
  $region7: #{bottleneck_forward.4} parent=0 // pred_check_branch
    %12 = sbr.rel (0) target = $region9
  $region8: #{bottleneck_forward.4} parent=0 // pred_region
    _
  $region9: #{bottleneck_forward.4} parent=0 // pred_fallthru
    _
  %v14 = vld [vmem:[%s0] sm:$0xff]
  %v15 = vld [vmem:[%s0 + $0x8] sm:$0xff]
  %v16 = vld [vmem:[%s0 + $0x10] sm:$0xff]
  %v17 = vld [vmem:[%s0 + $0x18] sm:$0xff]
  %v18 = vld [vmem:[%s0 + $0x20] sm:$0xff]
  %v19 = vld [vmem:[%s0 + $0x28] sm:$0xff]
  %v20 = vld [vmem:[%s0 + $0x30] sm:$0xff]
  %v21 = vld [vmem:[%s0 + $0x38] sm:$0xff]
  %v22 = vld [vmem:[%s0 + $0x40] sm:$0xff]
  %v23 = vld [vmem:[%s0 + $0x48] sm:$0xff]
  %v24 = vld [vmem:[%s0 + $0x50] sm:$0xff]
  %v25 = vld [vmem:[%s0 + $0x58] sm:$0xff]
  %v26 = vld [vmem:[%s0 + $0x60] sm:$0xff]
  %v27 = vld [vmem:[%s0 + $0x68] sm:$0xff]
  %v28 = vld [vmem:[%s0 + $0x70] sm:$0xff]
  %v29 = vld [vmem:[%s0 + $0x78] sm:$0xff]
  %v30 = vld [vmem:[%s0 + $0x80] sm:$0xff]
  %v31 = vld [vmem:[%s0 + $0x88] sm:$0xff]
  %v32 = vld [vmem:[%s0 + $0x90] sm:$0xff]
  %v33 = vld [vmem:[%s0 + $0x98] sm:$0xff]
  %v34 = vld [vmem:[%s0 + $0xa0] sm:$0xff]
  %v35 = vld [vmem:[%s0 + $0xa8] sm:$0xff]
  %v36 = vld [vmem:[%s0 + $0xb0] sm:$0xff]
  %v37 = vld [vmem:[%s0 + $0xb8] sm:$0xff]
  %v38 = vld [vmem:[%s0 + $0xc0] sm:$0xff]
  %v39 = vld [vmem:[%s0 + $0xc8] sm:$0xff]
  %v40 = vld [vmem:[%s0 + $0xd0] sm:$0xff]
  %v41 = vld [vmem:[%s0 + $0xd8] sm:$0xff]
  %v42 = vld [vmem:[%s0 + $0xe0] sm:$0xff]
  %v43 = vld [vmem:[%s0 + $0xe8] sm:$0xff]
  %v44 = vld [vmem:[%s0 + $0xf0] sm:$0xff]
  %v45 = vld [vmem:[%s0 + $0xf8] sm:$0xff]
  %v46 = vld [vmem:[%s0 + $0x100] sm:$0xff]
  %v47 = vld [vmem:[%s0 + $0x108] sm:$0xff]
  %v48 = vld [vmem:[%s0 + $0x110] sm:$0xff]
  %v49 = vld [vmem:[%s0 + $0x118] sm:$0xff]
  %v50 = vld [vmem:[%s0 + $0x120] sm:$0xff]
  %v51 = vld [vmem:[%s0 + $0x128] sm:$0xff]
  %v52 = vld [vmem:[%s0 + $0x130] sm:$0xff]
  %v53 = vld [vmem:[%s0 + $0x138] sm:$0xff]
  %v54 = vld [vmem:[%s0 + $0x140] sm:$0xff]
  %v55 = vld [vmem:[%s0 + $0x148] sm:$0xff]
  %v56 = vld [vmem:[%s0 + $0x150] sm:$0xff]
  %v57 = vld [vmem:[%s0 + $0x158] sm:$0xff]
  %v58 = vld [vmem:[%s0 + $0x160] sm:$0xff]
  %v59 = vld [vmem:[%s0 + $0x168] sm:$0xff]
  %v60 = vld [vmem:[%s0 + $0x170] sm:$0xff]
  %v61 = vld [vmem:[%s0 + $0x178] sm:$0xff]
  %v62 = vld [vmem:[%s0 + $0x180] sm:$0xff]
  %v63 = vld [vmem:[%s0 + $0x188] sm:$0xff]
  %v64 = vld [vmem:[%s0 + $0x190] sm:$0xff]
  %v65 = vld [vmem:[%s0 + $0x198] sm:$0xff]
  %v66 = vld [vmem:[%s0 + $0x1a0] sm:$0xff]
  %v67 = vld [vmem:[%s0 + $0x1a8] sm:$0xff]
  %v68 = vld [vmem:[%s0 + $0x1b0] sm:$0xff]
  %v69 = vld [vmem:[%s0 + $0x1b8] sm:$0xff]
  %v70 = vld [vmem:[%s0 + $0x1c0] sm:$0xff]
  %v71 = vld [vmem:[%s0 + $0x1c8] sm:$0xff]
  %v72 = vld [vmem:[%s0 + $0x1d0] sm:$0xff]
  %v73 = vld [vmem:[%s0 + $0x1d8] sm:$0xff]
  %v74 = vld [vmem:[%s0 + $0x1e0] sm:$0xff]
  %v75 = vld [vmem:[%s0 + $0x1e8] sm:$0xff]
  %v76 = vld [vmem:[%s0 + $0x1f0] sm:$0xff]
  %v77 = vld [vmem:[%s0 + $0x1f8] sm:$0xff]
  %v78 = vpack.c.bf16 %v15, %v14
  %v79 = vpack.c.bf16 %v17, %v16
  %v80 = vpack.c.bf16 %v19, %v18
  %v81 = vpack.c.bf16 %v21, %v20
  %v82 = vpack.c.bf16 %v23, %v22
  %v83 = vpack.c.bf16 %v25, %v24
  %v84 = vpack.c.bf16 %v27, %v26
  %v85 = vpack.c.bf16 %v29, %v28
  %v86 = vpack.c.bf16 %v31, %v30
  %v87 = vpack.c.bf16 %v33, %v32
  %v88 = vpack.c.bf16 %v35, %v34
  %v89 = vpack.c.bf16 %v37, %v36
  %v90 = vpack.c.bf16 %v39, %v38
  %v91 = vpack.c.bf16 %v41, %v40
  %v92 = vpack.c.bf16 %v43, %v42
  %v93 = vpack.c.bf16 %v45, %v44
  %v94 = vpack.c.bf16 %v47, %v46
  %v95 = vpack.c.bf16 %v49, %v48
  %v96 = vpack.c.bf16 %v51, %v50
  %v97 = vpack.c.bf16 %v53, %v52
  %v98 = vpack.c.bf16 %v55, %v54
  %v99 = vpack.c.bf16 %v57, %v56
  %v100 = vpack.c.bf16 %v59, %v58
  %v101 = vpack.c.bf16 %v61, %v60
  %v102 = vpack.c.bf16 %v63, %v62
  %v103 = vpack.c.bf16 %v65, %v64
  %v104 = vpack.c.bf16 %v67, %v66
  %v105 = vpack.c.bf16 %v69, %v68
  %v106 = vpack.c.bf16 %v71, %v70
  %v107 = vpack.c.bf16 %v73, %v72
  %v108 = vpack.c.bf16 %v75, %v74
  %v109 = vpack.c.bf16 %v77, %v76
  %v110 = vld [vmem:[%s1] sm:$0xf]
  %v111 = vld [vmem:[%s1 + $0x4] sm:$0xf]
  %v112 = vld [vmem:[%s1 + $0x8] sm:$0xf]
  %v113 = vld [vmem:[%s1 + $0xc] sm:$0xf]
  %v114 = vld [vmem:[%s1 + $0x10] sm:$0xf]
  %v115 = vld [vmem:[%s1 + $0x14] sm:$0xf]
  %v116 = vld [vmem:[%s1 + $0x18] sm:$0xf]
  %v117 = vld [vmem:[%s1 + $0x1c] sm:$0xf]
  %v118 = vld [vmem:[%s1 + $0x20] sm:$0xf]
  %v119 = vld [vmem:[%s1 + $0x24] sm:$0xf]
  %v120 = vld [vmem:[%s1 + $0x28] sm:$0xf]
  %v121 = vld [vmem:[%s1 + $0x2c] sm:$0xf]
  %v122 = vld [vmem:[%s1 + $0x30] sm:$0xf]
  %v123 = vld [vmem:[%s1 + $0x34] sm:$0xf]
  %v124 = vld [vmem:[%s1 + $0x38] sm:$0xf]
  %v125 = vld [vmem:[%s1 + $0x3c] sm:$0xf]
  %v142 = vunpack.c.l.b16 %v110
  %v143 = vunpack.c.l.b16 %v111
  %v144 = vunpack.c.l.b16 %v112
  %v145 = vunpack.c.l.b16 %v113
  %v146 = vunpack.c.l.b16 %v114
  %v147 = vunpack.c.l.b16 %v115
  %v148 = vunpack.c.l.b16 %v116
  %v149 = vunpack.c.l.b16 %v117
  %v150 = vunpack.c.l.b16 %v118
  %v151 = vunpack.c.l.b16 %v119
  %v152 = vunpack.c.l.b16 %v120
  %v153 = vunpack.c.l.b16 %v121
  %v154 = vunpack.c.l.b16 %v122
  %v155 = vunpack.c.l.b16 %v123
  %v156 = vunpack.c.l.b16 %v124
  %v157 = vunpack.c.l.b16 %v125
  %v158 = vpack.c.b16 %v143, %v142
  %v159 = vpack.c.b16 %v145, %v144
  %v160 = vpack.c.b16 %v147, %v146
  %v161 = vpack.c.b16 %v149, %v148
  %v162 = vpack.c.b16 %v151, %v150
  %v163 = vpack.c.b16 %v153, %v152
  %v164 = vpack.c.b16 %v155, %v154
  %v165 = vpack.c.b16 %v157, %v156
  %174 = vmatprep.subr.bf16.mxu0 0
  %175 = vmatpush1.bf16.msra.mxu0 %v165
  %176 = vmatprep.subr.bf16.mxu0 0
  %177 = vmatpush1.bf16.msra.mxu0 %v164
  %178 = vmatprep.subr.bf16.mxu0 0
  %179 = vmatpush1.bf16.msra.mxu0 %v163
  %180 = vmatprep.subr.bf16.mxu0 0
  %181 = vmatpush1.bf16.msra.mxu0 %v162
  %182 = vmatprep.subr.bf16.mxu0 0
  %183 = vmatpush1.bf16.msra.mxu0 %v161
  %184 = vmatprep.subr.bf16.mxu0 0
  %185 = vmatpush1.bf16.msra.mxu0 %v160
  %186 = vmatprep.subr.bf16.mxu0 0
  %187 = vmatpush1.bf16.msra.mxu0 %v159
  %188 = vmatprep.subr.bf16.mxu0 0
  %189 = vmatpush1.bf16.msra.mxu0 %v158
  %190 = vmatprep.subr.bf16.mxu0 0
  %191 = vmatpush2.bf16.msra.mxu0 0
  %192 = vmatprep.subr.bf16.mxu0 0
  %193 = vmatpush2.bf16.msra.mxu0 0
  %194 = vmatprep.subr.bf16.mxu0 0
  %195 = vmatpush2.bf16.msra.mxu0 0
  %196 = vmatprep.subr.bf16.mxu0 0
  %197 = vmatpush2.bf16.msra.mxu0 0
  %198 = vmatprep.subr.bf16.mxu0 0
  %199 = vmatpush2.bf16.msra.mxu0 0
  %200 = vmatprep.subr.bf16.mxu0 0
  %201 = vmatpush2.bf16.msra.mxu0 0
  %202 = vmatprep.subr.bf16.mxu0 0
  %203 = vmatpush2.bf16.msra.mxu0 0
  %204 = vmatprep.subr.bf16.mxu0 0
  %205 = vmatpush2.bf16.msra.mxu0 0
  %206 = vmatprep.mubr.bf16.mxu0 0
  %207 = vmatmul.mubr.bf16.gmra.mxu0 %v78
  %v208 = vpop.f32.mrf.mxu0
  %v209 = vadd.f32 0.0, %v208
  %v210 = vpop.f32.mrf.mxu0
  %v211 = vpop.f32.mrf.mxu0
  %v212 = vadd.f32 0.0, %v211
  %v213 = vpop.f32.mrf.mxu0
  %214 = vmatprep.mubr.bf16.mxu0 0
  %215 = vmatmul.mubr.bf16.gmra.mxu0 %v79
  %v216 = vpop.f32.mrf.mxu0
  %v217 = vadd.f32 0.0, %v216
  %v218 = vpop.f32.mrf.mxu0
  %v219 = vpop.f32.mrf.mxu0
  %v220 = vadd.f32 0.0, %v219
  %v221 = vpop.f32.mrf.mxu0
  %222 = vmatprep.mubr.bf16.mxu0 0
  %223 = vmatmul.mubr.bf16.gmra.mxu0 %v80
  %v224 = vpop.f32.mrf.mxu0
  %v225 = vadd.f32 0.0, %v224
  %v226 = vpop.f32.mrf.mxu0
  %v227 = vpop.f32.mrf.mxu0
  %v228 = vadd.f32 0.0, %v227
  %v229 = vpop.f32.mrf.mxu0
  %230 = vmatprep.mubr.bf16.mxu0 0
  %231 = vmatmul.mubr.bf16.gmra.mxu0 %v81
  %v232 = vpop.f32.mrf.mxu0
  %v233 = vadd.f32 0.0, %v232
  %v234 = vpop.f32.mrf.mxu0
  %v235 = vpop.f32.mrf.mxu0
  %v236 = vadd.f32 0.0, %v235
  %v237 = vpop.f32.mrf.mxu0
  %238 = vmatprep.mubr.bf16.mxu0 0
  %239 = vmatmul.mubr.bf16.gmra.mxu0 %v82
  %v240 = vpop.f32.mrf.mxu0
  %v241 = vadd.f32 0.0, %v240
  %v242 = vpop.f32.mrf.mxu0
  %v243 = vpop.f32.mrf.mxu0
  %v244 = vadd.f32 0.0, %v243
  %v245 = vpop.f32.mrf.mxu0
  %246 = vmatprep.mubr.bf16.mxu0 0
  %247 = vmatmul.mubr.bf16.gmra.mxu0 %v83
  %v248 = vpop.f32.mrf.mxu0
  %v249 = vadd.f32 0.0, %v248
  %v250 = vpop.f32.mrf.mxu0
  %v251 = vpop.f32.mrf.mxu0
  %v252 = vadd.f32 0.0, %v251
  %v253 = vpop.f32.mrf.mxu0
  %254 = vmatprep.mubr.bf16.mxu0 0
  %255 = vmatmul.mubr.bf16.gmra.mxu0 %v84
  %v256 = vpop.f32.mrf.mxu0
  %v257 = vadd.f32 0.0, %v256
  %v258 = vpop.f32.mrf.mxu0
  %v259 = vpop.f32.mrf.mxu0
  %v260 = vadd.f32 0.0, %v259
  %v261 = vpop.f32.mrf.mxu0
  %262 = vmatprep.mubr.bf16.mxu0 0
  %263 = vmatmul.mubr.bf16.gmra.mxu0 %v85
  %v264 = vpop.f32.mrf.mxu0
  %v265 = vadd.f32 0.0, %v264
  %v266 = vpop.f32.mrf.mxu0
  %v267 = vpop.f32.mrf.mxu0
  %v268 = vadd.f32 0.0, %v267
  %v269 = vpop.f32.mrf.mxu0
  %270 = vmatprep.mubr.bf16.mxu0 0
  %271 = vmatmul.mubr.bf16.gmra.mxu0 %v86
  %v272 = vpop.f32.mrf.mxu0
  %v273 = vadd.f32 0.0, %v272
  %v274 = vpop.f32.mrf.mxu0
  %v275 = vpop.f32.mrf.mxu0
  %v276 = vadd.f32 0.0, %v275
  %v277 = vpop.f32.mrf.mxu0
  %278 = vmatprep.mubr.bf16.mxu0 0
  %279 = vmatmul.mubr.bf16.gmra.mxu0 %v87
  %v280 = vpop.f32.mrf.mxu0
  %v281 = vadd.f32 0.0, %v280
  %v282 = vpop.f32.mrf.mxu0
  %v283 = vpop.f32.mrf.mxu0
  %v284 = vadd.f32 0.0, %v283
  %v285 = vpop.f32.mrf.mxu0
  %286 = vmatprep.mubr.bf16.mxu0 0
  %287 = vmatmul.mubr.bf16.gmra.mxu0 %v88
  %v288 = vpop.f32.mrf.mxu0
  %v289 = vadd.f32 0.0, %v288
  %v290 = vpop.f32.mrf.mxu0
  %v291 = vpop.f32.mrf.mxu0
  %v292 = vadd.f32 0.0, %v291
  %v293 = vpop.f32.mrf.mxu0
  %294 = vmatprep.mubr.bf16.mxu0 0
  %295 = vmatmul.mubr.bf16.gmra.mxu0 %v89
  %v296 = vpop.f32.mrf.mxu0
  %v297 = vadd.f32 0.0, %v296
  %v298 = vpop.f32.mrf.mxu0
  %v299 = vpop.f32.mrf.mxu0
  %v300 = vadd.f32 0.0, %v299
  %v301 = vpop.f32.mrf.mxu0
  %302 = vmatprep.mubr.bf16.mxu0 0
  %303 = vmatmul.mubr.bf16.gmra.mxu0 %v90
  %v304 = vpop.f32.mrf.mxu0
  %v305 = vadd.f32 0.0, %v304
  %v306 = vpop.f32.mrf.mxu0
  %v307 = vpop.f32.mrf.mxu0
  %v308 = vadd.f32 0.0, %v307
  %v309 = vpop.f32.mrf.mxu0
  %310 = vmatprep.mubr.bf16.mxu0 0
  %311 = vmatmul.mubr.bf16.gmra.mxu0 %v91
  %v312 = vpop.f32.mrf.mxu0
  %v313 = vadd.f32 0.0, %v312
  %v314 = vpop.f32.mrf.mxu0
  %v315 = vpop.f32.mrf.mxu0
  %v316 = vadd.f32 0.0, %v315
  %v317 = vpop.f32.mrf.mxu0
  %318 = vmatprep.mubr.bf16.mxu0 0
  %319 = vmatmul.mubr.bf16.gmra.mxu0 %v92
  %v320 = vpop.f32.mrf.mxu0
  %v321 = vadd.f32 0.0, %v320
  %v322 = vpop.f32.mrf.mxu0
  %v323 = vpop.f32.mrf.mxu0
  %v324 = vadd.f32 0.0, %v323
  %v325 = vpop.f32.mrf.mxu0
  %326 = vmatprep.mubr.bf16.mxu0 0
  %327 = vmatmul.mubr.bf16.gmra.mxu0 %v93
  %v328 = vpop.f32.mrf.mxu0
  %v329 = vadd.f32 0.0, %v328
  %v330 = vpop.f32.mrf.mxu0
  %v331 = vpop.f32.mrf.mxu0
  %v332 = vadd.f32 0.0, %v331
  %v333 = vpop.f32.mrf.mxu0
  %334 = vmatprep.mubr.bf16.mxu0 0
  %335 = vmatmul.mubr.bf16.gmra.mxu0 %v94
  %v336 = vpop.f32.mrf.mxu0
  %v337 = vadd.f32 0.0, %v336
  %v338 = vpop.f32.mrf.mxu0
  %v339 = vpop.f32.mrf.mxu0
  %v340 = vadd.f32 0.0, %v339
  %v341 = vpop.f32.mrf.mxu0
  %342 = vmatprep.mubr.bf16.mxu0 0
  %343 = vmatmul.mubr.bf16.gmra.mxu0 %v95
  %v344 = vpop.f32.mrf.mxu0
  %v345 = vadd.f32 0.0, %v344
  %v346 = vpop.f32.mrf.mxu0
  %v347 = vpop.f32.mrf.mxu0
  %v348 = vadd.f32 0.0, %v347
  %v349 = vpop.f32.mrf.mxu0
  %350 = vmatprep.mubr.bf16.mxu0 0
  %351 = vmatmul.mubr.bf16.gmra.mxu0 %v96
  %v352 = vpop.f32.mrf.mxu0
  %v353 = vadd.f32 0.0, %v352
  %v354 = vpop.f32.mrf.mxu0
  %v355 = vpop.f32.mrf.mxu0
  %v356 = vadd.f32 0.0, %v355
  %v357 = vpop.f32.mrf.mxu0
  %358 = vmatprep.mubr.bf16.mxu0 0
  %359 = vmatmul.mubr.bf16.gmra.mxu0 %v97
  %v360 = vpop.f32.mrf.mxu0
  %v361 = vadd.f32 0.0, %v360
  %v362 = vpop.f32.mrf.mxu0
  %v363 = vpop.f32.mrf.mxu0
  %v364 = vadd.f32 0.0, %v363
  %v365 = vpop.f32.mrf.mxu0
  %366 = vmatprep.mubr.bf16.mxu0 0
  %367 = vmatmul.mubr.bf16.gmra.mxu0 %v98
  %v368 = vpop.f32.mrf.mxu0
  %v369 = vadd.f32 0.0, %v368
  %v370 = vpop.f32.mrf.mxu0
  %v371 = vpop.f32.mrf.mxu0
  %v372 = vadd.f32 0.0, %v371
  %v373 = vpop.f32.mrf.mxu0
  %374 = vmatprep.mubr.bf16.mxu0 0
  %375 = vmatmul.mubr.bf16.gmra.mxu0 %v99
  %v376 = vpop.f32.mrf.mxu0
  %v377 = vadd.f32 0.0, %v376
  %v378 = vpop.f32.mrf.mxu0
  %v379 = vpop.f32.mrf.mxu0
  %v380 = vadd.f32 0.0, %v379
  %v381 = vpop.f32.mrf.mxu0
  %382 = vmatprep.mubr.bf16.mxu0 0
  %383 = vmatmul.mubr.bf16.gmra.mxu0 %v100
  %v384 = vpop.f32.mrf.mxu0
  %v385 = vadd.f32 0.0, %v384
  %v386 = vpop.f32.mrf.mxu0
  %v387 = vpop.f32.mrf.mxu0
  %v388 = vadd.f32 0.0, %v387
  %v389 = vpop.f32.mrf.mxu0
  %390 = vmatprep.mubr.bf16.mxu0 0
  %391 = vmatmul.mubr.bf16.gmra.mxu0 %v101
  %v392 = vpop.f32.mrf.mxu0
  %v393 = vadd.f32 0.0, %v392
  %v394 = vpop.f32.mrf.mxu0
  %v395 = vpop.f32.mrf.mxu0
  %v396 = vadd.f32 0.0, %v395
  %v397 = vpop.f32.mrf.mxu0
  %398 = vmatprep.mubr.bf16.mxu0 0
  %399 = vmatmul.mubr.bf16.gmra.mxu0 %v102
  %v400 = vpop.f32.mrf.mxu0
  %v401 = vadd.f32 0.0, %v400
  %v402 = vpop.f32.mrf.mxu0
  %v403 = vpop.f32.mrf.mxu0
  %v404 = vadd.f32 0.0, %v403
  %v405 = vpop.f32.mrf.mxu0
  %406 = vmatprep.mubr.bf16.mxu0 0
  %407 = vmatmul.mubr.bf16.gmra.mxu0 %v103
  %v408 = vpop.f32.mrf.mxu0
  %v409 = vadd.f32 0.0, %v408
  %v410 = vpop.f32.mrf.mxu0
  %v411 = vpop.f32.mrf.mxu0
  %v412 = vadd.f32 0.0, %v411
  %v413 = vpop.f32.mrf.mxu0
  %414 = vmatprep.mubr.bf16.mxu0 0
  %415 = vmatmul.mubr.bf16.gmra.mxu0 %v104
  %v416 = vpop.f32.mrf.mxu0
  %v417 = vadd.f32 0.0, %v416
  %v418 = vpop.f32.mrf.mxu0
  %v419 = vpop.f32.mrf.mxu0
  %v420 = vadd.f32 0.0, %v419
  %v421 = vpop.f32.mrf.mxu0
  %422 = vmatprep.mubr.bf16.mxu0 0
  %423 = vmatmul.mubr.bf16.gmra.mxu0 %v105
  %v424 = vpop.f32.mrf.mxu0
  %v425 = vadd.f32 0.0, %v424
  %v426 = vpop.f32.mrf.mxu0
  %v427 = vpop.f32.mrf.mxu0
  %v428 = vadd.f32 0.0, %v427
  %v429 = vpop.f32.mrf.mxu0
  %430 = vmatprep.mubr.bf16.mxu0 0
  %431 = vmatmul.mubr.bf16.gmra.mxu0 %v106
  %v432 = vpop.f32.mrf.mxu0
  %v433 = vadd.f32 0.0, %v432
  %v434 = vpop.f32.mrf.mxu0
  %v435 = vpop.f32.mrf.mxu0
  %v436 = vadd.f32 0.0, %v435
  %v437 = vpop.f32.mrf.mxu0
  %438 = vmatprep.mubr.bf16.mxu0 0
  %439 = vmatmul.mubr.bf16.gmra.mxu0 %v107
  %v440 = vpop.f32.mrf.mxu0
  %v441 = vadd.f32 0.0, %v440
  %v442 = vpop.f32.mrf.mxu0
  %v443 = vpop.f32.mrf.mxu0
  %v444 = vadd.f32 0.0, %v443
  %v445 = vpop.f32.mrf.mxu0
  %446 = vmatprep.mubr.bf16.mxu0 0
  %447 = vmatmul.mubr.bf16.gmra.mxu0 %v108
  %v448 = vpop.f32.mrf.mxu0
  %v449 = vadd.f32 0.0, %v448
  %v450 = vpop.f32.mrf.mxu0
  %v451 = vpop.f32.mrf.mxu0
  %v452 = vadd.f32 0.0, %v451
  %v453 = vpop.f32.mrf.mxu0
  %454 = vmatprep.mubr.bf16.mxu0 0
  %455 = vmatmul.mubr.bf16.gmra.mxu0 %v109
  %v456 = vpop.f32.mrf.mxu0
  %v457 = vadd.f32 0.0, %v456
  %v458 = vpop.f32.mrf.mxu0
  %v459 = vpop.f32.mrf.mxu0
  %v460 = vadd.f32 0.0, %v459
  %v461 = vpop.f32.mrf.mxu0
  %462 = vdwg.mxu0
  %v463 = vpack.c.bf16 %v212, %v209
  %v464 = vpack.c.bf16 %v220, %v217
  %v465 = vpack.c.bf16 %v228, %v225
  %v466 = vpack.c.bf16 %v236, %v233
  %v467 = vpack.c.bf16 %v244, %v241
  %v468 = vpack.c.bf16 %v252, %v249
  %v469 = vpack.c.bf16 %v260, %v257
  %v470 = vpack.c.bf16 %v268, %v265
  %v471 = vpack.c.bf16 %v276, %v273
  %v472 = vpack.c.bf16 %v284, %v281
  %v473 = vpack.c.bf16 %v292, %v289
  %v474 = vpack.c.bf16 %v300, %v297
  %v475 = vpack.c.bf16 %v308, %v305
  %v476 = vpack.c.bf16 %v316, %v313
  %v477 = vpack.c.bf16 %v324, %v321
  %v478 = vpack.c.bf16 %v332, %v329
  %v479 = vpack.c.bf16 %v340, %v337
  %v480 = vpack.c.bf16 %v348, %v345
  %v481 = vpack.c.bf16 %v356, %v353
  %v482 = vpack.c.bf16 %v364, %v361
  %v483 = vpack.c.bf16 %v372, %v369
  %v484 = vpack.c.bf16 %v380, %v377
  %v485 = vpack.c.bf16 %v388, %v385
  %v486 = vpack.c.bf16 %v396, %v393
  %v487 = vpack.c.bf16 %v404, %v401
  %v488 = vpack.c.bf16 %v412, %v409
  %v489 = vpack.c.bf16 %v420, %v417
  %v490 = vpack.c.bf16 %v428, %v425
  %v491 = vpack.c.bf16 %v436, %v433
  %v492 = vpack.c.bf16 %v444, %v441
  %v493 = vpack.c.bf16 %v452, %v449
  %v494 = vpack.c.bf16 %v460, %v457
  %v527 = vunpack.c.l.b16 %v463
  %v528 = vunpack.c.h.b16 %v463
  %v529 = vunpack.c.l.b16 %v464
  %v530 = vunpack.c.h.b16 %v464
  %v531 = vunpack.c.l.b16 %v465
  %v532 = vunpack.c.h.b16 %v465
  %v533 = vunpack.c.l.b16 %v466
  %v534 = vunpack.c.h.b16 %v466
  %v535 = vunpack.c.l.b16 %v467
  %v536 = vunpack.c.h.b16 %v467
  %v537 = vunpack.c.l.b16 %v468
  %v538 = vunpack.c.h.b16 %v468
  %v539 = vunpack.c.l.b16 %v469
  %v540 = vunpack.c.h.b16 %v469
  %v541 = vunpack.c.l.b16 %v470
  %v542 = vunpack.c.h.b16 %v470
  %v543 = vunpack.c.l.b16 %v471
  %v544 = vunpack.c.h.b16 %v471
  %v545 = vunpack.c.l.b16 %v472
  %v546 = vunpack.c.h.b16 %v472
  %v547 = vunpack.c.l.b16 %v473
  %v548 = vunpack.c.h.b16 %v473
  %v549 = vunpack.c.l.b16 %v474
  %v550 = vunpack.c.h.b16 %v474
  %v551 = vunpack.c.l.b16 %v475
  %v552 = vunpack.c.h.b16 %v475
  %v553 = vunpack.c.l.b16 %v476
  %v554 = vunpack.c.h.b16 %v476
  %v555 = vunpack.c.l.b16 %v477
  %v556 = vunpack.c.h.b16 %v477
  %v557 = vunpack.c.l.b16 %v478
  %v558 = vunpack.c.h.b16 %v478
  %v559 = vunpack.c.l.b16 %v479
  %v560 = vunpack.c.h.b16 %v479
  %v561 = vunpack.c.l.b16 %v480
  %v562 = vunpack.c.h.b16 %v480
  %v563 = vunpack.c.l.b16 %v481
  %v564 = vunpack.c.h.b16 %v481
  %v565 = vunpack.c.l.b16 %v482
  %v566 = vunpack.c.h.b16 %v482
  %v567 = vunpack.c.l.b16 %v483
  %v568 = vunpack.c.h.b16 %v483
  %v569 = vunpack.c.l.b16 %v484
  %v570 = vunpack.c.h.b16 %v484
  %v571 = vunpack.c.l.b16 %v485
  %v572 = vunpack.c.h.b16 %v485
  %v573 = vunpack.c.l.b16 %v486
  %v574 = vunpack.c.h.b16 %v486
  %v575 = vunpack.c.l.b16 %v487
  %v576 = vunpack.c.h.b16 %v487
  %v577 = vunpack.c.l.b16 %v488
  %v578 = vunpack.c.h.b16 %v488
  %v579 = vunpack.c.l.b16 %v489
  %v580 = vunpack.c.h.b16 %v489
  %v581 = vunpack.c.l.b16 %v490
  %v582 = vunpack.c.h.b16 %v490
  %v583 = vunpack.c.l.b16 %v491
  %v584 = vunpack.c.h.b16 %v491
  %v585 = vunpack.c.l.b16 %v492
  %v586 = vunpack.c.h.b16 %v492
  %v587 = vunpack.c.l.b16 %v493
  %v588 = vunpack.c.h.b16 %v493
  %v589 = vunpack.c.l.b16 %v494
  %v590 = vunpack.c.h.b16 %v494
  %v591 = vpack.c.b16 %v527, %v527
  %v592 = vpack.c.b16 %v528, %v528
  %v593 = vpack.c.b16 %v529, %v529
  %v594 = vpack.c.b16 %v530, %v530
  %v595 = vpack.c.b16 %v531, %v531
  %v596 = vpack.c.b16 %v532, %v532
  %v597 = vpack.c.b16 %v533, %v533
  %v598 = vpack.c.b16 %v534, %v534
  %v599 = vpack.c.b16 %v535, %v535
  %v600 = vpack.c.b16 %v536, %v536
  %v601 = vpack.c.b16 %v537, %v537
  %v602 = vpack.c.b16 %v538, %v538
  %v603 = vpack.c.b16 %v539, %v539
  %v604 = vpack.c.b16 %v540, %v540
  %v605 = vpack.c.b16 %v541, %v541
  %v606 = vpack.c.b16 %v542, %v542
  %v607 = vpack.c.b16 %v543, %v543
  %v608 = vpack.c.b16 %v544, %v544
  %v609 = vpack.c.b16 %v545, %v545
  %v610 = vpack.c.b16 %v546, %v546
  %v611 = vpack.c.b16 %v547, %v547
  %v612 = vpack.c.b16 %v548, %v548
  %v613 = vpack.c.b16 %v549, %v549
  %v614 = vpack.c.b16 %v550, %v550
  %v615 = vpack.c.b16 %v551, %v551
  %v616 = vpack.c.b16 %v552, %v552
  %v617 = vpack.c.b16 %v553, %v553
  %v618 = vpack.c.b16 %v554, %v554
  %v619 = vpack.c.b16 %v555, %v555
  %v620 = vpack.c.b16 %v556, %v556
  %v621 = vpack.c.b16 %v557, %v557
  %v622 = vpack.c.b16 %v558, %v558
  %v623 = vpack.c.b16 %v559, %v559
  %v624 = vpack.c.b16 %v560, %v560
  %v625 = vpack.c.b16 %v561, %v561
  %v626 = vpack.c.b16 %v562, %v562
  %v627 = vpack.c.b16 %v563, %v563
  %v628 = vpack.c.b16 %v564, %v564
  %v629 = vpack.c.b16 %v565, %v565
  %v630 = vpack.c.b16 %v566, %v566
  %v631 = vpack.c.b16 %v567, %v567
  %v632 = vpack.c.b16 %v568, %v568
  %v633 = vpack.c.b16 %v569, %v569
  %v634 = vpack.c.b16 %v570, %v570
  %v635 = vpack.c.b16 %v571, %v571
  %v636 = vpack.c.b16 %v572, %v572
  %v637 = vpack.c.b16 %v573, %v573
  %v638 = vpack.c.b16 %v574, %v574
  %v639 = vpack.c.b16 %v575, %v575
  %v640 = vpack.c.b16 %v576, %v576
  %v641 = vpack.c.b16 %v577, %v577
  %v642 = vpack.c.b16 %v578, %v578
  %v643 = vpack.c.b16 %v579, %v579
  %v644 = vpack.c.b16 %v580, %v580
  %v645 = vpack.c.b16 %v581, %v581
  %v646 = vpack.c.b16 %v582, %v582
  %v647 = vpack.c.b16 %v583, %v583
  %v648 = vpack.c.b16 %v584, %v584
  %v649 = vpack.c.b16 %v585, %v585
  %v650 = vpack.c.b16 %v586, %v586
  %v651 = vpack.c.b16 %v587, %v587
  %v652 = vpack.c.b16 %v588, %v588
  %v653 = vpack.c.b16 %v589, %v589
  %v654 = vpack.c.b16 %v590, %v590
  %719 = vst [vmem:[%s2] sm:$0xf] %v591
  %720 = vst [vmem:[%s2 + $0x4] sm:$0xf] %v592
  %721 = vst [vmem:[%s2 + $0x8] sm:$0xf] %v593
  %722 = vst [vmem:[%s2 + $0xc] sm:$0xf] %v594
  %723 = vst [vmem:[%s2 + $0x10] sm:$0xf] %v595
  %724 = vst [vmem:[%s2 + $0x14] sm:$0xf] %v596
  %725 = vst [vmem:[%s2 + $0x18] sm:$0xf] %v597
  %726 = vst [vmem:[%s2 + $0x1c] sm:$0xf] %v598
  %727 = vst [vmem:[%s2 + $0x20] sm:$0xf] %v599
  %728 = vst [vmem:[%s2 + $0x24] sm:$0xf] %v600
  %729 = vst [vmem:[%s2 + $0x28] sm:$0xf] %v601
  %730 = vst [vmem:[%s2 + $0x2c] sm:$0xf] %v602
  %731 = vst [vmem:[%s2 + $0x30] sm:$0xf] %v603
  %732 = vst [vmem:[%s2 + $0x34] sm:$0xf] %v604
  %733 = vst [vmem:[%s2 + $0x38] sm:$0xf] %v605
  %734 = vst [vmem:[%s2 + $0x3c] sm:$0xf] %v606
  %735 = vst [vmem:[%s2 + $0x40] sm:$0xf] %v607
  %736 = vst [vmem:[%s2 + $0x44] sm:$0xf] %v608
  %737 = vst [vmem:[%s2 + $0x48] sm:$0xf] %v609
  %738 = vst [vmem:[%s2 + $0x4c] sm:$0xf] %v610
  %739 = vst [vmem:[%s2 + $0x50] sm:$0xf] %v611
  %740 = vst [vmem:[%s2 + $0x54] sm:$0xf] %v612
  %741 = vst [vmem:[%s2 + $0x58] sm:$0xf] %v613
  %742 = vst [vmem:[%s2 + $0x5c] sm:$0xf] %v614
  %743 = vst [vmem:[%s2 + $0x60] sm:$0xf] %v615
  %744 = vst [vmem:[%s2 + $0x64] sm:$0xf] %v616
  %745 = vst [vmem:[%s2 + $0x68] sm:$0xf] %v617
  %746 = vst [vmem:[%s2 + $0x6c] sm:$0xf] %v618
  %747 = vst [vmem:[%s2 + $0x70] sm:$0xf] %v619
  %748 = vst [vmem:[%s2 + $0x74] sm:$0xf] %v620
  %749 = vst [vmem:[%s2 + $0x78] sm:$0xf] %v621
  %750 = vst [vmem:[%s2 + $0x7c] sm:$0xf] %v622
  %751 = vst [vmem:[%s2 + $0x80] sm:$0xf] %v623
  %752 = vst [vmem:[%s2 + $0x84] sm:$0xf] %v624
  %753 = vst [vmem:[%s2 + $0x88] sm:$0xf] %v625
  %754 = vst [vmem:[%s2 + $0x8c] sm:$0xf] %v626
  %755 = vst [vmem:[%s2 + $0x90] sm:$0xf] %v627
  %756 = vst [vmem:[%s2 + $0x94] sm:$0xf] %v628
  %757 = vst [vmem:[%s2 + $0x98] sm:$0xf] %v629
  %758 = vst [vmem:[%s2 + $0x9c] sm:$0xf] %v630
  %759 = vst [vmem:[%s2 + $0xa0] sm:$0xf] %v631
  %760 = vst [vmem:[%s2 + $0xa4] sm:$0xf] %v632
  %761 = vst [vmem:[%s2 + $0xa8] sm:$0xf] %v633
  %762 = vst [vmem:[%s2 + $0xac] sm:$0xf] %v634
  %763 = vst [vmem:[%s2 + $0xb0] sm:$0xf] %v635
  %764 = vst [vmem:[%s2 + $0xb4] sm:$0xf] %v636
  %765 = vst [vmem:[%s2 + $0xb8] sm:$0xf] %v637
  %766 = vst [vmem:[%s2 + $0xbc] sm:$0xf] %v638
  %767 = vst [vmem:[%s2 + $0xc0] sm:$0xf] %v639
  %768 = vst [vmem:[%s2 + $0xc4] sm:$0xf] %v640
  %769 = vst [vmem:[%s2 + $0xc8] sm:$0xf] %v641
  %770 = vst [vmem:[%s2 + $0xcc] sm:$0xf] %v642
  %771 = vst [vmem:[%s2 + $0xd0] sm:$0xf] %v643
  %772 = vst [vmem:[%s2 + $0xd4] sm:$0xf] %v644
  %773 = vst [vmem:[%s2 + $0xd8] sm:$0xf] %v645
  %774 = vst [vmem:[%s2 + $0xdc] sm:$0xf] %v646
  %775 = vst [vmem:[%s2 + $0xe0] sm:$0xf] %v647
  %776 = vst [vmem:[%s2 + $0xe4] sm:$0xf] %v648
  %777 = vst [vmem:[%s2 + $0xe8] sm:$0xf] %v649
  %778 = vst [vmem:[%s2 + $0xec] sm:$0xf] %v650
  %779 = vst [vmem:[%s2 + $0xf0] sm:$0xf] %v651
  %780 = vst [vmem:[%s2 + $0xf4] sm:$0xf] %v652
  %781 = vst [vmem:[%s2 + $0xf8] sm:$0xf] %v653
  %782 = vst [vmem:[%s2 + $0xfc] sm:$0xf] %v654
  %v783 = vadd.f32 %v209, %v212
  %v784 = vadd.f32 %v783, %v217
  %v785 = vadd.f32 %v784, %v220
  %v786 = vadd.f32 %v785, %v225
  %v787 = vadd.f32 %v786, %v228
  %v788 = vadd.f32 %v787, %v233
  %v789 = vadd.f32 %v788, %v236
  %v790 = vadd.f32 %v789, %v241
  %v791 = vadd.f32 %v790, %v244
  %v792 = vadd.f32 %v791, %v249
  %v793 = vadd.f32 %v792, %v252
  %v794 = vadd.f32 %v793, %v257
  %v795 = vadd.f32 %v794, %v260
  %v796 = vadd.f32 %v795, %v265
  %v797 = vadd.f32 %v796, %v268
  %v798 = vadd.f32 %v797, %v273
  %v799 = vadd.f32 %v798, %v276
  %v800 = vadd.f32 %v799, %v281
  %v801 = vadd.f32 %v800, %v284
  %v802 = vadd.f32 %v801, %v289
  %v803 = vadd.f32 %v802, %v292
  %v804 = vadd.f32 %v803, %v297
  %v805 = vadd.f32 %v804, %v300
  %v806 = vadd.f32 %v805, %v305
  %v807 = vadd.f32 %v806, %v308
  %v808 = vadd.f32 %v807, %v313
  %v809 = vadd.f32 %v808, %v316
  %v810 = vadd.f32 %v809, %v321
  %v811 = vadd.f32 %v810, %v324
  %v812 = vadd.f32 %v811, %v329
  %v813 = vadd.f32 %v812, %v332
  %v814 = vadd.f32 %v813, %v337
  %v815 = vadd.f32 %v814, %v340
  %v816 = vadd.f32 %v815, %v345
  %v817 = vadd.f32 %v816, %v348
  %v818 = vadd.f32 %v817, %v353
  %v819 = vadd.f32 %v818, %v356
  %v820 = vadd.f32 %v819, %v361
  %v821 = vadd.f32 %v820, %v364
  %v822 = vadd.f32 %v821, %v369
  %v823 = vadd.f32 %v822, %v372
  %v824 = vadd.f32 %v823, %v377
  %v825 = vadd.f32 %v824, %v380
  %v826 = vadd.f32 %v825, %v385
  %v827 = vadd.f32 %v826, %v388
  %v828 = vadd.f32 %v827, %v393
  %v829 = vadd.f32 %v828, %v396
  %v830 = vadd.f32 %v829, %v401
  %v831 = vadd.f32 %v830, %v404
  %v832 = vadd.f32 %v831, %v409
  %v833 = vadd.f32 %v832, %v412
  %v834 = vadd.f32 %v833, %v417
  %v835 = vadd.f32 %v834, %v420
  %v836 = vadd.f32 %v835, %v425
  %v837 = vadd.f32 %v836, %v428
  %v838 = vadd.f32 %v837, %v433
  %v839 = vadd.f32 %v838, %v436
  %v840 = vadd.f32 %v839, %v441
  %v841 = vadd.f32 %v840, %v444
  %v842 = vadd.f32 %v841, %v449
  %v843 = vadd.f32 %v842, %v452
  %v844 = vadd.f32 %v843, %v457
  %v845 = vadd.f32 %v844, %v460
  %v846 = vrot.slane %v845, 4
  %v847 = vadd.f32 %v845, %v846
  %v848 = vrot.slane %v847, 2
  %v849 = vadd.f32 %v847, %v848
  %v850 = vrot.slane %v849, 1
  %v851 = vadd.f32 %v849, %v850
  %v852 = vmul.f32 %v209, %v209
  %v853 = vmul.f32 %v212, %v212
  %v854 = vmul.f32 %v217, %v217
  %v855 = vmul.f32 %v220, %v220
  %v856 = vmul.f32 %v225, %v225
  %v857 = vmul.f32 %v228, %v228
  %v858 = vmul.f32 %v233, %v233
  %v859 = vmul.f32 %v236, %v236
  %v860 = vmul.f32 %v241, %v241
  %v861 = vmul.f32 %v244, %v244
  %v862 = vmul.f32 %v249, %v249
  %v863 = vmul.f32 %v252, %v252
  %v864 = vmul.f32 %v257, %v257
  %v865 = vmul.f32 %v260, %v260
  %v866 = vmul.f32 %v265, %v265
  %v867 = vmul.f32 %v268, %v268
  %v868 = vmul.f32 %v273, %v273
  %v869 = vmul.f32 %v276, %v276
  %v870 = vmul.f32 %v281, %v281
  %v871 = vmul.f32 %v284, %v284
  %v872 = vmul.f32 %v289, %v289
  %v873 = vmul.f32 %v292, %v292
  %v874 = vmul.f32 %v297, %v297
  %v875 = vmul.f32 %v300, %v300
  %v876 = vmul.f32 %v305, %v305
  %v877 = vmul.f32 %v308, %v308
  %v878 = vmul.f32 %v313, %v313
  %v879 = vmul.f32 %v316, %v316
  %v880 = vmul.f32 %v321, %v321
  %v881 = vmul.f32 %v324, %v324
  %v882 = vmul.f32 %v329, %v329
  %v883 = vmul.f32 %v332, %v332
  %v884 = vmul.f32 %v337, %v337
  %v885 = vmul.f32 %v340, %v340
  %v886 = vmul.f32 %v345, %v345
  %v887 = vmul.f32 %v348, %v348
  %v888 = vmul.f32 %v353, %v353
  %v889 = vmul.f32 %v356, %v356
  %v890 = vmul.f32 %v361, %v361
  %v891 = vmul.f32 %v364, %v364
  %v892 = vmul.f32 %v369, %v369
  %v893 = vmul.f32 %v372, %v372
  %v894 = vmul.f32 %v377, %v377
  %v895 = vmul.f32 %v380, %v380
  %v896 = vmul.f32 %v385, %v385
  %v897 = vmul.f32 %v388, %v388
  %v898 = vmul.f32 %v393, %v393
  %v899 = vmul.f32 %v396, %v396
  %v900 = vmul.f32 %v401, %v401
  %v901 = vmul.f32 %v404, %v404
  %v902 = vmul.f32 %v409, %v409
  %v903 = vmul.f32 %v412, %v412
  %v904 = vmul.f32 %v417, %v417
  %v905 = vmul.f32 %v420, %v420
  %v906 = vmul.f32 %v425, %v425
  %v907 = vmul.f32 %v428, %v428
  %v908 = vmul.f32 %v433, %v433
  %v909 = vmul.f32 %v436, %v436
  %v910 = vmul.f32 %v441, %v441
  %v911 = vmul.f32 %v444, %v444
  %v912 = vmul.f32 %v449, %v449
  %v913 = vmul.f32 %v452, %v452
  %v914 = vmul.f32 %v457, %v457
  %v915 = vmul.f32 %v460, %v460
  %v916 = vadd.f32 %v852, %v853
  %v917 = vadd.f32 %v916, %v854
  %v918 = vadd.f32 %v917, %v855
  %v919 = vadd.f32 %v918, %v856
  %v920 = vadd.f32 %v919, %v857
  %v921 = vadd.f32 %v920, %v858
  %v922 = vadd.f32 %v921, %v859
  %v923 = vadd.f32 %v922, %v860
  %v924 = vadd.f32 %v923, %v861
  %v925 = vadd.f32 %v924, %v862
  %v926 = vadd.f32 %v925, %v863
  %v927 = vadd.f32 %v926, %v864
  %v928 = vadd.f32 %v927, %v865
  %v929 = vadd.f32 %v928, %v866
  %v930 = vadd.f32 %v929, %v867
  %v931 = vadd.f32 %v930, %v868
  %v932 = vadd.f32 %v931, %v869
  %v933 = vadd.f32 %v932, %v870
  %v934 = vadd.f32 %v933, %v871
  %v935 = vadd.f32 %v934, %v872
  %v936 = vadd.f32 %v935, %v873
  %v937 = vadd.f32 %v936, %v874
  %v938 = vadd.f32 %v937, %v875
  %v939 = vadd.f32 %v938, %v876
  %v940 = vadd.f32 %v939, %v877
  %v941 = vadd.f32 %v940, %v878
  %v942 = vadd.f32 %v941, %v879
  %v943 = vadd.f32 %v942, %v880
  %v944 = vadd.f32 %v943, %v881
  %v945 = vadd.f32 %v944, %v882
  %v946 = vadd.f32 %v945, %v883
  %v947 = vadd.f32 %v946, %v884
  %v948 = vadd.f32 %v947, %v885
  %v949 = vadd.f32 %v948, %v886
  %v950 = vadd.f32 %v949, %v887
  %v951 = vadd.f32 %v950, %v888
  %v952 = vadd.f32 %v951, %v889
  %v953 = vadd.f32 %v952, %v890
  %v954 = vadd.f32 %v953, %v891
  %v955 = vadd.f32 %v954, %v892
  %v956 = vadd.f32 %v955, %v893
  %v957 = vadd.f32 %v956, %v894
  %v958 = vadd.f32 %v957, %v895
  %v959 = vadd.f32 %v958, %v896
  %v960 = vadd.f32 %v959, %v897
  %v961 = vadd.f32 %v960, %v898
  %v962 = vadd.f32 %v961, %v899
  %v963 = vadd.f32 %v962, %v900
  %v964 = vadd.f32 %v963, %v901
  %v965 = vadd.f32 %v964, %v902
  %v966 = vadd.f32 %v965, %v903
  %v967 = vadd.f32 %v966, %v904
  %v968 = vadd.f32 %v967, %v905
  %v969 = vadd.f32 %v968, %v906
  %v970 = vadd.f32 %v969, %v907
  %v971 = vadd.f32 %v970, %v908
  %v972 = vadd.f32 %v971, %v909
  %v973 = vadd.f32 %v972, %v910
  %v974 = vadd.f32 %v973, %v911
  %v975 = vadd.f32 %v974, %v912
  %v976 = vadd.f32 %v975, %v913
  %v977 = vadd.f32 %v976, %v914
  %v978 = vadd.f32 %v977, %v915
  %v979 = vrot.slane %v978, 4
  %v980 = vadd.f32 %v978, %v979
  %v981 = vrot.slane %v980, 2
  %v982 = vadd.f32 %v980, %v981
  %v983 = vrot.slane %v982, 1
  %v984 = vadd.f32 %v982, %v983
  %vm985 = vcmask 1040384
  %v986 = vsel %vm985, %v851, %v984
  %987 = vst [vmem:[%s3] sm:$0x3] %v986
  // Predicated region
  $region10: #{bottleneck_forward.4} parent=0 // pred_check
    _
  $region11: #{bottleneck_forward.4} parent=0 // pred_check_branch
    %989 = sbr.rel (0) target = $region13
  $region12: #{bottleneck_forward.4} parent=0 // pred_region
    _
  $region13: #{bottleneck_forward.4} parent=0 // pred_fallthru
    _
  // Predicated region
  $region14: #{bottleneck_forward.4} parent=0 // pred_check
    _
  $region15: #{bottleneck_forward.4} parent=0 // pred_check_branch
    %991 = sbr.rel (0) target = $region17
  $region16: #{bottleneck_forward.4} parent=0 // pred_region
    _
  $region17: #{bottleneck_forward.4} parent=0 // pred_fallthru
    _
  // Predicated region
  $region18: #{bottleneck_forward.4} parent=0 // pred_check
    _
  $region19: #{bottleneck_forward.4} parent=0 // pred_check_branch
    %993 = sbr.rel (0) target = $region21
  $region20: #{bottleneck_forward.4} parent=0 // pred_region
    _
  $region21: #{bottleneck_forward.4} parent=0 // pred_fallthru
    _
  // Predicated region
  $region22: #{bottleneck_forward.4} parent=0 // pred_check
    _
  $region23: #{bottleneck_forward.4} parent=0 // pred_check_branch
    %995 = sbr.rel (0) target = $region25
  $region24: #{bottleneck_forward.4} parent=0 // pred_region
    _
  $region25: #{bottleneck_forward.4} parent=0 // pred_fallthru
    _

// kernel: bottleneck_forward.6
$region0: #{bottleneck_forward.6}
  #allocation0 [shape = 'u32[]', space=smem, size = 0x4, offset = 0x4, fixed_abs, tag = 'smem constant byte address 0x4 - core index']
  #allocation1 [shape = 'u32[144,128]{1,0:T(1,128)}', space=vmem, size = 0x12000, scoped, tag = 'internal scratch']
  %s0 = inlined_call_operand.vmem [shape: bf16[512,128], index: 0, kind: input, shape index: {}]
  %s1 = inlined_call_operand.vmem [shape: f32[1,128], index: 1, kind: input, shape index: {}]
  %s2 = inlined_call_operand.vmem [shape: f32[1,128], index: 2, kind: input, shape index: {}]
  %s3 = inlined_call_operand.vmem [shape: bf16[128,128], index: 3, kind: input, shape index: {}]
  %s4 = inlined_call_operand.vmem [shape: bf16[512,128], index: 4, kind: output, shape index: {0}]
  %s5 = inlined_call_operand.vmem [shape: f32[1,2,128], index: 5, kind: output, shape index: {1}]
  %6 = xla_tuple %s4, %s5
  %s7 = sld [smem:[#allocation0]]
  $region34: #{bottleneck_forward.6} parent=0
    _
  %s9 = ssub.s32 1, %s7
  %s10 = scalar_select 0, %s9, %s7
  // Predicated region
  $region2: #{bottleneck_forward.6} parent=0 // pred_check
    _
  $region3: #{bottleneck_forward.6} parent=0 // pred_check_branch
    %12 = sbr.rel (0) target = $region5
  $region4: #{bottleneck_forward.6} parent=0 // pred_region
    _
  $region5: #{bottleneck_forward.6} parent=0 // pred_fallthru
    _
  // Predicated region
  $region6: #{bottleneck_forward.6} parent=0 // pred_check
    _
  $region7: #{bottleneck_forward.6} parent=0 // pred_check_branch
    %14 = sbr.rel (0) target = $region9
  $region8: #{bottleneck_forward.6} parent=0 // pred_region
    _
  $region9: #{bottleneck_forward.6} parent=0 // pred_fallthru
    _
  // Predicated region
  $region10: #{bottleneck_forward.6} parent=0 // pred_check
    _
  $region11: #{bottleneck_forward.6} parent=0 // pred_check_branch
    %16 = sbr.rel (0) target = $region13
  $region12: #{bottleneck_forward.6} parent=0 // pred_region
    _
  $region13: #{bottleneck_forward.6} parent=0 // pred_fallthru
    _
  // Predicated region
  $region14: #{bottleneck_forward.6} parent=0 // pred_check
    _
  $region15: #{bottleneck_forward.6} parent=0 // pred_check_branch
    %18 = sbr.rel (0) target = $region17
  $region16: #{bottleneck_forward.6} parent=0 // pred_region
    _
  $region17: #{bottleneck_forward.6} parent=0 // pred_fallthru
    _
  %v20 = vld [vmem:[%s0] sm:$0xf]
  %v21 = vld [vmem:[%s0 + $0x4] sm:$0xf]
  %v22 = vld [vmem:[%s0 + $0x8] sm:$0xf]
  %v23 = vld [vmem:[%s0 + $0xc] sm:$0xf]
  %v24 = vld [vmem:[%s0 + $0x10] sm:$0xf]
  %v25 = vld [vmem:[%s0 + $0x14] sm:$0xf]
  %v26 = vld [vmem:[%s0 + $0x18] sm:$0xf]
  %v27 = vld [vmem:[%s0 + $0x1c] sm:$0xf]
  %v28 = vld [vmem:[%s0 + $0x20] sm:$0xf]
  %v29 = vld [vmem:[%s0 + $0x24] sm:$0xf]
  %v30 = vld [vmem:[%s0 + $0x28] sm:$0xf]
  %v31 = vld [vmem:[%s0 + $0x2c] sm:$0xf]
  %v32 = vld [vmem:[%s0 + $0x30] sm:$0xf]
  %v33 = vld [vmem:[%s0 + $0x34] sm:$0xf]
  %v34 = vld [vmem:[%s0 + $0x38] sm:$0xf]
  %v35 = vld [vmem:[%s0 + $0x3c] sm:$0xf]
  %v36 = vld [vmem:[%s0 + $0x40] sm:$0xf]
  %v37 = vld [vmem:[%s0 + $0x44] sm:$0xf]
  %v38 = vld [vmem:[%s0 + $0x48] sm:$0xf]
  %v39 = vld [vmem:[%s0 + $0x4c] sm:$0xf]
  %v40 = vld [vmem:[%s0 + $0x50] sm:$0xf]
  %v41 = vld [vmem:[%s0 + $0x54] sm:$0xf]
  %v42 = vld [vmem:[%s0 + $0x58] sm:$0xf]
  %v43 = vld [vmem:[%s0 + $0x5c] sm:$0xf]
  %v44 = vld [vmem:[%s0 + $0x60] sm:$0xf]
  %v45 = vld [vmem:[%s0 + $0x64] sm:$0xf]
  %v46 = vld [vmem:[%s0 + $0x68] sm:$0xf]
  %v47 = vld [vmem:[%s0 + $0x6c] sm:$0xf]
  %v48 = vld [vmem:[%s0 + $0x70] sm:$0xf]
  %v49 = vld [vmem:[%s0 + $0x74] sm:$0xf]
  %v50 = vld [vmem:[%s0 + $0x78] sm:$0xf]
  %v51 = vld [vmem:[%s0 + $0x7c] sm:$0xf]
  %v52 = vld [vmem:[%s0 + $0x80] sm:$0xf]
  %v53 = vld [vmem:[%s0 + $0x84] sm:$0xf]
  %v54 = vld [vmem:[%s0 + $0x88] sm:$0xf]
  %v55 = vld [vmem:[%s0 + $0x8c] sm:$0xf]
  %v56 = vld [vmem:[%s0 + $0x90] sm:$0xf]
  %v57 = vld [vmem:[%s0 + $0x94] sm:$0xf]
  %v58 = vld [vmem:[%s0 + $0x98] sm:$0xf]
  %v59 = vld [vmem:[%s0 + $0x9c] sm:$0xf]
  %v60 = vld [vmem:[%s0 + $0xa0] sm:$0xf]
  %v61 = vld [vmem:[%s0 + $0xa4] sm:$0xf]
  %v62 = vld [vmem:[%s0 + $0xa8] sm:$0xf]
  %v63 = vld [vmem:[%s0 + $0xac] sm:$0xf]
  %v64 = vld [vmem:[%s0 + $0xb0] sm:$0xf]
  %v65 = vld [vmem:[%s0 + $0xb4] sm:$0xf]
  %v66 = vld [vmem:[%s0 + $0xb8] sm:$0xf]
  %v67 = vld [vmem:[%s0 + $0xbc] sm:$0xf]
  %v68 = vld [vmem:[%s0 + $0xc0] sm:$0xf]
  %v69 = vld [vmem:[%s0 + $0xc4] sm:$0xf]
  %v70 = vld [vmem:[%s0 + $0xc8] sm:$0xf]
  %v71 = vld [vmem:[%s0 + $0xcc] sm:$0xf]
  %v72 = vld [vmem:[%s0 + $0xd0] sm:$0xf]
  %v73 = vld [vmem:[%s0 + $0xd4] sm:$0xf]
  %v74 = vld [vmem:[%s0 + $0xd8] sm:$0xf]
  %v75 = vld [vmem:[%s0 + $0xdc] sm:$0xf]
  %v76 = vld [vmem:[%s0 + $0xe0] sm:$0xf]
  %v77 = vld [vmem:[%s0 + $0xe4] sm:$0xf]
  %v78 = vld [vmem:[%s0 + $0xe8] sm:$0xf]
  %v79 = vld [vmem:[%s0 + $0xec] sm:$0xf]
  %v80 = vld [vmem:[%s0 + $0xf0] sm:$0xf]
  %v81 = vld [vmem:[%s0 + $0xf4] sm:$0xf]
  %v82 = vld [vmem:[%s0 + $0xf8] sm:$0xf]
  %v83 = vld [vmem:[%s0 + $0xfc] sm:$0xf]
  %v84 = vunpack.c.l.bf16 %v20
  %v85 = vunpack.c.l.bf16 %v21
  %v86 = vunpack.c.l.bf16 %v22
  %v87 = vunpack.c.l.bf16 %v23
  %v88 = vunpack.c.l.bf16 %v24
  %v89 = vunpack.c.l.bf16 %v25
  %v90 = vunpack.c.l.bf16 %v26
  %v91 = vunpack.c.l.bf16 %v27
  %v92 = vunpack.c.l.bf16 %v28
  %v93 = vunpack.c.l.bf16 %v29
  %v94 = vunpack.c.l.bf16 %v30
  %v95 = vunpack.c.l.bf16 %v31
  %v96 = vunpack.c.l.bf16 %v32
  %v97 = vunpack.c.l.bf16 %v33
  %v98 = vunpack.c.l.bf16 %v34
  %v99 = vunpack.c.l.bf16 %v35
  %v100 = vunpack.c.l.bf16 %v36
  %v101 = vunpack.c.l.bf16 %v37
  %v102 = vunpack.c.l.bf16 %v38
  %v103 = vunpack.c.l.bf16 %v39
  %v104 = vunpack.c.l.bf16 %v40
  %v105 = vunpack.c.l.bf16 %v41
  %v106 = vunpack.c.l.bf16 %v42
  %v107 = vunpack.c.l.bf16 %v43
  %v108 = vunpack.c.l.bf16 %v44
  %v109 = vunpack.c.l.bf16 %v45
  %v110 = vunpack.c.l.bf16 %v46
  %v111 = vunpack.c.l.bf16 %v47
  %v112 = vunpack.c.l.bf16 %v48
  %v113 = vunpack.c.l.bf16 %v49
  %v114 = vunpack.c.l.bf16 %v50
  %v115 = vunpack.c.l.bf16 %v51
  %v116 = vunpack.c.l.bf16 %v52
  %v117 = vunpack.c.l.bf16 %v53
  %v118 = vunpack.c.l.bf16 %v54
  %v119 = vunpack.c.l.bf16 %v55
  %v120 = vunpack.c.l.bf16 %v56
  %v121 = vunpack.c.l.bf16 %v57
  %v122 = vunpack.c.l.bf16 %v58
  %v123 = vunpack.c.l.bf16 %v59
  %v124 = vunpack.c.l.bf16 %v60
  %v125 = vunpack.c.l.bf16 %v61
  %v126 = vunpack.c.l.bf16 %v62
  %v127 = vunpack.c.l.bf16 %v63
  %v128 = vunpack.c.l.bf16 %v64
  %v129 = vunpack.c.l.bf16 %v65
  %v130 = vunpack.c.l.bf16 %v66
  %v131 = vunpack.c.l.bf16 %v67
  %v132 = vunpack.c.l.bf16 %v68
  %v133 = vunpack.c.l.bf16 %v69
  %v134 = vunpack.c.l.bf16 %v70
  %v135 = vunpack.c.l.bf16 %v71
  %v136 = vunpack.c.l.bf16 %v72
  %v137 = vunpack.c.l.bf16 %v73
  %v138 = vunpack.c.l.bf16 %v74
  %v139 = vunpack.c.l.bf16 %v75
  %v140 = vunpack.c.l.bf16 %v76
  %v141 = vunpack.c.l.bf16 %v77
  %v142 = vunpack.c.l.bf16 %v78
  %v143 = vunpack.c.l.bf16 %v79
  %v144 = vunpack.c.l.bf16 %v80
  %v145 = vunpack.c.l.bf16 %v81
  %v146 = vunpack.c.l.bf16 %v82
  %v147 = vunpack.c.l.bf16 %v83
  %v148 = vld [vmem:[%s1] sm:$0x1]
  %v150 = vlaneseq
  %v151 = vshrl.u32 %v150, 7
  %v152 = vsub.s32 0, %v151
  %v153 = vrot.slane %v148, %v152
  %v155 = vmul.f32 %v84, %v153
  %v156 = vmul.f32 %v85, %v153
  %v157 = vmul.f32 %v86, %v153
  %v158 = vmul.f32 %v87, %v153
  %v159 = vmul.f32 %v88, %v153
  %v160 = vmul.f32 %v89, %v153
  %v161 = vmul.f32 %v90, %v153
  %v162 = vmul.f32 %v91, %v153
  %v163 = vmul.f32 %v92, %v153
  %v164 = vmul.f32 %v93, %v153
  %v165 = vmul.f32 %v94, %v153
  %v166 = vmul.f32 %v95, %v153
  %v167 = vmul.f32 %v96, %v153
  %v168 = vmul.f32 %v97, %v153
  %v169 = vmul.f32 %v98, %v153
  %v170 = vmul.f32 %v99, %v153
  %v171 = vmul.f32 %v100, %v153
  %v172 = vmul.f32 %v101, %v153
  %v173 = vmul.f32 %v102, %v153
  %v174 = vmul.f32 %v103, %v153
  %v175 = vmul.f32 %v104, %v153
  %v176 = vmul.f32 %v105, %v153
  %v177 = vmul.f32 %v106, %v153
  %v178 = vmul.f32 %v107, %v153
  %v179 = vmul.f32 %v108, %v153
  %v180 = vmul.f32 %v109, %v153
  %v181 = vmul.f32 %v110, %v153
  %v182 = vmul.f32 %v111, %v153
  %v183 = vmul.f32 %v112, %v153
  %v184 = vmul.f32 %v113, %v153
  %v185 = vmul.f32 %v114, %v153
  %v186 = vmul.f32 %v115, %v153
  %v187 = vmul.f32 %v116, %v153
  %v188 = vmul.f32 %v117, %v153
  %v189 = vmul.f32 %v118, %v153
  %v190 = vmul.f32 %v119, %v153
  %v191 = vmul.f32 %v120, %v153
  %v192 = vmul.f32 %v121, %v153
  %v193 = vmul.f32 %v122, %v153
  %v194 = vmul.f32 %v123, %v153
  %v195 = vmul.f32 %v124, %v153
  %v196 = vmul.f32 %v125, %v153
  %v197 = vmul.f32 %v126, %v153
  %v198 = vmul.f32 %v127, %v153
  %v199 = vmul.f32 %v128, %v153
  %v200 = vmul.f32 %v129, %v153
  %v201 = vmul.f32 %v130, %v153
  %v202 = vmul.f32 %v131, %v153
  %v203 = vmul.f32 %v132, %v153
  %v204 = vmul.f32 %v133, %v153
  %v205 = vmul.f32 %v134, %v153
  %v206 = vmul.f32 %v135, %v153
  %v207 = vmul.f32 %v136, %v153
  %v208 = vmul.f32 %v137, %v153
  %v209 = vmul.f32 %v138, %v153
  %v210 = vmul.f32 %v139, %v153
  %v211 = vmul.f32 %v140, %v153
  %v212 = vmul.f32 %v141, %v153
  %v213 = vmul.f32 %v142, %v153
  %v214 = vmul.f32 %v143, %v153
  %v215 = vmul.f32 %v144, %v153
  %v216 = vmul.f32 %v145, %v153
  %v217 = vmul.f32 %v146, %v153
  %v218 = vmul.f32 %v147, %v153
  %v219 = vld [vmem:[%s2] sm:$0x1]
  %v221 = vlaneseq
  %v222 = vshrl.u32 %v221, 7
  %v223 = vsub.s32 0, %v222
  %v224 = vrot.slane %v219, %v223
  %v226 = vadd.f32 %v155, %v224
  %v227 = vadd.f32 %v156, %v224
  %v228 = vadd.f32 %v157, %v224
  %v229 = vadd.f32 %v158, %v224
  %v230 = vadd.f32 %v159, %v224
  %v231 = vadd.f32 %v160, %v224
  %v232 = vadd.f32 %v161, %v224
  %v233 = vadd.f32 %v162, %v224
  %v234 = vadd.f32 %v163, %v224
  %v235 = vadd.f32 %v164, %v224
  %v236 = vadd.f32 %v165, %v224
  %v237 = vadd.f32 %v166, %v224
  %v238 = vadd.f32 %v167, %v224
  %v239 = vadd.f32 %v168, %v224
  %v240 = vadd.f32 %v169, %v224
  %v241 = vadd.f32 %v170, %v224
  %v242 = vadd.f32 %v171, %v224
  %v243 = vadd.f32 %v172, %v224
  %v244 = vadd.f32 %v173, %v224
  %v245 = vadd.f32 %v174, %v224
  %v246 = vadd.f32 %v175, %v224
  %v247 = vadd.f32 %v176, %v224
  %v248 = vadd.f32 %v177, %v224
  %v249 = vadd.f32 %v178, %v224
  %v250 = vadd.f32 %v179, %v224
  %v251 = vadd.f32 %v180, %v224
  %v252 = vadd.f32 %v181, %v224
  %v253 = vadd.f32 %v182, %v224
  %v254 = vadd.f32 %v183, %v224
  %v255 = vadd.f32 %v184, %v224
  %v256 = vadd.f32 %v185, %v224
  %v257 = vadd.f32 %v186, %v224
  %v258 = vadd.f32 %v187, %v224
  %v259 = vadd.f32 %v188, %v224
  %v260 = vadd.f32 %v189, %v224
  %v261 = vadd.f32 %v190, %v224
  %v262 = vadd.f32 %v191, %v224
  %v263 = vadd.f32 %v192, %v224
  %v264 = vadd.f32 %v193, %v224
  %v265 = vadd.f32 %v194, %v224
  %v266 = vadd.f32 %v195, %v224
  %v267 = vadd.f32 %v196, %v224
  %v268 = vadd.f32 %v197, %v224
  %v269 = vadd.f32 %v198, %v224
  %v270 = vadd.f32 %v199, %v224
  %v271 = vadd.f32 %v200, %v224
  %v272 = vadd.f32 %v201, %v224
  %v273 = vadd.f32 %v202, %v224
  %v274 = vadd.f32 %v203, %v224
  %v275 = vadd.f32 %v204, %v224
  %v276 = vadd.f32 %v205, %v224
  %v277 = vadd.f32 %v206, %v224
  %v278 = vadd.f32 %v207, %v224
  %v279 = vadd.f32 %v208, %v224
  %v280 = vadd.f32 %v209, %v224
  %v281 = vadd.f32 %v210, %v224
  %v282 = vadd.f32 %v211, %v224
  %v283 = vadd.f32 %v212, %v224
  %v284 = vadd.f32 %v213, %v224
  %v285 = vadd.f32 %v214, %v224
  %v286 = vadd.f32 %v215, %v224
  %v287 = vadd.f32 %v216, %v224
  %v288 = vadd.f32 %v217, %v224
  %v289 = vadd.f32 %v218, %v224
  %v290 = vmax.f32 %v226, 0.0
  %v291 = vmax.f32 %v227, 0.0
  %v292 = vmax.f32 %v228, 0.0
  %v293 = vmax.f32 %v229, 0.0
  %v294 = vmax.f32 %v230, 0.0
  %v295 = vmax.f32 %v231, 0.0
  %v296 = vmax.f32 %v232, 0.0
  %v297 = vmax.f32 %v233, 0.0
  %v298 = vmax.f32 %v234, 0.0
  %v299 = vmax.f32 %v235, 0.0
  %v300 = vmax.f32 %v236, 0.0
  %v301 = vmax.f32 %v237, 0.0
  %v302 = vmax.f32 %v238, 0.0
  %v303 = vmax.f32 %v239, 0.0
  %v304 = vmax.f32 %v240, 0.0
  %v305 = vmax.f32 %v241, 0.0
  %v306 = vmax.f32 %v242, 0.0
  %v307 = vmax.f32 %v243, 0.0
  %v308 = vmax.f32 %v244, 0.0
  %v309 = vmax.f32 %v245, 0.0
  %v310 = vmax.f32 %v246, 0.0
  %v311 = vmax.f32 %v247, 0.0
  %v312 = vmax.f32 %v248, 0.0
  %v313 = vmax.f32 %v249, 0.0
  %v314 = vmax.f32 %v250, 0.0
  %v315 = vmax.f32 %v251, 0.0
  %v316 = vmax.f32 %v252, 0.0
  %v317 = vmax.f32 %v253, 0.0
  %v318 = vmax.f32 %v254, 0.0
  %v319 = vmax.f32 %v255, 0.0
  %v320 = vmax.f32 %v256, 0.0
  %v321 = vmax.f32 %v257, 0.0
  %v322 = vmax.f32 %v258, 0.0
  %v323 = vmax.f32 %v259, 0.0
  %v324 = vmax.f32 %v260, 0.0
  %v325 = vmax.f32 %v261, 0.0
  %v326 = vmax.f32 %v262, 0.0
  %v327 = vmax.f32 %v263, 0.0
  %v328 = vmax.f32 %v264, 0.0
  %v329 = vmax.f32 %v265, 0.0
  %v330 = vmax.f32 %v266, 0.0
  %v331 = vmax.f32 %v267, 0.0
  %v332 = vmax.f32 %v268, 0.0
  %v333 = vmax.f32 %v269, 0.0
  %v334 = vmax.f32 %v270, 0.0
  %v335 = vmax.f32 %v271, 0.0
  %v336 = vmax.f32 %v272, 0.0
  %v337 = vmax.f32 %v273, 0.0
  %v338 = vmax.f32 %v274, 0.0
  %v339 = vmax.f32 %v275, 0.0
  %v340 = vmax.f32 %v276, 0.0
  %v341 = vmax.f32 %v277, 0.0
  %v342 = vmax.f32 %v278, 0.0
  %v343 = vmax.f32 %v279, 0.0
  %v344 = vmax.f32 %v280, 0.0
  %v345 = vmax.f32 %v281, 0.0
  %v346 = vmax.f32 %v282, 0.0
  %v347 = vmax.f32 %v283, 0.0
  %v348 = vmax.f32 %v284, 0.0
  %v349 = vmax.f32 %v285, 0.0
  %v350 = vmax.f32 %v286, 0.0
  %v351 = vmax.f32 %v287, 0.0
  %v352 = vmax.f32 %v288, 0.0
  %v353 = vmax.f32 %v289, 0.0
  %v354 = vpack.c.bf16 %v291, %v290
  %v355 = vpack.c.bf16 %v293, %v292
  %v356 = vpack.c.bf16 %v295, %v294
  %v357 = vpack.c.bf16 %v297, %v296
  %v358 = vpack.c.bf16 %v299, %v298
  %v359 = vpack.c.bf16 %v301, %v300
  %v360 = vpack.c.bf16 %v303, %v302
  %v361 = vpack.c.bf16 %v305, %v304
  %v362 = vpack.c.bf16 %v307, %v306
  %v363 = vpack.c.bf16 %v309, %v308
  %v364 = vpack.c.bf16 %v311, %v310
  %v365 = vpack.c.bf16 %v313, %v312
  %v366 = vpack.c.bf16 %v315, %v314
  %v367 = vpack.c.bf16 %v317, %v316
  %v368 = vpack.c.bf16 %v319, %v318
  %v369 = vpack.c.bf16 %v321, %v320
  %v370 = vpack.c.bf16 %v323, %v322
  %v371 = vpack.c.bf16 %v325, %v324
  %v372 = vpack.c.bf16 %v327, %v326
  %v373 = vpack.c.bf16 %v329, %v328
  %v374 = vpack.c.bf16 %v331, %v330
  %v375 = vpack.c.bf16 %v333, %v332
  %v376 = vpack.c.bf16 %v335, %v334
  %v377 = vpack.c.bf16 %v337, %v336
  %v378 = vpack.c.bf16 %v339, %v338
  %v379 = vpack.c.bf16 %v341, %v340
  %v380 = vpack.c.bf16 %v343, %v342
  %v381 = vpack.c.bf16 %v345, %v344
  %v382 = vpack.c.bf16 %v347, %v346
  %v383 = vpack.c.bf16 %v349, %v348
  %v384 = vpack.c.bf16 %v351, %v350
  %v385 = vpack.c.bf16 %v353, %v352
  %v386 = vld [vmem:[%s3] sm:$0xf]
  %v387 = vld [vmem:[%s3 + $0x4] sm:$0xf]
  %v388 = vld [vmem:[%s3 + $0x8] sm:$0xf]
  %v389 = vld [vmem:[%s3 + $0xc] sm:$0xf]
  %v390 = vld [vmem:[%s3 + $0x10] sm:$0xf]
  %v391 = vld [vmem:[%s3 + $0x14] sm:$0xf]
  %v392 = vld [vmem:[%s3 + $0x18] sm:$0xf]
  %v393 = vld [vmem:[%s3 + $0x1c] sm:$0xf]
  %v394 = vld [vmem:[%s3 + $0x20] sm:$0xf]
  %v395 = vld [vmem:[%s3 + $0x24] sm:$0xf]
  %v396 = vld [vmem:[%s3 + $0x28] sm:$0xf]
  %v397 = vld [vmem:[%s3 + $0x2c] sm:$0xf]
  %v398 = vld [vmem:[%s3 + $0x30] sm:$0xf]
  %v399 = vld [vmem:[%s3 + $0x34] sm:$0xf]
  %v400 = vld [vmem:[%s3 + $0x38] sm:$0xf]
  %v401 = vld [vmem:[%s3 + $0x3c] sm:$0xf]
  %v418 = vunpack.c.l.b16 %v386
  %v419 = vunpack.c.l.b16 %v387
  %v420 = vunpack.c.l.b16 %v388
  %v421 = vunpack.c.l.b16 %v389
  %v422 = vunpack.c.l.b16 %v390
  %v423 = vunpack.c.l.b16 %v391
  %v424 = vunpack.c.l.b16 %v392
  %v425 = vunpack.c.l.b16 %v393
  %v426 = vunpack.c.l.b16 %v394
  %v427 = vunpack.c.l.b16 %v395
  %v428 = vunpack.c.l.b16 %v396
  %v429 = vunpack.c.l.b16 %v397
  %v430 = vunpack.c.l.b16 %v398
  %v431 = vunpack.c.l.b16 %v399
  %v432 = vunpack.c.l.b16 %v400
  %v433 = vunpack.c.l.b16 %v401
  %v434 = vpack.c.b16 %v419, %v418
  %v435 = vpack.c.b16 %v421, %v420
  %v436 = vpack.c.b16 %v423, %v422
  %v437 = vpack.c.b16 %v425, %v424
  %v438 = vpack.c.b16 %v427, %v426
  %v439 = vpack.c.b16 %v429, %v428
  %v440 = vpack.c.b16 %v431, %v430
  %v441 = vpack.c.b16 %v433, %v432
  %450 = vmatprep.subr.bf16.mxu0 0
  %451 = vmatpush1.bf16.msra.mxu0 %v441
  %452 = vmatprep.subr.bf16.mxu0 0
  %453 = vmatpush1.bf16.msra.mxu0 %v440
  %454 = vmatprep.subr.bf16.mxu0 0
  %455 = vmatpush1.bf16.msra.mxu0 %v439
  %456 = vmatprep.subr.bf16.mxu0 0
  %457 = vmatpush1.bf16.msra.mxu0 %v438
  %458 = vmatprep.subr.bf16.mxu0 0
  %459 = vmatpush1.bf16.msra.mxu0 %v437
  %460 = vmatprep.subr.bf16.mxu0 0
  %461 = vmatpush1.bf16.msra.mxu0 %v436
  %462 = vmatprep.subr.bf16.mxu0 0
  %463 = vmatpush1.bf16.msra.mxu0 %v435
  %464 = vmatprep.subr.bf16.mxu0 0
  %465 = vmatpush1.bf16.msra.mxu0 %v434
  %466 = vmatprep.subr.bf16.mxu0 0
  %467 = vmatpush2.bf16.msra.mxu0 0
  %468 = vmatprep.subr.bf16.mxu0 0
  %469 = vmatpush2.bf16.msra.mxu0 0
  %470 = vmatprep.subr.bf16.mxu0 0
  %471 = vmatpush2.bf16.msra.mxu0 0
  %472 = vmatprep.subr.bf16.mxu0 0
  %473 = vmatpush2.bf16.msra.mxu0 0
  %474 = vmatprep.subr.bf16.mxu0 0
  %475 = vmatpush2.bf16.msra.mxu0 0
  %476 = vmatprep.subr.bf16.mxu0 0
  %477 = vmatpush2.bf16.msra.mxu0 0
  %478 = vmatprep.subr.bf16.mxu0 0
  %479 = vmatpush2.bf16.msra.mxu0 0
  %480 = vmatprep.subr.bf16.mxu0 0
  %481 = vmatpush2.bf16.msra.mxu0 0
  %482 = vmatprep.mubr.bf16.mxu0 0
  %483 = vmatmul.mubr.bf16.gmra.mxu0 %v354
  %v484 = vpop.f32.mrf.mxu0
  %v485 = vadd.f32 0.0, %v484
  %v486 = vpop.f32.mrf.mxu0
  %v487 = vpop.f32.mrf.mxu0
  %v488 = vadd.f32 0.0, %v487
  %v489 = vpop.f32.mrf.mxu0
  %490 = vmatprep.mubr.bf16.mxu0 0
  %491 = vmatmul.mubr.bf16.gmra.mxu0 %v355
  %v492 = vpop.f32.mrf.mxu0
  %v493 = vadd.f32 0.0, %v492
  %v494 = vpop.f32.mrf.mxu0
  %v495 = vpop.f32.mrf.mxu0
  %v496 = vadd.f32 0.0, %v495
  %v497 = vpop.f32.mrf.mxu0
  %498 = vmatprep.mubr.bf16.mxu0 0
  %499 = vmatmul.mubr.bf16.gmra.mxu0 %v356
  %v500 = vpop.f32.mrf.mxu0
  %v501 = vadd.f32 0.0, %v500
  %v502 = vpop.f32.mrf.mxu0
  %v503 = vpop.f32.mrf.mxu0
  %v504 = vadd.f32 0.0, %v503
  %v505 = vpop.f32.mrf.mxu0
  %506 = vmatprep.mubr.bf16.mxu0 0
  %507 = vmatmul.mubr.bf16.gmra.mxu0 %v357
  %v508 = vpop.f32.mrf.mxu0
  %v509 = vadd.f32 0.0, %v508
  %v510 = vpop.f32.mrf.mxu0
  %v511 = vpop.f32.mrf.mxu0
  %v512 = vadd.f32 0.0, %v511
  %v513 = vpop.f32.mrf.mxu0
  %514 = vmatprep.mubr.bf16.mxu0 0
  %515 = vmatmul.mubr.bf16.gmra.mxu0 %v358
  %v516 = vpop.f32.mrf.mxu0
  %v517 = vadd.f32 0.0, %v516
  %v518 = vpop.f32.mrf.mxu0
  %v519 = vpop.f32.mrf.mxu0
  %v520 = vadd.f32 0.0, %v519
  %v521 = vpop.f32.mrf.mxu0
  %522 = vmatprep.mubr.bf16.mxu0 0
  %523 = vmatmul.mubr.bf16.gmra.mxu0 %v359
  %v524 = vpop.f32.mrf.mxu0
  %v525 = vadd.f32 0.0, %v524
  %v526 = vpop.f32.mrf.mxu0
  %v527 = vpop.f32.mrf.mxu0
  %v528 = vadd.f32 0.0, %v527
  %v529 = vpop.f32.mrf.mxu0
  %530 = vmatprep.mubr.bf16.mxu0 0
  %531 = vmatmul.mubr.bf16.gmra.mxu0 %v360
  %v532 = vpop.f32.mrf.mxu0
  %v533 = vadd.f32 0.0, %v532
  %v534 = vpop.f32.mrf.mxu0
  %v535 = vpop.f32.mrf.mxu0
  %v536 = vadd.f32 0.0, %v535
  %v537 = vpop.f32.mrf.mxu0
  %538 = vmatprep.mubr.bf16.mxu0 0
  %539 = vmatmul.mubr.bf16.gmra.mxu0 %v361
  %v540 = vpop.f32.mrf.mxu0
  %v541 = vadd.f32 0.0, %v540
  %v542 = vpop.f32.mrf.mxu0
  %v543 = vpop.f32.mrf.mxu0
  %v544 = vadd.f32 0.0, %v543
  %v545 = vpop.f32.mrf.mxu0
  %546 = vmatprep.mubr.bf16.mxu0 0
  %547 = vmatmul.mubr.bf16.gmra.mxu0 %v362
  %v548 = vpop.f32.mrf.mxu0
  %v549 = vadd.f32 0.0, %v548
  %v550 = vpop.f32.mrf.mxu0
  %v551 = vpop.f32.mrf.mxu0
  %v552 = vadd.f32 0.0, %v551
  %v553 = vpop.f32.mrf.mxu0
  %554 = vmatprep.mubr.bf16.mxu0 0
  %555 = vmatmul.mubr.bf16.gmra.mxu0 %v363
  %v556 = vpop.f32.mrf.mxu0
  %v557 = vadd.f32 0.0, %v556
  %v558 = vpop.f32.mrf.mxu0
  %v559 = vpop.f32.mrf.mxu0
  %v560 = vadd.f32 0.0, %v559
  %v561 = vpop.f32.mrf.mxu0
  %562 = vmatprep.mubr.bf16.mxu0 0
  %563 = vmatmul.mubr.bf16.gmra.mxu0 %v364
  %v564 = vpop.f32.mrf.mxu0
  %v565 = vadd.f32 0.0, %v564
  %v566 = vpop.f32.mrf.mxu0
  %v567 = vpop.f32.mrf.mxu0
  %v568 = vadd.f32 0.0, %v567
  %v569 = vpop.f32.mrf.mxu0
  %570 = vmatprep.mubr.bf16.mxu0 0
  %571 = vmatmul.mubr.bf16.gmra.mxu0 %v365
  %v572 = vpop.f32.mrf.mxu0
  %v573 = vadd.f32 0.0, %v572
  %v574 = vpop.f32.mrf.mxu0
  %v575 = vpop.f32.mrf.mxu0
  %v576 = vadd.f32 0.0, %v575
  %v577 = vpop.f32.mrf.mxu0
  %578 = vmatprep.mubr.bf16.mxu0 0
  %579 = vmatmul.mubr.bf16.gmra.mxu0 %v366
  %v580 = vpop.f32.mrf.mxu0
  %v581 = vadd.f32 0.0, %v580
  %v582 = vpop.f32.mrf.mxu0
  %v583 = vpop.f32.mrf.mxu0
  %v584 = vadd.f32 0.0, %v583
  %v585 = vpop.f32.mrf.mxu0
  %586 = vmatprep.mubr.bf16.mxu0 0
  %587 = vmatmul.mubr.bf16.gmra.mxu0 %v367
  %v588 = vpop.f32.mrf.mxu0
  %v589 = vadd.f32 0.0, %v588
  %v590 = vpop.f32.mrf.mxu0
  %v591 = vpop.f32.mrf.mxu0
  %v592 = vadd.f32 0.0, %v591
  %v593 = vpop.f32.mrf.mxu0
  %594 = vmatprep.mubr.bf16.mxu0 0
  %595 = vmatmul.mubr.bf16.gmra.mxu0 %v368
  %v596 = vpop.f32.mrf.mxu0
  %v597 = vadd.f32 0.0, %v596
  %v598 = vpop.f32.mrf.mxu0
  %v599 = vpop.f32.mrf.mxu0
  %v600 = vadd.f32 0.0, %v599
  %v601 = vpop.f32.mrf.mxu0
  %602 = vmatprep.mubr.bf16.mxu0 0
  %603 = vmatmul.mubr.bf16.gmra.mxu0 %v369
  %v604 = vpop.f32.mrf.mxu0
  %v605 = vadd.f32 0.0, %v604
  %v606 = vpop.f32.mrf.mxu0
  %v607 = vpop.f32.mrf.mxu0
  %v608 = vadd.f32 0.0, %v607
  %v609 = vpop.f32.mrf.mxu0
  %610 = vmatprep.mubr.bf16.mxu0 0
  %611 = vmatmul.mubr.bf16.gmra.mxu0 %v370
  %v612 = vpop.f32.mrf.mxu0
  %v613 = vadd.f32 0.0, %v612
  %v614 = vpop.f32.mrf.mxu0
  %v615 = vpop.f32.mrf.mxu0
  %v616 = vadd.f32 0.0, %v615
  %v617 = vpop.f32.mrf.mxu0
  %618 = vmatprep.mubr.bf16.mxu0 0
  %619 = vmatmul.mubr.bf16.gmra.mxu0 %v371
  %v620 = vpop.f32.mrf.mxu0
  %v621 = vadd.f32 0.0, %v620
  %v622 = vpop.f32.mrf.mxu0
  %v623 = vpop.f32.mrf.mxu0
  %v624 = vadd.f32 0.0, %v623
  %v625 = vpop.f32.mrf.mxu0
  %626 = vmatprep.mubr.bf16.mxu0 0
  %627 = vmatmul.mubr.bf16.gmra.mxu0 %v372
  %v628 = vpop.f32.mrf.mxu0
  %v629 = vadd.f32 0.0, %v628
  %v630 = vpop.f32.mrf.mxu0
  %v631 = vpop.f32.mrf.mxu0
  %v632 = vadd.f32 0.0, %v631
  %v633 = vpop.f32.mrf.mxu0
  %634 = vmatprep.mubr.bf16.mxu0 0
  %635 = vmatmul.mubr.bf16.gmra.mxu0 %v373
  %v636 = vpop.f32.mrf.mxu0
  %v637 = vadd.f32 0.0, %v636
  %v638 = vpop.f32.mrf.mxu0
  %v639 = vpop.f32.mrf.mxu0
  %v640 = vadd.f32 0.0, %v639
  %v641 = vpop.f32.mrf.mxu0
  %642 = vmatprep.mubr.bf16.mxu0 0
  %643 = vmatmul.mubr.bf16.gmra.mxu0 %v374
  %v644 = vpop.f32.mrf.mxu0
  %v645 = vadd.f32 0.0, %v644
  %v646 = vpop.f32.mrf.mxu0
  %v647 = vpop.f32.mrf.mxu0
  %v648 = vadd.f32 0.0, %v647
  %v649 = vpop.f32.mrf.mxu0
  %650 = vmatprep.mubr.bf16.mxu0 0
  %651 = vmatmul.mubr.bf16.gmra.mxu0 %v375
  %v652 = vpop.f32.mrf.mxu0
  %v653 = vadd.f32 0.0, %v652
  %v654 = vpop.f32.mrf.mxu0
  %v655 = vpop.f32.mrf.mxu0
  %v656 = vadd.f32 0.0, %v655
  %v657 = vpop.f32.mrf.mxu0
  %658 = vmatprep.mubr.bf16.mxu0 0
  %659 = vmatmul.mubr.bf16.gmra.mxu0 %v376
  %v660 = vpop.f32.mrf.mxu0
  %v661 = vadd.f32 0.0, %v660
  %v662 = vpop.f32.mrf.mxu0
  %v663 = vpop.f32.mrf.mxu0
  %v664 = vadd.f32 0.0, %v663
  %v665 = vpop.f32.mrf.mxu0
  %666 = vmatprep.mubr.bf16.mxu0 0
  %667 = vmatmul.mubr.bf16.gmra.mxu0 %v377
  %v668 = vpop.f32.mrf.mxu0
  %v669 = vadd.f32 0.0, %v668
  %v670 = vpop.f32.mrf.mxu0
  %v671 = vpop.f32.mrf.mxu0
  %v672 = vadd.f32 0.0, %v671
  %v673 = vpop.f32.mrf.mxu0
  %674 = vmatprep.mubr.bf16.mxu0 0
  %675 = vmatmul.mubr.bf16.gmra.mxu0 %v378
  %v676 = vpop.f32.mrf.mxu0
  %v677 = vadd.f32 0.0, %v676
  %v678 = vpop.f32.mrf.mxu0
  %v679 = vpop.f32.mrf.mxu0
  %v680 = vadd.f32 0.0, %v679
  %v681 = vpop.f32.mrf.mxu0
  %682 = vmatprep.mubr.bf16.mxu0 0
  %683 = vmatmul.mubr.bf16.gmra.mxu0 %v379
  %v684 = vpop.f32.mrf.mxu0
  %v685 = vadd.f32 0.0, %v684
  %v686 = vpop.f32.mrf.mxu0
  %v687 = vpop.f32.mrf.mxu0
  %v688 = vadd.f32 0.0, %v687
  %v689 = vpop.f32.mrf.mxu0
  %690 = vmatprep.mubr.bf16.mxu0 0
  %691 = vmatmul.mubr.bf16.gmra.mxu0 %v380
  %v692 = vpop.f32.mrf.mxu0
  %v693 = vadd.f32 0.0, %v692
  %v694 = vpop.f32.mrf.mxu0
  %v695 = vpop.f32.mrf.mxu0
  %v696 = vadd.f32 0.0, %v695
  %v697 = vpop.f32.mrf.mxu0
  %698 = vmatprep.mubr.bf16.mxu0 0
  %699 = vmatmul.mubr.bf16.gmra.mxu0 %v381
  %v700 = vpop.f32.mrf.mxu0
  %v701 = vadd.f32 0.0, %v700
  %v702 = vpop.f32.mrf.mxu0
  %v703 = vpop.f32.mrf.mxu0
  %v704 = vadd.f32 0.0, %v703
  %v705 = vpop.f32.mrf.mxu0
  %706 = vmatprep.mubr.bf16.mxu0 0
  %707 = vmatmul.mubr.bf16.gmra.mxu0 %v382
  %v708 = vpop.f32.mrf.mxu0
  %v709 = vadd.f32 0.0, %v708
  %v710 = vpop.f32.mrf.mxu0
  %v711 = vpop.f32.mrf.mxu0
  %v712 = vadd.f32 0.0, %v711
  %v713 = vpop.f32.mrf.mxu0
  %714 = vmatprep.mubr.bf16.mxu0 0
  %715 = vmatmul.mubr.bf16.gmra.mxu0 %v383
  %v716 = vpop.f32.mrf.mxu0
  %v717 = vadd.f32 0.0, %v716
  %v718 = vpop.f32.mrf.mxu0
  %v719 = vpop.f32.mrf.mxu0
  %v720 = vadd.f32 0.0, %v719
  %v721 = vpop.f32.mrf.mxu0
  %722 = vmatprep.mubr.bf16.mxu0 0
  %723 = vmatmul.mubr.bf16.gmra.mxu0 %v384
  %v724 = vpop.f32.mrf.mxu0
  %v725 = vadd.f32 0.0, %v724
  %v726 = vpop.f32.mrf.mxu0
  %v727 = vpop.f32.mrf.mxu0
  %v728 = vadd.f32 0.0, %v727
  %v729 = vpop.f32.mrf.mxu0
  %730 = vmatprep.mubr.bf16.mxu0 0
  %731 = vmatmul.mubr.bf16.gmra.mxu0 %v385
  %v732 = vpop.f32.mrf.mxu0
  %v733 = vadd.f32 0.0, %v732
  %v734 = vpop.f32.mrf.mxu0
  %v735 = vpop.f32.mrf.mxu0
  %v736 = vadd.f32 0.0, %v735
  %v737 = vpop.f32.mrf.mxu0
  %738 = vdwg.mxu0
  %v739 = vpack.c.bf16 %v488, %v485
  %v740 = vpack.c.bf16 %v496, %v493
  %v741 = vpack.c.bf16 %v504, %v501
  %v742 = vpack.c.bf16 %v512, %v509
  %v743 = vpack.c.bf16 %v520, %v517
  %v744 = vpack.c.bf16 %v528, %v525
  %v745 = vpack.c.bf16 %v536, %v533
  %v746 = vpack.c.bf16 %v544, %v541
  %v747 = vpack.c.bf16 %v552, %v549
  %v748 = vpack.c.bf16 %v560, %v557
  %v749 = vpack.c.bf16 %v568, %v565
  %v750 = vpack.c.bf16 %v576, %v573
  %v751 = vpack.c.bf16 %v584, %v581
  %v752 = vpack.c.bf16 %v592, %v589
  %v753 = vpack.c.bf16 %v600, %v597
  %v754 = vpack.c.bf16 %v608, %v605
  %v755 = vpack.c.bf16 %v616, %v613
  %v756 = vpack.c.bf16 %v624, %v621
  %v757 = vpack.c.bf16 %v632, %v629
  %v758 = vpack.c.bf16 %v640, %v637
  %v759 = vpack.c.bf16 %v648, %v645
  %v760 = vpack.c.bf16 %v656, %v653
  %v761 = vpack.c.bf16 %v664, %v661
  %v762 = vpack.c.bf16 %v672, %v669
  %v763 = vpack.c.bf16 %v680, %v677
  %v764 = vpack.c.bf16 %v688, %v685
  %v765 = vpack.c.bf16 %v696, %v693
  %v766 = vpack.c.bf16 %v704, %v701
  %v767 = vpack.c.bf16 %v712, %v709
  %v768 = vpack.c.bf16 %v720, %v717
  %v769 = vpack.c.bf16 %v728, %v725
  %v770 = vpack.c.bf16 %v736, %v733
  %v803 = vunpack.c.l.b16 %v739
  %v804 = vunpack.c.h.b16 %v739
  %v805 = vunpack.c.l.b16 %v740
  %v806 = vunpack.c.h.b16 %v740
  %v807 = vunpack.c.l.b16 %v741
  %v808 = vunpack.c.h.b16 %v741
  %v809 = vunpack.c.l.b16 %v742
  %v810 = vunpack.c.h.b16 %v742
  %v811 = vunpack.c.l.b16 %v743
  %v812 = vunpack.c.h.b16 %v743
  %v813 = vunpack.c.l.b16 %v744
  %v814 = vunpack.c.h.b16 %v744
  %v815 = vunpack.c.l.b16 %v745
  %v816 = vunpack.c.h.b16 %v745
  %v817 = vunpack.c.l.b16 %v746
  %v818 = vunpack.c.h.b16 %v746
  %v819 = vunpack.c.l.b16 %v747
  %v820 = vunpack.c.h.b16 %v747
  %v821 = vunpack.c.l.b16 %v748
  %v822 = vunpack.c.h.b16 %v748
  %v823 = vunpack.c.l.b16 %v749
  %v824 = vunpack.c.h.b16 %v749
  %v825 = vunpack.c.l.b16 %v750
  %v826 = vunpack.c.h.b16 %v750
  %v827 = vunpack.c.l.b16 %v751
  %v828 = vunpack.c.h.b16 %v751
  %v829 = vunpack.c.l.b16 %v752
  %v830 = vunpack.c.h.b16 %v752
  %v831 = vunpack.c.l.b16 %v753
  %v832 = vunpack.c.h.b16 %v753
  %v833 = vunpack.c.l.b16 %v754
  %v834 = vunpack.c.h.b16 %v754
  %v835 = vunpack.c.l.b16 %v755
  %v836 = vunpack.c.h.b16 %v755
  %v837 = vunpack.c.l.b16 %v756
  %v838 = vunpack.c.h.b16 %v756
  %v839 = vunpack.c.l.b16 %v757
  %v840 = vunpack.c.h.b16 %v757
  %v841 = vunpack.c.l.b16 %v758
  %v842 = vunpack.c.h.b16 %v758
  %v843 = vunpack.c.l.b16 %v759
  %v844 = vunpack.c.h.b16 %v759
  %v845 = vunpack.c.l.b16 %v760
  %v846 = vunpack.c.h.b16 %v760
  %v847 = vunpack.c.l.b16 %v761
  %v848 = vunpack.c.h.b16 %v761
  %v849 = vunpack.c.l.b16 %v762
  %v850 = vunpack.c.h.b16 %v762
  %v851 = vunpack.c.l.b16 %v763
  %v852 = vunpack.c.h.b16 %v763
  %v853 = vunpack.c.l.b16 %v764
  %v854 = vunpack.c.h.b16 %v764
  %v855 = vunpack.c.l.b16 %v765
  %v856 = vunpack.c.h.b16 %v765
  %v857 = vunpack.c.l.b16 %v766
  %v858 = vunpack.c.h.b16 %v766
  %v859 = vunpack.c.l.b16 %v767
  %v860 = vunpack.c.h.b16 %v767
  %v861 = vunpack.c.l.b16 %v768
  %v862 = vunpack.c.h.b16 %v768
  %v863 = vunpack.c.l.b16 %v769
  %v864 = vunpack.c.h.b16 %v769
  %v865 = vunpack.c.l.b16 %v770
  %v866 = vunpack.c.h.b16 %v770
  %v867 = vpack.c.b16 %v803, %v803
  %v868 = vpack.c.b16 %v804, %v804
  %v869 = vpack.c.b16 %v805, %v805
  %v870 = vpack.c.b16 %v806, %v806
  %v871 = vpack.c.b16 %v807, %v807
  %v872 = vpack.c.b16 %v808, %v808
  %v873 = vpack.c.b16 %v809, %v809
  %v874 = vpack.c.b16 %v810, %v810
  %v875 = vpack.c.b16 %v811, %v811
  %v876 = vpack.c.b16 %v812, %v812
  %v877 = vpack.c.b16 %v813, %v813
  %v878 = vpack.c.b16 %v814, %v814
  %v879 = vpack.c.b16 %v815, %v815
  %v880 = vpack.c.b16 %v816, %v816
  %v881 = vpack.c.b16 %v817, %v817
  %v882 = vpack.c.b16 %v818, %v818
  %v883 = vpack.c.b16 %v819, %v819
  %v884 = vpack.c.b16 %v820, %v820
  %v885 = vpack.c.b16 %v821, %v821
  %v886 = vpack.c.b16 %v822, %v822
  %v887 = vpack.c.b16 %v823, %v823
  %v888 = vpack.c.b16 %v824, %v824
  %v889 = vpack.c.b16 %v825, %v825
  %v890 = vpack.c.b16 %v826, %v826
  %v891 = vpack.c.b16 %v827, %v827
  %v892 = vpack.c.b16 %v828, %v828
  %v893 = vpack.c.b16 %v829, %v829
  %v894 = vpack.c.b16 %v830, %v830
  %v895 = vpack.c.b16 %v831, %v831
  %v896 = vpack.c.b16 %v832, %v832
  %v897 = vpack.c.b16 %v833, %v833
  %v898 = vpack.c.b16 %v834, %v834
  %v899 = vpack.c.b16 %v835, %v835
  %v900 = vpack.c.b16 %v836, %v836
  %v901 = vpack.c.b16 %v837, %v837
  %v902 = vpack.c.b16 %v838, %v838
  %v903 = vpack.c.b16 %v839, %v839
  %v904 = vpack.c.b16 %v840, %v840
  %v905 = vpack.c.b16 %v841, %v841
  %v906 = vpack.c.b16 %v842, %v842
  %v907 = vpack.c.b16 %v843, %v843
  %v908 = vpack.c.b16 %v844, %v844
  %v909 = vpack.c.b16 %v845, %v845
  %v910 = vpack.c.b16 %v846, %v846
  %v911 = vpack.c.b16 %v847, %v847
  %v912 = vpack.c.b16 %v848, %v848
  %v913 = vpack.c.b16 %v849, %v849
  %v914 = vpack.c.b16 %v850, %v850
  %v915 = vpack.c.b16 %v851, %v851
  %v916 = vpack.c.b16 %v852, %v852
  %v917 = vpack.c.b16 %v853, %v853
  %v918 = vpack.c.b16 %v854, %v854
  %v919 = vpack.c.b16 %v855, %v855
  %v920 = vpack.c.b16 %v856, %v856
  %v921 = vpack.c.b16 %v857, %v857
  %v922 = vpack.c.b16 %v858, %v858
  %v923 = vpack.c.b16 %v859, %v859
  %v924 = vpack.c.b16 %v860, %v860
  %v925 = vpack.c.b16 %v861, %v861
  %v926 = vpack.c.b16 %v862, %v862
  %v927 = vpack.c.b16 %v863, %v863
  %v928 = vpack.c.b16 %v864, %v864
  %v929 = vpack.c.b16 %v865, %v865
  %v930 = vpack.c.b16 %v866, %v866
  %995 = vst [vmem:[%s4] sm:$0xf] %v867
  %996 = vst [vmem:[%s4 + $0x4] sm:$0xf] %v868
  %997 = vst [vmem:[%s4 + $0x8] sm:$0xf] %v869
  %998 = vst [vmem:[%s4 + $0xc] sm:$0xf] %v870
  %999 = vst [vmem:[%s4 + $0x10] sm:$0xf] %v871
  %1000 = vst [vmem:[%s4 + $0x14] sm:$0xf] %v872
  %1001 = vst [vmem:[%s4 + $0x18] sm:$0xf] %v873
  %1002 = vst [vmem:[%s4 + $0x1c] sm:$0xf] %v874
  %1003 = vst [vmem:[%s4 + $0x20] sm:$0xf] %v875
  %1004 = vst [vmem:[%s4 + $0x24] sm:$0xf] %v876
  %1005 = vst [vmem:[%s4 + $0x28] sm:$0xf] %v877
  %1006 = vst [vmem:[%s4 + $0x2c] sm:$0xf] %v878
  %1007 = vst [vmem:[%s4 + $0x30] sm:$0xf] %v879
  %1008 = vst [vmem:[%s4 + $0x34] sm:$0xf] %v880
  %1009 = vst [vmem:[%s4 + $0x38] sm:$0xf] %v881
  %1010 = vst [vmem:[%s4 + $0x3c] sm:$0xf] %v882
  %1011 = vst [vmem:[%s4 + $0x40] sm:$0xf] %v883
  %1012 = vst [vmem:[%s4 + $0x44] sm:$0xf] %v884
  %1013 = vst [vmem:[%s4 + $0x48] sm:$0xf] %v885
  %1014 = vst [vmem:[%s4 + $0x4c] sm:$0xf] %v886
  %1015 = vst [vmem:[%s4 + $0x50] sm:$0xf] %v887
  %1016 = vst [vmem:[%s4 + $0x54] sm:$0xf] %v888
  %1017 = vst [vmem:[%s4 + $0x58] sm:$0xf] %v889
  %1018 = vst [vmem:[%s4 + $0x5c] sm:$0xf] %v890
  %1019 = vst [vmem:[%s4 + $0x60] sm:$0xf] %v891
  %1020 = vst [vmem:[%s4 + $0x64] sm:$0xf] %v892
  %1021 = vst [vmem:[%s4 + $0x68] sm:$0xf] %v893
  %1022 = vst [vmem:[%s4 + $0x6c] sm:$0xf] %v894
  %1023 = vst [vmem:[%s4 + $0x70] sm:$0xf] %v895
  %1024 = vst [vmem:[%s4 + $0x74] sm:$0xf] %v896
  %1025 = vst [vmem:[%s4 + $0x78] sm:$0xf] %v897
  %1026 = vst [vmem:[%s4 + $0x7c] sm:$0xf] %v898
  %1027 = vst [vmem:[%s4 + $0x80] sm:$0xf] %v899
  %1028 = vst [vmem:[%s4 + $0x84] sm:$0xf] %v900
  %1029 = vst [vmem:[%s4 + $0x88] sm:$0xf] %v901
  %1030 = vst [vmem:[%s4 + $0x8c] sm:$0xf] %v902
  %1031 = vst [vmem:[%s4 + $0x90] sm:$0xf] %v903
  %1032 = vst [vmem:[%s4 + $0x94] sm:$0xf] %v904
  %1033 = vst [vmem:[%s4 + $0x98] sm:$0xf] %v905
  %1034 = vst [vmem:[%s4 + $0x9c] sm:$0xf] %v906
  %1035 = vst [vmem:[%s4 + $0xa0] sm:$0xf] %v907
  %1036 = vst [vmem:[%s4 + $0xa4] sm:$0xf] %v908
  %1037 = vst [vmem:[%s4 + $0xa8] sm:$0xf] %v909
  %1038 = vst [vmem:[%s4 + $0xac] sm:$0xf] %v910
  %1039 = vst [vmem:[%s4 + $0xb0] sm:$0xf] %v911
  %1040 = vst [vmem:[%s4 + $0xb4] sm:$0xf] %v912
  %1041 = vst [vmem:[%s4 + $0xb8] sm:$0xf] %v913
  %1042 = vst [vmem:[%s4 + $0xbc] sm:$0xf] %v914
  %1043 = vst [vmem:[%s4 + $0xc0] sm:$0xf] %v915
  %1044 = vst [vmem:[%s4 + $0xc4] sm:$0xf] %v916
  %1045 = vst [vmem:[%s4 + $0xc8] sm:$0xf] %v917
  %1046 = vst [vmem:[%s4 + $0xcc] sm:$0xf] %v918
  %1047 = vst [vmem:[%s4 + $0xd0] sm:$0xf] %v919
  %1048 = vst [vmem:[%s4 + $0xd4] sm:$0xf] %v920
  %1049 = vst [vmem:[%s4 + $0xd8] sm:$0xf] %v921
  %1050 = vst [vmem:[%s4 + $0xdc] sm:$0xf] %v922
  %1051 = vst [vmem:[%s4 + $0xe0] sm:$0xf] %v923
  %1052 = vst [vmem:[%s4 + $0xe4] sm:$0xf] %v924
  %1053 = vst [vmem:[%s4 + $0xe8] sm:$0xf] %v925
  %1054 = vst [vmem:[%s4 + $0xec] sm:$0xf] %v926
  %1055 = vst [vmem:[%s4 + $0xf0] sm:$0xf] %v927
  %1056 = vst [vmem:[%s4 + $0xf4] sm:$0xf] %v928
  %1057 = vst [vmem:[%s4 + $0xf8] sm:$0xf] %v929
  %1058 = vst [vmem:[%s4 + $0xfc] sm:$0xf] %v930
  %v1059 = vadd.f32 %v485, %v488
  %v1060 = vadd.f32 %v1059, %v493
  %v1061 = vadd.f32 %v1060, %v496
  %v1062 = vadd.f32 %v1061, %v501
  %v1063 = vadd.f32 %v1062, %v504
  %v1064 = vadd.f32 %v1063, %v509
  %v1065 = vadd.f32 %v1064, %v512
  %v1066 = vadd.f32 %v1065, %v517
  %v1067 = vadd.f32 %v1066, %v520
  %v1068 = vadd.f32 %v1067, %v525
  %v1069 = vadd.f32 %v1068, %v528
  %v1070 = vadd.f32 %v1069, %v533
  %v1071 = vadd.f32 %v1070, %v536
  %v1072 = vadd.f32 %v1071, %v541
  %v1073 = vadd.f32 %v1072, %v544
  %v1074 = vadd.f32 %v1073, %v549
  %v1075 = vadd.f32 %v1074, %v552
  %v1076 = vadd.f32 %v1075, %v557
  %v1077 = vadd.f32 %v1076, %v560
  %v1078 = vadd.f32 %v1077, %v565
  %v1079 = vadd.f32 %v1078, %v568
  %v1080 = vadd.f32 %v1079, %v573
  %v1081 = vadd.f32 %v1080, %v576
  %v1082 = vadd.f32 %v1081, %v581
  %v1083 = vadd.f32 %v1082, %v584
  %v1084 = vadd.f32 %v1083, %v589
  %v1085 = vadd.f32 %v1084, %v592
  %v1086 = vadd.f32 %v1085, %v597
  %v1087 = vadd.f32 %v1086, %v600
  %v1088 = vadd.f32 %v1087, %v605
  %v1089 = vadd.f32 %v1088, %v608
  %v1090 = vadd.f32 %v1089, %v613
  %v1091 = vadd.f32 %v1090, %v616
  %v1092 = vadd.f32 %v1091, %v621
  %v1093 = vadd.f32 %v1092, %v624
  %v1094 = vadd.f32 %v1093, %v629
  %v1095 = vadd.f32 %v1094, %v632
  %v1096 = vadd.f32 %v1095, %v637
  %v1097 = vadd.f32 %v1096, %v640
  %v1098 = vadd.f32 %v1097, %v645
  %v1099 = vadd.f32 %v1098, %v648
  %v1100 = vadd.f32 %v1099, %v653
  %v1101 = vadd.f32 %v1100, %v656
  %v1102 = vadd.f32 %v1101, %v661
  %v1103 = vadd.f32 %v1102, %v664
  %v1104 = vadd.f32 %v1103, %v669
  %v1105 = vadd.f32 %v1104, %v672
  %v1106 = vadd.f32 %v1105, %v677
  %v1107 = vadd.f32 %v1106, %v680
  %v1108 = vadd.f32 %v1107, %v685
  %v1109 = vadd.f32 %v1108, %v688
  %v1110 = vadd.f32 %v1109, %v693
  %v1111 = vadd.f32 %v1110, %v696
  %v1112 = vadd.f32 %v1111, %v701
  %v1113 = vadd.f32 %v1112, %v704
  %v1114 = vadd.f32 %v1113, %v709
  %v1115 = vadd.f32 %v1114, %v712
  %v1116 = vadd.f32 %v1115, %v717
  %v1117 = vadd.f32 %v1116, %v720
  %v1118 = vadd.f32 %v1117, %v725
  %v1119 = vadd.f32 %v1118, %v728
  %v1120 = vadd.f32 %v1119, %v733
  %v1121 = vadd.f32 %v1120, %v736
  %v1122 = vrot.slane %v1121, 4
  %v1123 = vadd.f32 %v1121, %v1122
  %v1124 = vrot.slane %v1123, 2
  %v1125 = vadd.f32 %v1123, %v1124
  %v1126 = vrot.slane %v1125, 1
  %v1127 = vadd.f32 %v1125, %v1126
  %v1128 = vmul.f32 %v485, %v485
  %v1129 = vmul.f32 %v488, %v488
  %v1130 = vmul.f32 %v493, %v493
  %v1131 = vmul.f32 %v496, %v496
  %v1132 = vmul.f32 %v501, %v501
  %v1133 = vmul.f32 %v504, %v504
  %v1134 = vmul.f32 %v509, %v509
  %v1135 = vmul.f32 %v512, %v512
  %v1136 = vmul.f32 %v517, %v517
  %v1137 = vmul.f32 %v520, %v520
  %v1138 = vmul.f32 %v525, %v525
  %v1139 = vmul.f32 %v528, %v528
  %v1140 = vmul.f32 %v533, %v533
  %v1141 = vmul.f32 %v536, %v536
  %v1142 = vmul.f32 %v541, %v541
  %v1143 = vmul.f32 %v544, %v544
  %v1144 = vmul.f32 %v549, %v549
  %v1145 = vmul.f32 %v552, %v552
  %v1146 = vmul.f32 %v557, %v557
  %v1147 = vmul.f32 %v560, %v560
  %v1148 = vmul.f32 %v565, %v565
  %v1149 = vmul.f32 %v568, %v568
  %v1150 = vmul.f32 %v573, %v573
  %v1151 = vmul.f32 %v576, %v576
  %v1152 = vmul.f32 %v581, %v581
  %v1153 = vmul.f32 %v584, %v584
  %v1154 = vmul.f32 %v589, %v589
  %v1155 = vmul.f32 %v592, %v592
  %v1156 = vmul.f32 %v597, %v597
  %v1157 = vmul.f32 %v600, %v600
  %v1158 = vmul.f32 %v605, %v605
  %v1159 = vmul.f32 %v608, %v608
  %v1160 = vmul.f32 %v613, %v613
  %v1161 = vmul.f32 %v616, %v616
  %v1162 = vmul.f32 %v621, %v621
  %v1163 = vmul.f32 %v624, %v624
  %v1164 = vmul.f32 %v629, %v629
  %v1165 = vmul.f32 %v632, %v632
  %v1166 = vmul.f32 %v637, %v637
  %v1167 = vmul.f32 %v640, %v640
  %v1168 = vmul.f32 %v645, %v645
  %v1169 = vmul.f32 %v648, %v648
  %v1170 = vmul.f32 %v653, %v653
  %v1171 = vmul.f32 %v656, %v656
  %v1172 = vmul.f32 %v661, %v661
  %v1173 = vmul.f32 %v664, %v664
  %v1174 = vmul.f32 %v669, %v669
  %v1175 = vmul.f32 %v672, %v672
  %v1176 = vmul.f32 %v677, %v677
  %v1177 = vmul.f32 %v680, %v680
  %v1178 = vmul.f32 %v685, %v685
  %v1179 = vmul.f32 %v688, %v688
  %v1180 = vmul.f32 %v693, %v693
  %v1181 = vmul.f32 %v696, %v696
  %v1182 = vmul.f32 %v701, %v701
  %v1183 = vmul.f32 %v704, %v704
  %v1184 = vmul.f32 %v709, %v709
  %v1185 = vmul.f32 %v712, %v712
  %v1186 = vmul.f32 %v717, %v717
  %v1187 = vmul.f32 %v720, %v720
  %v1188 = vmul.f32 %v725, %v725
  %v1189 = vmul.f32 %v728, %v728
  %v1190 = vmul.f32 %v733, %v733
  %v1191 = vmul.f32 %v736, %v736
  %v1192 = vadd.f32 %v1128, %v1129
  %v1193 = vadd.f32 %v1192, %v1130
  %v1194 = vadd.f32 %v1193, %v1131
  %v1195 = vadd.f32 %v1194, %v1132
  %v1196 = vadd.f32 %v1195, %v1133
  %v1197 = vadd.f32 %v1196, %v1134
  %v1198 = vadd.f32 %v1197, %v1135
  %v1199 = vadd.f32 %v1198, %v1136
  %v1200 = vadd.f32 %v1199, %v1137
  %v1201 = vadd.f32 %v1200, %v1138
  %v1202 = vadd.f32 %v1201, %v1139
  %v1203 = vadd.f32 %v1202, %v1140
  %v1204 = vadd.f32 %v1203, %v1141
  %v1205 = vadd.f32 %v1204, %v1142
  %v1206 = vadd.f32 %v1205, %v1143
  %v1207 = vadd.f32 %v1206, %v1144
  %v1208 = vadd.f32 %v1207, %v1145
  %v1209 = vadd.f32 %v1208, %v1146
  %v1210 = vadd.f32 %v1209, %v1147
  %v1211 = vadd.f32 %v1210, %v1148
  %v1212 = vadd.f32 %v1211, %v1149
  %v1213 = vadd.f32 %v1212, %v1150
  %v1214 = vadd.f32 %v1213, %v1151
  %v1215 = vadd.f32 %v1214, %v1152
  %v1216 = vadd.f32 %v1215, %v1153
  %v1217 = vadd.f32 %v1216, %v1154
  %v1218 = vadd.f32 %v1217, %v1155
  %v1219 = vadd.f32 %v1218, %v1156
  %v1220 = vadd.f32 %v1219, %v1157
  %v1221 = vadd.f32 %v1220, %v1158
  %v1222 = vadd.f32 %v1221, %v1159
  %v1223 = vadd.f32 %v1222, %v1160
  %v1224 = vadd.f32 %v1223, %v1161
  %v1225 = vadd.f32 %v1224, %v1162
  %v1226 = vadd.f32 %v1225, %v1163
  %v1227 = vadd.f32 %v1226, %v1164
  %v1228 = vadd.f32 %v1227, %v1165
  %v1229 = vadd.f32 %v1228, %v1166
  %v1230 = vadd.f32 %v1229, %v1167
  %v1231 = vadd.f32 %v1230, %v1168
  %v1232 = vadd.f32 %v1231, %v1169
  %v1233 = vadd.f32 %v1232, %v1170
  %v1234 = vadd.f32 %v1233, %v1171
  %v1235 = vadd.f32 %v1234, %v1172
  %v1236 = vadd.f32 %v1235, %v1173
  %v1237 = vadd.f32 %v1236, %v1174
  %v1238 = vadd.f32 %v1237, %v1175
  %v1239 = vadd.f32 %v1238, %v1176
  %v1240 = vadd.f32 %v1239, %v1177
  %v1241 = vadd.f32 %v1240, %v1178
  %v1242 = vadd.f32 %v1241, %v1179
  %v1243 = vadd.f32 %v1242, %v1180
  %v1244 = vadd.f32 %v1243, %v1181
  %v1245 = vadd.f32 %v1244, %v1182
  %v1246 = vadd.f32 %v1245, %v1183
  %v1247 = vadd.f32 %v1246, %v1184
  %v1248 = vadd.f32 %v1247, %v1185
  %v1249 = vadd.f32 %v1248, %v1186
  %v1250 = vadd.f32 %v1249, %v1187
  %v1251 = vadd.f32 %v1250, %v1188
  %v1252 = vadd.f32 %v1251, %v1189
  %v1253 = vadd.f32 %v1252, %v1190
  %v1254 = vadd.f32 %v1253, %v1191
  %v1255 = vrot.slane %v1254, 4
  %v1256 = vadd.f32 %v1254, %v1255
  %v1257 = vrot.slane %v1256, 2
  %v1258 = vadd.f32 %v1256, %v1257
  %v1259 = vrot.slane %v1258, 1
  %v1260 = vadd.f32 %v1258, %v1259
  %vm1261 = vcmask 1040384
  %v1262 = vsel %vm1261, %v1127, %v1260
  %1263 = vst [vmem:[%s5] sm:$0x3] %v1262
  // Predicated region
  $region18: #{bottleneck_forward.6} parent=0 // pred_check
    _
  $region19: #{bottleneck_forward.6} parent=0 // pred_check_branch
    %1265 = sbr.rel (0) target = $region21
  $region20: #{bottleneck_forward.6} parent=0 // pred_region
    _
  $region21: #{bottleneck_forward.6} parent=0 // pred_fallthru
    _
  // Predicated region
  $region22: #{bottleneck_forward.6} parent=0 // pred_check
    _
  $region23: #{bottleneck_forward.6} parent=0 // pred_check_branch
    %1267 = sbr.rel (0) target = $region25
  $region24: #{bottleneck_forward.6} parent=0 // pred_region
    _
  $region25: #{bottleneck_forward.6} parent=0 // pred_fallthru
    _
  // Predicated region
  $region26: #{bottleneck_forward.6} parent=0 // pred_check
    _
  $region27: #{bottleneck_forward.6} parent=0 // pred_check_branch
    %1269 = sbr.rel (0) target = $region29
  $region28: #{bottleneck_forward.6} parent=0 // pred_region
    _
  $region29: #{bottleneck_forward.6} parent=0 // pred_fallthru
    _
  // Predicated region
  $region30: #{bottleneck_forward.6} parent=0 // pred_check
    _
  $region31: #{bottleneck_forward.6} parent=0 // pred_check_branch
    %1271 = sbr.rel (0) target = $region33
  $region32: #{bottleneck_forward.6} parent=0 // pred_region
    _
  $region33: #{bottleneck_forward.6} parent=0 // pred_fallthru
    _

// kernel: bottleneck_forward.5
$region0: #{bottleneck_forward.5}
  #allocation0 [shape = 'u32[]', space=smem, size = 0x4, offset = 0x4, fixed_abs, tag = 'smem constant byte address 0x4 - core index']
  #allocation1 [shape = 'u32[144,128]{1,0:T(1,128)}', space=vmem, size = 0x12000, scoped, tag = 'internal scratch']
  #allocation2 [shape = 'f32[18,18,128]{2,1,0:T(8,128)}', space=vmem, size = 0x36000, scoped, tag = 'scratch operand']
  #allocation3 [shape = 'bf16[8,16,1152]{2,1,0:T(8,128)(2,1)}', space=vmem, size = 0x48000, scoped, tag = 'scratch operand']
  %s0 = inlined_call_operand.vmem [shape: bf16[2,16,16,128], index: 0, kind: input, shape index: {}]
  %s1 = inlined_call_operand.vmem [shape: f32[1,128], index: 1, kind: input, shape index: {}]
  %s2 = inlined_call_operand.vmem [shape: f32[1,128], index: 2, kind: input, shape index: {}]
  %s3 = inlined_call_operand.vmem [shape: bf16[1152,128], index: 3, kind: input, shape index: {}]
  %s4 = inlined_call_operand.vmem [shape: bf16[2,16,16,128], index: 4, kind: output, shape index: {0}]
  %s5 = inlined_call_operand.vmem [shape: f32[4,2,128], index: 5, kind: output, shape index: {1}]
  %6 = xla_tuple %s4, %s5
  %s7 = sld [smem:[#allocation0]]
  $region61: #{bottleneck_forward.5} parent=0
    _
  %s9 = ssub.s32 1, %s7
  %s10 = scalar_select 0, %s9, %s7
  loop: start=0, step=1, limit=6
  $region2: #{bottleneck_forward.5} parent=0 // loop_pre_header
    _
  $region3: #{bottleneck_forward.5} parent=0 // loop_header
    %s12 = sphi 0, %s16
    %p13 = scmp.ge.s32.totalorder %s12, 6
    %s19 = sphi 0, %s31
    %s20 = sphi 0, %s27
    %s21 = sphi 0, %s19
    %s22 = sphi 0, %s20
    %s23 = sphi 0, %s21
    %s24 = sphi 0, %s22
    %s34 = sphi 0, %s36
    %s37 = sphi 0, %s34
    %s38 = sphi 0, %s37
    %s54 = sphi 0, %s38
    %s58 = sphi 0, %s58
    %s60 = sphi 0, %s58
    %s61 = sphi 0, %s60
    %s75 = sphi 0, %s61
    %s79 = sphi 0, %s79
    %s81 = sphi 0, %s79
    %s82 = sphi 0, %s81
    %s96 = sphi 0, %s82
    %s100 = sphi 0, %s100
    %s102 = sphi 0, %s100
    %s103 = sphi 0, %s102
    %s117 = sphi 0, %s103
    %s125 = sphi 0, %s127
    %s128 = sphi 0, %s125
    %s129 = sphi 0, %s128
    %s145 = sphi 0, %s129
    %s155 = sphi 0, %s157
    %s158 = sphi 0, %s155
    %s159 = sphi 0, %s158
    %s175 = sphi 0, %s159
  $region4: #{bottleneck_forward.5} parent=0 // loop_header_branch
    %15 = sbr.rel (%p13) target = $region8
  $region5: #{bottleneck_forward.5} parent=0 // loop_body
    %s17 = ssub.s32 %s12, 1
    %s18 = ssub.s32 %s12, 2
    %s25 = sadd.s32 1, %s20
    %p26 = scmp.ge.s32.totalorder %s25, 2
    %s27 = scalar_select %p26, 0, %s25
    %s28 = sadd.s32 1, %s19
    %s29 = scalar_select %p26, %s28, %s19
    %p30 = scmp.ge.s32.totalorder %s29, 2
    %s31 = scalar_select %p30, 0, %s29
    %s32 = ssub.s32 %s19, %s31
    %p33 = scmp.eq.s32.totalorder %s32, 0
    %s35 = sadd.s32 %s34, 1
    %s36 = scalar_select %p33, %s34, %s35
    %p39 = pneg %p33
    %p40 = scmp.eq.s32.totalorder %s12, 3
    %p41 = por %p39, %p40
    %p42 = scmp.ne.s32.totalorder %s34, %s37
    %p43 = scmp.eq.s32.totalorder %s12, 0
    %p44 = por %p42, %p43
    %p45 = scmp.ne.s32.totalorder %s34, %s37
    %p46 = scmp.eq.s32.totalorder %s17, 3
    %p47 = por %p45, %p46
    %p48 = scmp.ne.s32.totalorder %s37, %s38
    %p49 = scmp.eq.s32.totalorder %s17, 0
    %p50 = por %p48, %p49
    %p51 = scmp.ne.s32.totalorder %s37, %s38
    %p52 = scmp.eq.s32.totalorder %s18, 3
    %p53 = por %p51, %p52
    %p55 = scmp.ne.s32.totalorder %s38, %s54
    %p56 = scmp.eq.s32.totalorder %s18, 0
    %p57 = por %p55, %p56
    %s59 = sadd.s32 %s58, 1
    %p62 = scmp.eq.s32.totalorder %s12, 3
    %p63 = scmp.ne.s32.totalorder %s58, %s60
    %p64 = scmp.eq.s32.totalorder %s12, 0
    %p65 = por %p63, %p64
    %p66 = scmp.ne.s32.totalorder %s58, %s60
    %p67 = scmp.eq.s32.totalorder %s17, 3
    %p68 = por %p66, %p67
    %p69 = scmp.ne.s32.totalorder %s60, %s61
    %p70 = scmp.eq.s32.totalorder %s17, 0
    %p71 = por %p69, %p70
    %p72 = scmp.ne.s32.totalorder %s60, %s61
    %p73 = scmp.eq.s32.totalorder %s18, 3
    %p74 = por %p72, %p73
    %p76 = scmp.ne.s32.totalorder %s61, %s75
    %p77 = scmp.eq.s32.totalorder %s18, 0
    %p78 = por %p76, %p77
    %s80 = sadd.s32 %s79, 1
    %p83 = scmp.eq.s32.totalorder %s12, 3
    %p84 = scmp.ne.s32.totalorder %s79, %s81
    %p85 = scmp.eq.s32.totalorder %s12, 0
    %p86 = por %p84, %p85
    %p87 = scmp.ne.s32.totalorder %s79, %s81
    %p88 = scmp.eq.s32.totalorder %s17, 3
    %p89 = por %p87, %p88
    %p90 = scmp.ne.s32.totalorder %s81, %s82
    %p91 = scmp.eq.s32.totalorder %s17, 0
    %p92 = por %p90, %p91
    %p93 = scmp.ne.s32.totalorder %s81, %s82
    %p94 = scmp.eq.s32.totalorder %s18, 3
    %p95 = por %p93, %p94
    %p97 = scmp.ne.s32.totalorder %s82, %s96
    %p98 = scmp.eq.s32.totalorder %s18, 0
    %p99 = por %p97, %p98
    %s101 = sadd.s32 %s100, 1
    %p104 = scmp.eq.s32.totalorder %s12, 3
    %p105 = scmp.ne.s32.totalorder %s100, %s102
    %p106 = scmp.eq.s32.totalorder %s12, 0
    %p107 = por %p105, %p106
    %p108 = scmp.ne.s32.totalorder %s100, %s102
    %p109 = scmp.eq.s32.totalorder %s17, 3
    %p110 = por %p108, %p109
    %p111 = scmp.ne.s32.totalorder %s102, %s103
    %p112 = scmp.eq.s32.totalorder %s17, 0
    %p113 = por %p111, %p112
    %p114 = scmp.ne.s32.totalorder %s102, %s103
    %p115 = scmp.eq.s32.totalorder %s18, 3
    %p116 = por %p114, %p115
    %p118 = scmp.ne.s32.totalorder %s103, %s117
    %p119 = scmp.eq.s32.totalorder %s18, 0
    %p120 = por %p118, %p119
    %s121 = ssub.s32 %s19, %s31
    %s122 = ssub.s32 %s20, %s27
    %s123 = sor.u32 %s121, %s122
    %p124 = scmp.eq.s32.totalorder %s123, 0
    %s126 = sadd.s32 %s125, 1
    %s127 = scalar_select %p124, %s125, %s126
    %p130 = pneg %p124
    %p131 = scmp.eq.s32.totalorder %s12, 3
    %p132 = por %p130, %p131
    %p133 = scmp.ne.s32.totalorder %s125, %s128
    %p134 = scmp.eq.s32.totalorder %s12, 0
    %p135 = por %p133, %p134
    %p136 = scmp.ne.s32.totalorder %s125, %s128
    %p137 = scmp.eq.s32.totalorder %s17, 3
    %p138 = por %p136, %p137
    %p139 = scmp.ne.s32.totalorder %s128, %s129
    %p140 = scmp.eq.s32.totalorder %s17, 0
    %p141 = por %p139, %p140
    %p142 = scmp.ne.s32.totalorder %s128, %s129
    %p143 = scmp.eq.s32.totalorder %s18, 3
    %p144 = por %p142, %p143
    %p146 = scmp.ne.s32.totalorder %s129, %s145
    %p147 = scmp.eq.s32.totalorder %s18, 0
    %p148 = por %p146, %p147
    %s149 = smul.u32 %s19, 2
    %s150 = sadd.s32 %s149, %s20
    %s151 = smul.u32 %s31, 2
    %s152 = sadd.s32 %s151, %s27
    %s153 = ssub.s32 %s150, %s152
    %p154 = scmp.eq.s32.totalorder %s153, 0
    %s156 = sadd.s32 %s155, 1
    %s157 = scalar_select %p154, %s155, %s156
    %p160 = pneg %p154
    %p161 = scmp.eq.s32.totalorder %s12, 3
    %p162 = por %p160, %p161
    %p163 = scmp.ne.s32.totalorder %s155, %s158
    %p164 = scmp.eq.s32.totalorder %s12, 0
    %p165 = por %p163, %p164
    %p166 = scmp.ne.s32.totalorder %s155, %s158
    %p167 = scmp.eq.s32.totalorder %s17, 3
    %p168 = por %p166, %p167
    %p169 = scmp.ne.s32.totalorder %s158, %s159
    %p170 = scmp.eq.s32.totalorder %s17, 0
    %p171 = por %p169, %p170
    %p172 = scmp.ne.s32.totalorder %s158, %s159
    %p173 = scmp.eq.s32.totalorder %s18, 3
    %p174 = por %p172, %p173
    %p176 = scmp.ne.s32.totalorder %s159, %s175
    %p177 = scmp.eq.s32.totalorder %s18, 0
    %p178 = por %p176, %p177
    %p179 = scmp.le.s32.totalorder 1, %s12
    %p180 = scmp.lt.s32.totalorder %s12, 5
    %p181 = pnand %p179, %p180
    %p182 = pneg %p181
    // Predicated region
    $region9: #{bottleneck_forward.5} parent=5 // pred_check
      _
    $region10: #{bottleneck_forward.5} parent=5 // pred_check_branch
      %184 = sbr.rel (%p181) target = $region12
    $region11: #{bottleneck_forward.5} parent=5 // pred_region
      %s185 = ssub.s32 %s12, 1
      // Predicated region
      $region13: #{bottleneck_forward.5} parent=11 // pred_check
        %p186 = pneg %p71
      $region14: #{bottleneck_forward.5} parent=11 // pred_check_branch
        %188 = sbr.rel (%p186) target = $region16
      $region15: #{bottleneck_forward.5} parent=11 // pred_region
        _
      $region16: #{bottleneck_forward.5} parent=11 // pred_fallthru
        _
      // Predicated region
      $region17: #{bottleneck_forward.5} parent=11 // pred_check
        %p189 = pneg %p92
      $region18: #{bottleneck_forward.5} parent=11 // pred_check_branch
        %191 = sbr.rel (%p189) target = $region20
      $region19: #{bottleneck_forward.5} parent=11 // pred_region
        _
      $region20: #{bottleneck_forward.5} parent=11 // pred_fallthru
        _
      // Predicated region
      $region21: #{bottleneck_forward.5} parent=11 // pred_check
        %p192 = pneg %p113
      $region22: #{bottleneck_forward.5} parent=11 // pred_check_branch
        %194 = sbr.rel (%p192) target = $region24
      $region23: #{bottleneck_forward.5} parent=11 // pred_region
        _
      $region24: #{bottleneck_forward.5} parent=11 // pred_fallthru
        _
    $region12: #{bottleneck_forward.5} parent=5 // pred_fallthru
      _
    %p195 = scmp.lt.s32.totalorder %s12, 4
    // Predicated region
    $region25: #{bottleneck_forward.5} parent=5 // pred_check
      %p196 = pneg %p195
    $region26: #{bottleneck_forward.5} parent=5 // pred_check_branch
      %198 = sbr.rel (%p196) target = $region28
    $region27: #{bottleneck_forward.5} parent=5 // pred_region
      // Predicated region
      $region29: #{bottleneck_forward.5} parent=27 // pred_check
        %p199 = pneg %p44
      $region30: #{bottleneck_forward.5} parent=27 // pred_check_branch
        %201 = sbr.rel (%p199) target = $region32
      $region31: #{bottleneck_forward.5} parent=27 // pred_region
        %p202 = scmp.lt.s32.totalorder %s19, 1
        %s203 = scalar_select %p202, %s19, 1
        %s204 = smul.addr %s203, 32
        %s205 = smul.addr %s204, 4
        %s206 = scalar_lea.vmem %s0, %s205
      $region32: #{bottleneck_forward.5} parent=27 // pred_fallthru
        _
    $region28: #{bottleneck_forward.5} parent=5 // pred_fallthru
      _
    %p207 = scmp.le.s32.totalorder 1, %s12
    %p208 = scmp.lt.s32.totalorder %s12, 5
    %p209 = pnand %p207, %p208
    %p210 = pneg %p209
    // Predicated region
    $region33: #{bottleneck_forward.5} parent=5 // pred_check
      _
    $region34: #{bottleneck_forward.5} parent=5 // pred_check_branch
      %212 = sbr.rel (%p209) target = $region36
    $region35: #{bottleneck_forward.5} parent=5 // pred_region
      %s213 = ssub.s32 %s12, 1
      %p214 = scmp.lt.s32.totalorder %s21, 1
      %s215 = scalar_select %p214, %s21, 1
      %s216 = smul.addr %s215, 32
      %s217 = smul.addr %s216, 4
      %s218 = scalar_lea.vmem %s0, %s217
      %p219 = pneg %p50
      %p220 = pneg %p47
      %p221 = pneg %p71
      %p222 = pneg %p68
      %p223 = pneg %p92
      %p224 = pneg %p89
      %p225 = pneg %p113
      %p226 = pneg %p110
      %p227 = pneg %p141
      %p228 = pneg %p138
      %s229 = smul.u32 8, %s22
      %p230 = scmp.lt.s32.totalorder %s21, 1
      %s231 = scalar_select %p230, %s21, 1
      %p232 = scmp.lt.s32.totalorder %s229, 15
      %s233 = scalar_select %p232, %s229, 15
      %s234 = smul.addr %s233, 2
      %s235 = smul.addr %s231, 32
      %s236 = sadd.s32 %s234, %s235
      %s237 = smul.addr %s236, 4
      %s238 = scalar_lea.vmem %s4, %s237
      %p239 = pneg %p171
      %p240 = pneg %p168
      %s241 = smul.u32 %s21, 2
      %s242 = sadd.s32 %s241, %s22
      %p243 = scmp.lt.s32.totalorder %s242, 3
      %s244 = scalar_select %p243, %s242, 3
      %s245 = smul.addr %s244, 2
      %s246 = scalar_lea.vmem %s5, %s245
      %p247 = scmp.lt.s32.totalorder %s21, 1
      %s248 = scalar_select %p247, %s21, 1
      %s249 = smul.addr %s248, 32
      %s250 = smul.addr %s249, 4
      %s251 = scalar_lea.vmem %s0, %s250
      %s252 = smul.u32 8, %s22
      %p253 = scmp.lt.s32.totalorder %s21, 1
      %s254 = scalar_select %p253, %s21, 1
      %p255 = scmp.lt.s32.totalorder %s252, 15
      %s256 = scalar_select %p255, %s252, 15
      %s257 = smul.addr %s256, 2
      %s258 = smul.addr %s254, 32
      %s259 = sadd.s32 %s257, %s258
      %s260 = smul.addr %s259, 4
      %s261 = scalar_lea.vmem %s4, %s260
      %s262 = smul.u32 8, %s22
      %s263 = smul.u32 %s21, 2
      %s264 = sadd.s32 %s263, %s22
      %p265 = scmp.lt.s32.totalorder %s264, 3
      %s266 = scalar_select %p265, %s264, 3
      %s267 = smul.addr %s266, 2
      %s268 = scalar_lea.vmem %s5, %s267
      %s269 = smul.u32 %s21, 2
      %s270 = sadd.s32 %s269, %s22
      %p272 = scmp.eq.s32.totalorder %s22, 0
      // Predicated region
      $region37: #{bottleneck_forward.5} parent=35 // pred_check
        %p273 = pneg %p272
      $region38: #{bottleneck_forward.5} parent=35 // pred_check_branch
        %275 = sbr.rel (%p273) target = $region40
      $region39: #{bottleneck_forward.5} parent=35 // pred_region
        %276 = vst [vmem:[#allocation2] sm:$0xff] 0.0
        %277 = vst [vmem:[#allocation2 + $0x8] sm:$0xff] 0.0
        %278 = vst [vmem:[#allocation2 + $0x10] sm:$0x3] 0.0
        %s279 = scalar_lea.vmem [#allocation2], 408
        %280 = vst [vmem:[%s279] sm:$0xff] 0.0
        %281 = vst [vmem:[%s279 + $0x8] sm:$0xff] 0.0
        %282 = vst [vmem:[%s279 + $0x10] sm:$0x3] 0.0
        %283 = vst [vmem:[#allocation2] sm:$0x1] 0.0
        %284 = vst [vmem:[#allocation2 + $0x18] sm:$0x1] 0.0
        %285 = vst [vmem:[#allocation2 + $0x30] sm:$0x1] 0.0
        %286 = vst [vmem:[#allocation2 + $0x48] sm:$0x1] 0.0
        %287 = vst [vmem:[#allocation2 + $0x60] sm:$0x1] 0.0
        %288 = vst [vmem:[#allocation2 + $0x78] sm:$0x1] 0.0
        %289 = vst [vmem:[#allocation2 + $0x90] sm:$0x1] 0.0
        %290 = vst [vmem:[#allocation2 + $0xa8] sm:$0x1] 0.0
        %291 = vst [vmem:[#allocation2 + $0xc0] sm:$0x1] 0.0
        %292 = vst [vmem:[#allocation2 + $0xd8] sm:$0x1] 0.0
        %293 = vst [vmem:[#allocation2 + $0xf0] sm:$0x1] 0.0
        %294 = vst [vmem:[#allocation2 + $0x108] sm:$0x1] 0.0
        %295 = vst [vmem:[#allocation2 + $0x120] sm:$0x1] 0.0
        %296 = vst [vmem:[#allocation2 + $0x138] sm:$0x1] 0.0
        %297 = vst [vmem:[#allocation2 + $0x150] sm:$0x1] 0.0
        %298 = vst [vmem:[#allocation2 + $0x168] sm:$0x1] 0.0
        %299 = vst [vmem:[#allocation2 + $0x180] sm:$0x1] 0.0
        %300 = vst [vmem:[#allocation2 + $0x198] sm:$0x1] 0.0
        %301 = vst [vmem:[#allocation2 + $0x11] sm:$0x1] 0.0
        %302 = vst [vmem:[#allocation2 + $0x29] sm:$0x1] 0.0
        %303 = vst [vmem:[#allocation2 + $0x41] sm:$0x1] 0.0
        %304 = vst [vmem:[#allocation2 + $0x59] sm:$0x1] 0.0
        %305 = vst [vmem:[#allocation2 + $0x71] sm:$0x1] 0.0
        %306 = vst [vmem:[#allocation2 + $0x89] sm:$0x1] 0.0
        %307 = vst [vmem:[#allocation2 + $0xa1] sm:$0x1] 0.0
        %308 = vst [vmem:[#allocation2 + $0xb9] sm:$0x1] 0.0
        %309 = vst [vmem:[#allocation2 + $0xd1] sm:$0x1] 0.0
        %310 = vst [vmem:[#allocation2 + $0xe9] sm:$0x1] 0.0
        %311 = vst [vmem:[#allocation2 + $0x101] sm:$0x1] 0.0
        %312 = vst [vmem:[#allocation2 + $0x119] sm:$0x1] 0.0
        %313 = vst [vmem:[#allocation2 + $0x131] sm:$0x1] 0.0
        %314 = vst [vmem:[#allocation2 + $0x149] sm:$0x1] 0.0
        %315 = vst [vmem:[#allocation2 + $0x161] sm:$0x1] 0.0
        %316 = vst [vmem:[#allocation2 + $0x179] sm:$0x1] 0.0
        %317 = vst [vmem:[#allocation2 + $0x191] sm:$0x1] 0.0
        %318 = vst [vmem:[#allocation2 + $0x1a9] sm:$0x1] 0.0
        %v319 = vld [vmem:[%s251] sm:$0xf]
        %v320 = vld [vmem:[%s251 + $0x4] sm:$0xf]
        %v321 = vld [vmem:[%s251 + $0x8] sm:$0xf]
        %v322 = vld [vmem:[%s251 + $0xc] sm:$0xf]
        %v323 = vld [vmem:[%s251 + $0x10] sm:$0xf]
        %v324 = vld [vmem:[%s251 + $0x14] sm:$0xf]
        %v325 = vld [vmem:[%s251 + $0x18] sm:$0xf]
        %v326 = vld [vmem:[%s251 + $0x1c] sm:$0xf]
        %v327 = vld [vmem:[%s251 + $0x20] sm:$0xf]
        %v328 = vld [vmem:[%s251 + $0x24] sm:$0xf]
        %v329 = vld [vmem:[%s251 + $0x28] sm:$0xf]
        %v330 = vld [vmem:[%s251 + $0x2c] sm:$0xf]
        %v331 = vld [vmem:[%s251 + $0x30] sm:$0xf]
        %v332 = vld [vmem:[%s251 + $0x34] sm:$0xf]
        %v333 = vld [vmem:[%s251 + $0x38] sm:$0xf]
        %v334 = vld [vmem:[%s251 + $0x3c] sm:$0xf]
        %v335 = vld [vmem:[%s251 + $0x40] sm:$0xf]
        %v336 = vld [vmem:[%s251 + $0x44] sm:$0xf]
        %v337 = vld [vmem:[%s251 + $0x48] sm:$0xf]
        %v338 = vld [vmem:[%s251 + $0x4c] sm:$0xf]
        %v339 = vld [vmem:[%s251 + $0x50] sm:$0xf]
        %v340 = vld [vmem:[%s251 + $0x54] sm:$0xf]
        %v341 = vld [vmem:[%s251 + $0x58] sm:$0xf]
        %v342 = vld [vmem:[%s251 + $0x5c] sm:$0xf]
        %v343 = vld [vmem:[%s251 + $0x60] sm:$0xf]
        %v344 = vld [vmem:[%s251 + $0x64] sm:$0xf]
        %v345 = vld [vmem:[%s251 + $0x68] sm:$0xf]
        %v346 = vld [vmem:[%s251 + $0x6c] sm:$0xf]
        %v347 = vld [vmem:[%s251 + $0x70] sm:$0xf]
        %v348 = vld [vmem:[%s251 + $0x74] sm:$0xf]
        %v349 = vld [vmem:[%s251 + $0x78] sm:$0xf]
        %v350 = vld [vmem:[%s251 + $0x7c] sm:$0xf]
        %v351 = vunpack.c.l.bf16 %v319
        %v352 = vunpack.c.l.bf16 %v320
        %v353 = vunpack.c.l.bf16 %v321
        %v354 = vunpack.c.l.bf16 %v322
        %v355 = vunpack.c.l.bf16 %v323
        %v356 = vunpack.c.l.bf16 %v324
        %v357 = vunpack.c.l.bf16 %v325
        %v358 = vunpack.c.l.bf16 %v326
        %v359 = vunpack.c.l.bf16 %v327
        %v360 = vunpack.c.l.bf16 %v328
        %v361 = vunpack.c.l.bf16 %v329
        %v362 = vunpack.c.l.bf16 %v330
        %v363 = vunpack.c.l.bf16 %v331
        %v364 = vunpack.c.l.bf16 %v332
        %v365 = vunpack.c.l.bf16 %v333
        %v366 = vunpack.c.l.bf16 %v334
        %v367 = vunpack.c.l.bf16 %v335
        %v368 = vunpack.c.l.bf16 %v336
        %v369 = vunpack.c.l.bf16 %v337
        %v370 = vunpack.c.l.bf16 %v338
        %v371 = vunpack.c.l.bf16 %v339
        %v372 = vunpack.c.l.bf16 %v340
        %v373 = vunpack.c.l.bf16 %v341
        %v374 = vunpack.c.l.bf16 %v342
        %v375 = vunpack.c.l.bf16 %v343
        %v376 = vunpack.c.l.bf16 %v344
        %v377 = vunpack.c.l.bf16 %v345
        %v378 = vunpack.c.l.bf16 %v346
        %v379 = vunpack.c.l.bf16 %v347
        %v380 = vunpack.c.l.bf16 %v348
        %v381 = vunpack.c.l.bf16 %v349
        %v382 = vunpack.c.l.bf16 %v350
        %v383 = vld [vmem:[%s1] sm:$0x1]
        %v385 = vlaneseq
        %v386 = vshrl.u32 %v385, 7
        %v387 = vsub.s32 0, %v386
        %v388 = vrot.slane %v383, %v387
        %v390 = vmul.f32 %v351, %v388
        %v391 = vmul.f32 %v352, %v388
        %v392 = vmul.f32 %v353, %v388
        %v393 = vmul.f32 %v354, %v388
        %v394 = vmul.f32 %v355, %v388
        %v395 = vmul.f32 %v356, %v388
        %v396 = vmul.f32 %v357, %v388
        %v397 = vmul.f32 %v358, %v388
        %v398 = vmul.f32 %v359, %v388
        %v399 = vmul.f32 %v360, %v388
        %v400 = vmul.f32 %v361, %v388
        %v401 = vmul.f32 %v362, %v388
        %v402 = vmul.f32 %v363, %v388
        %v403 = vmul.f32 %v364, %v388
        %v404 = vmul.f32 %v365, %v388
        %v405 = vmul.f32 %v366, %v388
        %v406 = vmul.f32 %v367, %v388
        %v407 = vmul.f32 %v368, %v388
        %v408 = vmul.f32 %v369, %v388
        %v409 = vmul.f32 %v370, %v388
        %v410 = vmul.f32 %v371, %v388
        %v411 = vmul.f32 %v372, %v388
        %v412 = vmul.f32 %v373, %v388
        %v413 = vmul.f32 %v374, %v388
        %v414 = vmul.f32 %v375, %v388
        %v415 = vmul.f32 %v376, %v388
        %v416 = vmul.f32 %v377, %v388
        %v417 = vmul.f32 %v378, %v388
        %v418 = vmul.f32 %v379, %v388
        %v419 = vmul.f32 %v380, %v388
        %v420 = vmul.f32 %v381, %v388
        %v421 = vmul.f32 %v382, %v388
        %v422 = vld [vmem:[%s2] sm:$0x1]
        %v424 = vlaneseq
        %v425 = vshrl.u32 %v424, 7
        %v426 = vsub.s32 0, %v425
        %v427 = vrot.slane %v422, %v426
        %v429 = vadd.f32 %v390, %v427
        %v430 = vadd.f32 %v391, %v427
        %v431 = vadd.f32 %v392, %v427
        %v432 = vadd.f32 %v393, %v427
        %v433 = vadd.f32 %v394, %v427
        %v434 = vadd.f32 %v395, %v427
        %v435 = vadd.f32 %v396, %v427
        %v436 = vadd.f32 %v397, %v427
        %v437 = vadd.f32 %v398, %v427
        %v438 = vadd.f32 %v399, %v427
        %v439 = vadd.f32 %v400, %v427
        %v440 = vadd.f32 %v401, %v427
        %v441 = vadd.f32 %v402, %v427
        %v442 = vadd.f32 %v403, %v427
        %v443 = vadd.f32 %v404, %v427
        %v444 = vadd.f32 %v405, %v427
        %v445 = vadd.f32 %v406, %v427
        %v446 = vadd.f32 %v407, %v427
        %v447 = vadd.f32 %v408, %v427
        %v448 = vadd.f32 %v409, %v427
        %v449 = vadd.f32 %v410, %v427
        %v450 = vadd.f32 %v411, %v427
        %v451 = vadd.f32 %v412, %v427
        %v452 = vadd.f32 %v413, %v427
        %v453 = vadd.f32 %v414, %v427
        %v454 = vadd.f32 %v415, %v427
        %v455 = vadd.f32 %v416, %v427
        %v456 = vadd.f32 %v417, %v427
        %v457 = vadd.f32 %v418, %v427
        %v458 = vadd.f32 %v419, %v427
        %v459 = vadd.f32 %v420, %v427
        %v460 = vadd.f32 %v421, %v427
        %v461 = vmax.f32 %v429, 0.0
        %v462 = vmax.f32 %v430, 0.0
        %v463 = vmax.f32 %v431, 0.0
        %v464 = vmax.f32 %v432, 0.0
        %v465 = vmax.f32 %v433, 0.0
        %v466 = vmax.f32 %v434, 0.0
        %v467 = vmax.f32 %v435, 0.0
        %v468 = vmax.f32 %v436, 0.0
        %v469 = vmax.f32 %v437, 0.0
        %v470 = vmax.f32 %v438, 0.0
        %v471 = vmax.f32 %v439, 0.0
        %v472 = vmax.f32 %v440, 0.0
        %v473 = vmax.f32 %v441, 0.0
        %v474 = vmax.f32 %v442, 0.0
        %v475 = vmax.f32 %v443, 0.0
        %v476 = vmax.f32 %v444, 0.0
        %v477 = vmax.f32 %v445, 0.0
        %v478 = vmax.f32 %v446, 0.0
        %v479 = vmax.f32 %v447, 0.0
        %v480 = vmax.f32 %v448, 0.0
        %v481 = vmax.f32 %v449, 0.0
        %v482 = vmax.f32 %v450, 0.0
        %v483 = vmax.f32 %v451, 0.0
        %v484 = vmax.f32 %v452, 0.0
        %v485 = vmax.f32 %v453, 0.0
        %v486 = vmax.f32 %v454, 0.0
        %v487 = vmax.f32 %v455, 0.0
        %v488 = vmax.f32 %v456, 0.0
        %v489 = vmax.f32 %v457, 0.0
        %v490 = vmax.f32 %v458, 0.0
        %v491 = vmax.f32 %v459, 0.0
        %v492 = vmax.f32 %v460, 0.0
        %s493 = scalar_lea.vmem [#allocation2], 24
        %494 = vst [vmem:[%s493 + $0x1] sm:$0xff] %v461
        %495 = vst [vmem:[%s493 + $0x9] sm:$0xff] %v462
        %496 = vst [vmem:[%s493 + $0x19] sm:$0xff] %v463
        %497 = vst [vmem:[%s493 + $0x21] sm:$0xff] %v464
        %498 = vst [vmem:[%s493 + $0x31] sm:$0xff] %v465
        %499 = vst [vmem:[%s493 + $0x39] sm:$0xff] %v466
        %500 = vst [vmem:[%s493 + $0x49] sm:$0xff] %v467
        %501 = vst [vmem:[%s493 + $0x51] sm:$0xff] %v468
        %502 = vst [vmem:[%s493 + $0x61] sm:$0xff] %v469
        %503 = vst [vmem:[%s493 + $0x69] sm:$0xff] %v470
        %504 = vst [vmem:[%s493 + $0x79] sm:$0xff] %v471
        %505 = vst [vmem:[%s493 + $0x81] sm:$0xff] %v472
        %506 = vst [vmem:[%s493 + $0x91] sm:$0xff] %v473
        %507 = vst [vmem:[%s493 + $0x99] sm:$0xff] %v474
        %508 = vst [vmem:[%s493 + $0xa9] sm:$0xff] %v475
        %509 = vst [vmem:[%s493 + $0xb1] sm:$0xff] %v476
        %510 = vst [vmem:[%s493 + $0xc1] sm:$0xff] %v477
        %511 = vst [vmem:[%s493 + $0xc9] sm:$0xff] %v478
        %512 = vst [vmem:[%s493 + $0xd9] sm:$0xff] %v479
        %513 = vst [vmem:[%s493 + $0xe1] sm:$0xff] %v480
        %514 = vst [vmem:[%s493 + $0xf1] sm:$0xff] %v481
        %515 = vst [vmem:[%s493 + $0xf9] sm:$0xff] %v482
        %516 = vst [vmem:[%s493 + $0x109] sm:$0xff] %v483
        %517 = vst [vmem:[%s493 + $0x111] sm:$0xff] %v484
        %518 = vst [vmem:[%s493 + $0x121] sm:$0xff] %v485
        %519 = vst [vmem:[%s493 + $0x129] sm:$0xff] %v486
        %520 = vst [vmem:[%s493 + $0x139] sm:$0xff] %v487
        %521 = vst [vmem:[%s493 + $0x141] sm:$0xff] %v488
        %522 = vst [vmem:[%s493 + $0x151] sm:$0xff] %v489
        %523 = vst [vmem:[%s493 + $0x159] sm:$0xff] %v490
        %524 = vst [vmem:[%s493 + $0x169] sm:$0xff] %v491
        %525 = vst [vmem:[%s493 + $0x171] sm:$0xff] %v492
      $region40: #{bottleneck_forward.5} parent=35 // pred_fallthru
        _
      %s526 = smul.u32 %s22, 8
      %s527 = smul.u32 %s526, 24
      %s528 = scalar_lea.vmem [#allocation2], %s527
      %v529 = vld [vmem:[%s528] sm:$0xff]
      %v530 = vld [vmem:[%s528 + $0x8] sm:$0xff]
      %v531 = vld [vmem:[%s528 + $0x18] sm:$0xff]
      %v532 = vld [vmem:[%s528 + $0x20] sm:$0xff]
      %v533 = vld [vmem:[%s528 + $0x30] sm:$0xff]
      %v534 = vld [vmem:[%s528 + $0x38] sm:$0xff]
      %v535 = vld [vmem:[%s528 + $0x48] sm:$0xff]
      %v536 = vld [vmem:[%s528 + $0x50] sm:$0xff]
      %v537 = vld [vmem:[%s528 + $0x60] sm:$0xff]
      %v538 = vld [vmem:[%s528 + $0x68] sm:$0xff]
      %v539 = vld [vmem:[%s528 + $0x78] sm:$0xff]
      %v540 = vld [vmem:[%s528 + $0x80] sm:$0xff]
      %v541 = vld [vmem:[%s528 + $0x90] sm:$0xff]
      %v542 = vld [vmem:[%s528 + $0x98] sm:$0xff]
      %v543 = vld [vmem:[%s528 + $0xa8] sm:$0xff]
      %v544 = vld [vmem:[%s528 + $0xb0] sm:$0xff]
      %v545 = vpack.c.bf16 %v530, %v529
      %v546 = vpack.c.bf16 %v532, %v531
      %v547 = vpack.c.bf16 %v534, %v533
      %v548 = vpack.c.bf16 %v536, %v535
      %v549 = vpack.c.bf16 %v538, %v537
      %v550 = vpack.c.bf16 %v540, %v539
      %v551 = vpack.c.bf16 %v542, %v541
      %v552 = vpack.c.bf16 %v544, %v543
      %v561 = vunpack.c.l.b16 %v545
      %v562 = vunpack.c.h.b16 %v545
      %v563 = vunpack.c.l.b16 %v546
      %v564 = vunpack.c.h.b16 %v546
      %v565 = vunpack.c.l.b16 %v547
      %v566 = vunpack.c.h.b16 %v547
      %v567 = vunpack.c.l.b16 %v548
      %v568 = vunpack.c.h.b16 %v548
      %v569 = vunpack.c.l.b16 %v549
      %v570 = vunpack.c.h.b16 %v549
      %v571 = vunpack.c.l.b16 %v550
      %v572 = vunpack.c.h.b16 %v550
      %v573 = vunpack.c.l.b16 %v551
      %v574 = vunpack.c.h.b16 %v551
      %v575 = vunpack.c.l.b16 %v552
      %v576 = vunpack.c.h.b16 %v552
      %v577 = vpack.c.b16 %v561, %v561
      %v578 = vpack.c.b16 %v562, %v562
      %v579 = vpack.c.b16 %v563, %v563
      %v580 = vpack.c.b16 %v564, %v564
      %v581 = vpack.c.b16 %v565, %v565
      %v582 = vpack.c.b16 %v566, %v566
      %v583 = vpack.c.b16 %v567, %v567
      %v584 = vpack.c.b16 %v568, %v568
      %v585 = vpack.c.b16 %v569, %v569
      %v586 = vpack.c.b16 %v570, %v570
      %v587 = vpack.c.b16 %v571, %v571
      %v588 = vpack.c.b16 %v572, %v572
      %v589 = vpack.c.b16 %v573, %v573
      %v590 = vpack.c.b16 %v574, %v574
      %v591 = vpack.c.b16 %v575, %v575
      %v592 = vpack.c.b16 %v576, %v576
      %609 = vst [vmem:[#allocation3] sm:$0xf] %v577
      %610 = vst [vmem:[#allocation3 + $0x24] sm:$0xf] %v578
      %611 = vst [vmem:[#allocation3 + $0x48] sm:$0xf] %v579
      %612 = vst [vmem:[#allocation3 + $0x6c] sm:$0xf] %v580
      %613 = vst [vmem:[#allocation3 + $0x90] sm:$0xf] %v581
      %614 = vst [vmem:[#allocation3 + $0xb4] sm:$0xf] %v582
      %615 = vst [vmem:[#allocation3 + $0xd8] sm:$0xf] %v583
      %616 = vst [vmem:[#allocation3 + $0xfc] sm:$0xf] %v584
      %617 = vst [vmem:[#allocation3 + $0x120] sm:$0xf] %v585
      %618 = vst [vmem:[#allocation3 + $0x144] sm:$0xf] %v586
      %619 = vst [vmem:[#allocation3 + $0x168] sm:$0xf] %v587
      %620 = vst [vmem:[#allocation3 + $0x18c] sm:$0xf] %v588
      %621 = vst [vmem:[#allocation3 + $0x1b0] sm:$0xf] %v589
      %622 = vst [vmem:[#allocation3 + $0x1d4] sm:$0xf] %v590
      %623 = vst [vmem:[#allocation3 + $0x1f8] sm:$0xf] %v591
      %624 = vst [vmem:[#allocation3 + $0x21c] sm:$0xf] %v592
      %v625 = vld [vmem:[%s528 + $0x1] sm:$0xff]
      %v626 = vld [vmem:[%s528 + $0x9] sm:$0xff]
      %v627 = vld [vmem:[%s528 + $0x19] sm:$0xff]
      %v628 = vld [vmem:[%s528 + $0x21] sm:$0xff]
      %v629 = vld [vmem:[%s528 + $0x31] sm:$0xff]
      %v630 = vld [vmem:[%s528 + $0x39] sm:$0xff]
      %v631 = vld [vmem:[%s528 + $0x49] sm:$0xff]
      %v632 = vld [vmem:[%s528 + $0x51] sm:$0xff]
      %v633 = vld [vmem:[%s528 + $0x61] sm:$0xff]
      %v634 = vld [vmem:[%s528 + $0x69] sm:$0xff]
      %v635 = vld [vmem:[%s528 + $0x79] sm:$0xff]
      %v636 = vld [vmem:[%s528 + $0x81] sm:$0xff]
      %v637 = vld [vmem:[%s528 + $0x91] sm:$0xff]
      %v638 = vld [vmem:[%s528 + $0x99] sm:$0xff]
      %v639 = vld [vmem:[%s528 + $0xa9] sm:$0xff]
      %v640 = vld [vmem:[%s528 + $0xb1] sm:$0xff]
      %v641 = vpack.c.bf16 %v626, %v625
      %v642 = vpack.c.bf16 %v628, %v627
      %v643 = vpack.c.bf16 %v630, %v629
      %v644 = vpack.c.bf16 %v632, %v631
      %v645 = vpack.c.bf16 %v634, %v633
      %v646 = vpack.c.bf16 %v636, %v635
      %v647 = vpack.c.bf16 %v638, %v637
      %v648 = vpack.c.bf16 %v640, %v639
      %v657 = vunpack.c.l.b16 %v641
      %v658 = vunpack.c.h.b16 %v641
      %v659 = vunpack.c.l.b16 %v642
      %v660 = vunpack.c.h.b16 %v642
      %v661 = vunpack.c.l.b16 %v643
      %v662 = vunpack.c.h.b16 %v643
      %v663 = vunpack.c.l.b16 %v644
      %v664 = vunpack.c.h.b16 %v644
      %v665 = vunpack.c.l.b16 %v645
      %v666 = vunpack.c.h.b16 %v645
      %v667 = vunpack.c.l.b16 %v646
      %v668 = vunpack.c.h.b16 %v646
      %v669 = vunpack.c.l.b16 %v647
      %v670 = vunpack.c.h.b16 %v647
      %v671 = vunpack.c.l.b16 %v648
      %v672 = vunpack.c.h.b16 %v648
      %v673 = vpack.c.b16 %v657, %v657
      %v674 = vpack.c.b16 %v658, %v658
      %v675 = vpack.c.b16 %v659, %v659
      %v676 = vpack.c.b16 %v660, %v660
      %v677 = vpack.c.b16 %v661, %v661
      %v678 = vpack.c.b16 %v662, %v662
      %v679 = vpack.c.b16 %v663, %v663
      %v680 = vpack.c.b16 %v664, %v664
      %v681 = vpack.c.b16 %v665, %v665
      %v682 = vpack.c.b16 %v666, %v666
      %v683 = vpack.c.b16 %v667, %v667
      %v684 = vpack.c.b16 %v668, %v668
      %v685 = vpack.c.b16 %v669, %v669
      %v686 = vpack.c.b16 %v670, %v670
      %v687 = vpack.c.b16 %v671, %v671
      %v688 = vpack.c.b16 %v672, %v672
      %705 = vst [vmem:[#allocation3 + $0x4] sm:$0xf] %v673
      %706 = vst [vmem:[#allocation3 + $0x28] sm:$0xf] %v674
      %707 = vst [vmem:[#allocation3 + $0x4c] sm:$0xf] %v675
      %708 = vst [vmem:[#allocation3 + $0x70] sm:$0xf] %v676
      %709 = vst [vmem:[#allocation3 + $0x94] sm:$0xf] %v677
      %710 = vst [vmem:[#allocation3 + $0xb8] sm:$0xf] %v678
      %711 = vst [vmem:[#allocation3 + $0xdc] sm:$0xf] %v679
      %712 = vst [vmem:[#allocation3 + $0x100] sm:$0xf] %v680
      %713 = vst [vmem:[#allocation3 + $0x124] sm:$0xf] %v681
      %714 = vst [vmem:[#allocation3 + $0x148] sm:$0xf] %v682
      %715 = vst [vmem:[#allocation3 + $0x16c] sm:$0xf] %v683
      %716 = vst [vmem:[#allocation3 + $0x190] sm:$0xf] %v684
      %717 = vst [vmem:[#allocation3 + $0x1b4] sm:$0xf] %v685
      %718 = vst [vmem:[#allocation3 + $0x1d8] sm:$0xf] %v686
      %719 = vst [vmem:[#allocation3 + $0x1fc] sm:$0xf] %v687
      %720 = vst [vmem:[#allocation3 + $0x220] sm:$0xf] %v688
      %v721 = vld [vmem:[%s528 + $0x2] sm:$0xff]
      %v722 = vld [vmem:[%s528 + $0xa] sm:$0xff]
      %v723 = vld [vmem:[%s528 + $0x1a] sm:$0xff]
      %v724 = vld [vmem:[%s528 + $0x22] sm:$0xff]
      %v725 = vld [vmem:[%s528 + $0x32] sm:$0xff]
      %v726 = vld [vmem:[%s528 + $0x3a] sm:$0xff]
      %v727 = vld [vmem:[%s528 + $0x4a] sm:$0xff]
      %v728 = vld [vmem:[%s528 + $0x52] sm:$0xff]
      %v729 = vld [vmem:[%s528 + $0x62] sm:$0xff]
      %v730 = vld [vmem:[%s528 + $0x6a] sm:$0xff]
      %v731 = vld [vmem:[%s528 + $0x7a] sm:$0xff]
      %v732 = vld [vmem:[%s528 + $0x82] sm:$0xff]
      %v733 = vld [vmem:[%s528 + $0x92] sm:$0xff]
      %v734 = vld [vmem:[%s528 + $0x9a] sm:$0xff]
      %v735 = vld [vmem:[%s528 + $0xaa] sm:$0xff]
      %v736 = vld [vmem:[%s528 + $0xb2] sm:$0xff]
      %v737 = vpack.c.bf16 %v722, %v721
      %v738 = vpack.c.bf16 %v724, %v723
      %v739 = vpack.c.bf16 %v726, %v725
      %v740 = vpack.c.bf16 %v728, %v727
      %v741 = vpack.c.bf16 %v730, %v729
      %v742 = vpack.c.bf16 %v732, %v731
      %v743 = vpack.c.bf16 %v734, %v733
      %v744 = vpack.c.bf16 %v736, %v735
      %v753 = vunpack.c.l.b16 %v737
      %v754 = vunpack.c.h.b16 %v737
      %v755 = vunpack.c.l.b16 %v738
      %v756 = vunpack.c.h.b16 %v738
      %v757 = vunpack.c.l.b16 %v739
      %v758 = vunpack.c.h.b16 %v739
      %v759 = vunpack.c.l.b16 %v740
      %v760 = vunpack.c.h.b16 %v740
      %v761 = vunpack.c.l.b16 %v741
      %v762 = vunpack.c.h.b16 %v741
      %v763 = vunpack.c.l.b16 %v742
      %v764 = vunpack.c.h.b16 %v742
      %v765 = vunpack.c.l.b16 %v743
      %v766 = vunpack.c.h.b16 %v743
      %v767 = vunpack.c.l.b16 %v744
      %v768 = vunpack.c.h.b16 %v744
      %v769 = vpack.c.b16 %v753, %v753
      %v770 = vpack.c.b16 %v754, %v754
      %v771 = vpack.c.b16 %v755, %v755
      %v772 = vpack.c.b16 %v756, %v756
      %v773 = vpack.c.b16 %v757, %v757
      %v774 = vpack.c.b16 %v758, %v758
      %v775 = vpack.c.b16 %v759, %v759
      %v776 = vpack.c.b16 %v760, %v760
      %v777 = vpack.c.b16 %v761, %v761
      %v778 = vpack.c.b16 %v762, %v762
      %v779 = vpack.c.b16 %v763, %v763
      %v780 = vpack.c.b16 %v764, %v764
      %v781 = vpack.c.b16 %v765, %v765
      %v782 = vpack.c.b16 %v766, %v766
      %v783 = vpack.c.b16 %v767, %v767
      %v784 = vpack.c.b16 %v768, %v768
      %801 = vst [vmem:[#allocation3 + $0x8] sm:$0xf] %v769
      %802 = vst [vmem:[#allocation3 + $0x2c] sm:$0xf] %v770
      %803 = vst [vmem:[#allocation3 + $0x50] sm:$0xf] %v771
      %804 = vst [vmem:[#allocation3 + $0x74] sm:$0xf] %v772
      %805 = vst [vmem:[#allocation3 + $0x98] sm:$0xf] %v773
      %806 = vst [vmem:[#allocation3 + $0xbc] sm:$0xf] %v774
      %807 = vst [vmem:[#allocation3 + $0xe0] sm:$0xf] %v775
      %808 = vst [vmem:[#allocation3 + $0x104] sm:$0xf] %v776
      %809 = vst [vmem:[#allocation3 + $0x128] sm:$0xf] %v777
      %810 = vst [vmem:[#allocation3 + $0x14c] sm:$0xf] %v778
      %811 = vst [vmem:[#allocation3 + $0x170] sm:$0xf] %v779
      %812 = vst [vmem:[#allocation3 + $0x194] sm:$0xf] %v780
      %813 = vst [vmem:[#allocation3 + $0x1b8] sm:$0xf] %v781
      %814 = vst [vmem:[#allocation3 + $0x1dc] sm:$0xf] %v782
      %815 = vst [vmem:[#allocation3 + $0x200] sm:$0xf] %v783
      %816 = vst [vmem:[#allocation3 + $0x224] sm:$0xf] %v784
      %s817 = sadd.s32 %s526, 1
      %s818 = smul.u32 %s817, 24
      %s819 = scalar_lea.vmem [#allocation2], %s818
      %v820 = vld [vmem:[%s819] sm:$0xff]
      %v821 = vld [vmem:[%s819 + $0x8] sm:$0xff]
      %v822 = vld [vmem:[%s819 + $0x18] sm:$0xff]
      %v823 = vld [vmem:[%s819 + $0x20] sm:$0xff]
      %v824 = vld [vmem:[%s819 + $0x30] sm:$0xff]
      %v825 = vld [vmem:[%s819 + $0x38] sm:$0xff]
      %v826 = vld [vmem:[%s819 + $0x48] sm:$0xff]
      %v827 = vld [vmem:[%s819 + $0x50] sm:$0xff]
      %v828 = vld [vmem:[%s819 + $0x60] sm:$0xff]
      %v829 = vld [vmem:[%s819 + $0x68] sm:$0xff]
      %v830 = vld [vmem:[%s819 + $0x78] sm:$0xff]
      %v831 = vld [vmem:[%s819 + $0x80] sm:$0xff]
      %v832 = vld [vmem:[%s819 + $0x90] sm:$0xff]
      %v833 = vld [vmem:[%s819 + $0x98] sm:$0xff]
      %v834 = vld [vmem:[%s819 + $0xa8] sm:$0xff]
      %v835 = vld [vmem:[%s819 + $0xb0] sm:$0xff]
      %v836 = vpack.c.bf16 %v821, %v820
      %v837 = vpack.c.bf16 %v823, %v822
      %v838 = vpack.c.bf16 %v825, %v824
      %v839 = vpack.c.bf16 %v827, %v826
      %v840 = vpack.c.bf16 %v829, %v828
      %v841 = vpack.c.bf16 %v831, %v830
      %v842 = vpack.c.bf16 %v833, %v832
      %v843 = vpack.c.bf16 %v835, %v834
      %v852 = vunpack.c.l.b16 %v836
      %v853 = vunpack.c.h.b16 %v836
      %v854 = vunpack.c.l.b16 %v837
      %v855 = vunpack.c.h.b16 %v837
      %v856 = vunpack.c.l.b16 %v838
      %v857 = vunpack.c.h.b16 %v838
      %v858 = vunpack.c.l.b16 %v839
      %v859 = vunpack.c.h.b16 %v839
      %v860 = vunpack.c.l.b16 %v840
      %v861 = vunpack.c.h.b16 %v840
      %v862 = vunpack.c.l.b16 %v841
      %v863 = vunpack.c.h.b16 %v841
      %v864 = vunpack.c.l.b16 %v842
      %v865 = vunpack.c.h.b16 %v842
      %v866 = vunpack.c.l.b16 %v843
      %v867 = vunpack.c.h.b16 %v843
      %v868 = vpack.c.b16 %v852, %v852
      %v869 = vpack.c.b16 %v853, %v853
      %v870 = vpack.c.b16 %v854, %v854
      %v871 = vpack.c.b16 %v855, %v855
      %v872 = vpack.c.b16 %v856, %v856
      %v873 = vpack.c.b16 %v857, %v857
      %v874 = vpack.c.b16 %v858, %v858
      %v875 = vpack.c.b16 %v859, %v859
      %v876 = vpack.c.b16 %v860, %v860
      %v877 = vpack.c.b16 %v861, %v861
      %v878 = vpack.c.b16 %v862, %v862
      %v879 = vpack.c.b16 %v863, %v863
      %v880 = vpack.c.b16 %v864, %v864
      %v881 = vpack.c.b16 %v865, %v865
      %v882 = vpack.c.b16 %v866, %v866
      %v883 = vpack.c.b16 %v867, %v867
      %900 = vst [vmem:[#allocation3 + $0xc] sm:$0xf] %v868
      %901 = vst [vmem:[#allocation3 + $0x30] sm:$0xf] %v869
      %902 = vst [vmem:[#allocation3 + $0x54] sm:$0xf] %v870
      %903 = vst [vmem:[#allocation3 + $0x78] sm:$0xf] %v871
      %904 = vst [vmem:[#allocation3 + $0x9c] sm:$0xf] %v872
      %905 = vst [vmem:[#allocation3 + $0xc0] sm:$0xf] %v873
      %906 = vst [vmem:[#allocation3 + $0xe4] sm:$0xf] %v874
      %907 = vst [vmem:[#allocation3 + $0x108] sm:$0xf] %v875
      %908 = vst [vmem:[#allocation3 + $0x12c] sm:$0xf] %v876
      %909 = vst [vmem:[#allocation3 + $0x150] sm:$0xf] %v877
      %910 = vst [vmem:[#allocation3 + $0x174] sm:$0xf] %v878
      %911 = vst [vmem:[#allocation3 + $0x198] sm:$0xf] %v879
      %912 = vst [vmem:[#allocation3 + $0x1bc] sm:$0xf] %v880
      %913 = vst [vmem:[#allocation3 + $0x1e0] sm:$0xf] %v881
      %914 = vst [vmem:[#allocation3 + $0x204] sm:$0xf] %v882
      %915 = vst [vmem:[#allocation3 + $0x228] sm:$0xf] %v883
      %v916 = vld [vmem:[%s819 + $0x1] sm:$0xff]
      %v917 = vld [vmem:[%s819 + $0x9] sm:$0xff]
      %v918 = vld [vmem:[%s819 + $0x19] sm:$0xff]
      %v919 = vld [vmem:[%s819 + $0x21] sm:$0xff]
      %v920 = vld [vmem:[%s819 + $0x31] sm:$0xff]
      %v921 = vld [vmem:[%s819 + $0x39] sm:$0xff]
      %v922 = vld [vmem:[%s819 + $0x49] sm:$0xff]
      %v923 = vld [vmem:[%s819 + $0x51] sm:$0xff]
      %v924 = vld [vmem:[%s819 + $0x61] sm:$0xff]
      %v925 = vld [vmem:[%s819 + $0x69] sm:$0xff]
      %v926 = vld [vmem:[%s819 + $0x79] sm:$0xff]
      %v927 = vld [vmem:[%s819 + $0x81] sm:$0xff]
      %v928 = vld [vmem:[%s819 + $0x91] sm:$0xff]
      %v929 = vld [vmem:[%s819 + $0x99] sm:$0xff]
      %v930 = vld [vmem:[%s819 + $0xa9] sm:$0xff]
      %v931 = vld [vmem:[%s819 + $0xb1] sm:$0xff]
      %v932 = vpack.c.bf16 %v917, %v916
      %v933 = vpack.c.bf16 %v919, %v918
      %v934 = vpack.c.bf16 %v921, %v920
      %v935 = vpack.c.bf16 %v923, %v922
      %v936 = vpack.c.bf16 %v925, %v924
      %v937 = vpack.c.bf16 %v927, %v926
      %v938 = vpack.c.bf16 %v929, %v928
      %v939 = vpack.c.bf16 %v931, %v930
      %v948 = vunpack.c.l.b16 %v932
      %v949 = vunpack.c.h.b16 %v932
      %v950 = vunpack.c.l.b16 %v933
      %v951 = vunpack.c.h.b16 %v933
      %v952 = vunpack.c.l.b16 %v934
      %v953 = vunpack.c.h.b16 %v934
      %v954 = vunpack.c.l.b16 %v935
      %v955 = vunpack.c.h.b16 %v935
      %v956 = vunpack.c.l.b16 %v936
      %v957 = vunpack.c.h.b16 %v936
      %v958 = vunpack.c.l.b16 %v937
      %v959 = vunpack.c.h.b16 %v937
      %v960 = vunpack.c.l.b16 %v938
      %v961 = vunpack.c.h.b16 %v938
      %v962 = vunpack.c.l.b16 %v939
      %v963 = vunpack.c.h.b16 %v939
      %v964 = vpack.c.b16 %v948, %v948
      %v965 = vpack.c.b16 %v949, %v949
      %v966 = vpack.c.b16 %v950, %v950
      %v967 = vpack.c.b16 %v951, %v951
      %v968 = vpack.c.b16 %v952, %v952
      %v969 = vpack.c.b16 %v953, %v953
      %v970 = vpack.c.b16 %v954, %v954
      %v971 = vpack.c.b16 %v955, %v955
      %v972 = vpack.c.b16 %v956, %v956
      %v973 = vpack.c.b16 %v957, %v957
      %v974 = vpack.c.b16 %v958, %v958
      %v975 = vpack.c.b16 %v959, %v959
      %v976 = vpack.c.b16 %v960, %v960
      %v977 = vpack.c.b16 %v961, %v961
      %v978 = vpack.c.b16 %v962, %v962
      %v979 = vpack.c.b16 %v963, %v963
      %996 = vst [vmem:[#allocation3 + $0x10] sm:$0xf] %v964
      %997 = vst [vmem:[#allocation3 + $0x34] sm:$0xf] %v965
      %998 = vst [vmem:[#allocation3 + $0x58] sm:$0xf] %v966
      %999 = vst [vmem:[#allocation3 + $0x7c] sm:$0xf] %v967
      %1000 = vst [vmem:[#allocation3 + $0xa0] sm:$0xf] %v968
      %1001 = vst [vmem:[#allocation3 + $0xc4] sm:$0xf] %v969
      %1002 = vst [vmem:[#allocation3 + $0xe8] sm:$0xf] %v970
      %1003 = vst [vmem:[#allocation3 + $0x10c] sm:$0xf] %v971
      %1004 = vst [vmem:[#allocation3 + $0x130] sm:$0xf] %v972
      %1005 = vst [vmem:[#allocation3 + $0x154] sm:$0xf] %v973
      %1006 = vst [vmem:[#allocation3 + $0x178] sm:$0xf] %v974
      %1007 = vst [vmem:[#allocation3 + $0x19c] sm:$0xf] %v975
      %1008 = vst [vmem:[#allocation3 + $0x1c0] sm:$0xf] %v976
      %1009 = vst [vmem:[#allocation3 + $0x1e4] sm:$0xf] %v977
      %1010 = vst [vmem:[#allocation3 + $0x208] sm:$0xf] %v978
      %1011 = vst [vmem:[#allocation3 + $0x22c] sm:$0xf] %v979
      %v1012 = vld [vmem:[%s819 + $0x2] sm:$0xff]
      %v1013 = vld [vmem:[%s819 + $0xa] sm:$0xff]
      %v1014 = vld [vmem:[%s819 + $0x1a] sm:$0xff]
      %v1015 = vld [vmem:[%s819 + $0x22] sm:$0xff]
      %v1016 = vld [vmem:[%s819 + $0x32] sm:$0xff]
      %v1017 = vld [vmem:[%s819 + $0x3a] sm:$0xff]
      %v1018 = vld [vmem:[%s819 + $0x4a] sm:$0xff]
      %v1019 = vld [vmem:[%s819 + $0x52] sm:$0xff]
      %v1020 = vld [vmem:[%s819 + $0x62] sm:$0xff]
      %v1021 = vld [vmem:[%s819 + $0x6a] sm:$0xff]
      %v1022 = vld [vmem:[%s819 + $0x7a] sm:$0xff]
      %v1023 = vld [vmem:[%s819 + $0x82] sm:$0xff]
      %v1024 = vld [vmem:[%s819 + $0x92] sm:$0xff]
      %v1025 = vld [vmem:[%s819 + $0x9a] sm:$0xff]
      %v1026 = vld [vmem:[%s819 + $0xaa] sm:$0xff]
      %v1027 = vld [vmem:[%s819 + $0xb2] sm:$0xff]
      %v1028 = vpack.c.bf16 %v1013, %v1012
      %v1029 = vpack.c.bf16 %v1015, %v1014
      %v1030 = vpack.c.bf16 %v1017, %v1016
      %v1031 = vpack.c.bf16 %v1019, %v1018
      %v1032 = vpack.c.bf16 %v1021, %v1020
      %v1033 = vpack.c.bf16 %v1023, %v1022
      %v1034 = vpack.c.bf16 %v1025, %v1024
      %v1035 = vpack.c.bf16 %v1027, %v1026
      %v1044 = vunpack.c.l.b16 %v1028
      %v1045 = vunpack.c.h.b16 %v1028
      %v1046 = vunpack.c.l.b16 %v1029
      %v1047 = vunpack.c.h.b16 %v1029
      %v1048 = vunpack.c.l.b16 %v1030
      %v1049 = vunpack.c.h.b16 %v1030
      %v1050 = vunpack.c.l.b16 %v1031
      %v1051 = vunpack.c.h.b16 %v1031
      %v1052 = vunpack.c.l.b16 %v1032
      %v1053 = vunpack.c.h.b16 %v1032
      %v1054 = vunpack.c.l.b16 %v1033
      %v1055 = vunpack.c.h.b16 %v1033
      %v1056 = vunpack.c.l.b16 %v1034
      %v1057 = vunpack.c.h.b16 %v1034
      %v1058 = vunpack.c.l.b16 %v1035
      %v1059 = vunpack.c.h.b16 %v1035
      %v1060 = vpack.c.b16 %v1044, %v1044
      %v1061 = vpack.c.b16 %v1045, %v1045
      %v1062 = vpack.c.b16 %v1046, %v1046
      %v1063 = vpack.c.b16 %v1047, %v1047
      %v1064 = vpack.c.b16 %v1048, %v1048
      %v1065 = vpack.c.b16 %v1049, %v1049
      %v1066 = vpack.c.b16 %v1050, %v1050
      %v1067 = vpack.c.b16 %v1051, %v1051
      %v1068 = vpack.c.b16 %v1052, %v1052
      %v1069 = vpack.c.b16 %v1053, %v1053
      %v1070 = vpack.c.b16 %v1054, %v1054
      %v1071 = vpack.c.b16 %v1055, %v1055
      %v1072 = vpack.c.b16 %v1056, %v1056
      %v1073 = vpack.c.b16 %v1057, %v1057
      %v1074 = vpack.c.b16 %v1058, %v1058
      %v1075 = vpack.c.b16 %v1059, %v1059
      %1092 = vst [vmem:[#allocation3 + $0x14] sm:$0xf] %v1060
      %1093 = vst [vmem:[#allocation3 + $0x38] sm:$0xf] %v1061
      %1094 = vst [vmem:[#allocation3 + $0x5c] sm:$0xf] %v1062
      %1095 = vst [vmem:[#allocation3 + $0x80] sm:$0xf] %v1063
      %1096 = vst [vmem:[#allocation3 + $0xa4] sm:$0xf] %v1064
      %1097 = vst [vmem:[#allocation3 + $0xc8] sm:$0xf] %v1065
      %1098 = vst [vmem:[#allocation3 + $0xec] sm:$0xf] %v1066
      %1099 = vst [vmem:[#allocation3 + $0x110] sm:$0xf] %v1067
      %1100 = vst [vmem:[#allocation3 + $0x134] sm:$0xf] %v1068
      %1101 = vst [vmem:[#allocation3 + $0x158] sm:$0xf] %v1069
      %1102 = vst [vmem:[#allocation3 + $0x17c] sm:$0xf] %v1070
      %1103 = vst [vmem:[#allocation3 + $0x1a0] sm:$0xf] %v1071
      %1104 = vst [vmem:[#allocation3 + $0x1c4] sm:$0xf] %v1072
      %1105 = vst [vmem:[#allocation3 + $0x1e8] sm:$0xf] %v1073
      %1106 = vst [vmem:[#allocation3 + $0x20c] sm:$0xf] %v1074
      %1107 = vst [vmem:[#allocation3 + $0x230] sm:$0xf] %v1075
      %s1108 = sadd.s32 %s526, 2
      %s1109 = smul.u32 %s1108, 24
      %s1110 = scalar_lea.vmem [#allocation2], %s1109
      %v1111 = vld [vmem:[%s1110] sm:$0xff]
      %v1112 = vld [vmem:[%s1110 + $0x8] sm:$0xff]
      %v1113 = vld [vmem:[%s1110 + $0x18] sm:$0xff]
      %v1114 = vld [vmem:[%s1110 + $0x20] sm:$0xff]
      %v1115 = vld [vmem:[%s1110 + $0x30] sm:$0xff]
      %v1116 = vld [vmem:[%s1110 + $0x38] sm:$0xff]
      %v1117 = vld [vmem:[%s1110 + $0x48] sm:$0xff]
      %v1118 = vld [vmem:[%s1110 + $0x50] sm:$0xff]
      %v1119 = vld [vmem:[%s1110 + $0x60] sm:$0xff]
      %v1120 = vld [vmem:[%s1110 + $0x68] sm:$0xff]
      %v1121 = vld [vmem:[%s1110 + $0x78] sm:$0xff]
      %v1122 = vld [vmem:[%s1110 + $0x80] sm:$0xff]
      %v1123 = vld [vmem:[%s1110 + $0x90] sm:$0xff]
      %v1124 = vld [vmem:[%s1110 + $0x98] sm:$0xff]
      %v1125 = vld [vmem:[%s1110 + $0xa8] sm:$0xff]
      %v1126 = vld [vmem:[%s1110 + $0xb0] sm:$0xff]
      %v1127 = vpack.c.bf16 %v1112, %v1111
      %v1128 = vpack.c.bf16 %v1114, %v1113
      %v1129 = vpack.c.bf16 %v1116, %v1115
      %v1130 = vpack.c.bf16 %v1118, %v1117
      %v1131 = vpack.c.bf16 %v1120, %v1119
      %v1132 = vpack.c.bf16 %v1122, %v1121
      %v1133 = vpack.c.bf16 %v1124, %v1123
      %v1134 = vpack.c.bf16 %v1126, %v1125
      %v1143 = vunpack.c.l.b16 %v1127
      %v1144 = vunpack.c.h.b16 %v1127
      %v1145 = vunpack.c.l.b16 %v1128
      %v1146 = vunpack.c.h.b16 %v1128
      %v1147 = vunpack.c.l.b16 %v1129
      %v1148 = vunpack.c.h.b16 %v1129
      %v1149 = vunpack.c.l.b16 %v1130
      %v1150 = vunpack.c.h.b16 %v1130
      %v1151 = vunpack.c.l.b16 %v1131
      %v1152 = vunpack.c.h.b16 %v1131
      %v1153 = vunpack.c.l.b16 %v1132
      %v1154 = vunpack.c.h.b16 %v1132
      %v1155 = vunpack.c.l.b16 %v1133
      %v1156 = vunpack.c.h.b16 %v1133
      %v1157 = vunpack.c.l.b16 %v1134
      %v1158 = vunpack.c.h.b16 %v1134
      %v1159 = vpack.c.b16 %v1143, %v1143
      %v1160 = vpack.c.b16 %v1144, %v1144
      %v1161 = vpack.c.b16 %v1145, %v1145
      %v1162 = vpack.c.b16 %v1146, %v1146
      %v1163 = vpack.c.b16 %v1147, %v1147
      %v1164 = vpack.c.b16 %v1148, %v1148
      %v1165 = vpack.c.b16 %v1149, %v1149
      %v1166 = vpack.c.b16 %v1150, %v1150
      %v1167 = vpack.c.b16 %v1151, %v1151
      %v1168 = vpack.c.b16 %v1152, %v1152
      %v1169 = vpack.c.b16 %v1153, %v1153
      %v1170 = vpack.c.b16 %v1154, %v1154
      %v1171 = vpack.c.b16 %v1155, %v1155
      %v1172 = vpack.c.b16 %v1156, %v1156
      %v1173 = vpack.c.b16 %v1157, %v1157
      %v1174 = vpack.c.b16 %v1158, %v1158
      %1191 = vst [vmem:[#allocation3 + $0x18] sm:$0xf] %v1159
      %1192 = vst [vmem:[#allocation3 + $0x3c] sm:$0xf] %v1160
      %1193 = vst [vmem:[#allocation3 + $0x60] sm:$0xf] %v1161
      %1194 = vst [vmem:[#allocation3 + $0x84] sm:$0xf] %v1162
      %1195 = vst [vmem:[#allocation3 + $0xa8] sm:$0xf] %v1163
      %1196 = vst [vmem:[#allocation3 + $0xcc] sm:$0xf] %v1164
      %1197 = vst [vmem:[#allocation3 + $0xf0] sm:$0xf] %v1165
      %1198 = vst [vmem:[#allocation3 + $0x114] sm:$0xf] %v1166
      %1199 = vst [vmem:[#allocation3 + $0x138] sm:$0xf] %v1167
      %1200 = vst [vmem:[#allocation3 + $0x15c] sm:$0xf] %v1168
      %1201 = vst [vmem:[#allocation3 + $0x180] sm:$0xf] %v1169
      %1202 = vst [vmem:[#allocation3 + $0x1a4] sm:$0xf] %v1170
      %1203 = vst [vmem:[#allocation3 + $0x1c8] sm:$0xf] %v1171
      %1204 = vst [vmem:[#allocation3 + $0x1ec] sm:$0xf] %v1172
      %1205 = vst [vmem:[#allocation3 + $0x210] sm:$0xf] %v1173
      %1206 = vst [vmem:[#allocation3 + $0x234] sm:$0xf] %v1174
      %v1207 = vld [vmem:[%s1110 + $0x1] sm:$0xff]
      %v1208 = vld [vmem:[%s1110 + $0x9] sm:$0xff]
      %v1209 = vld [vmem:[%s1110 + $0x19] sm:$0xff]
      %v1210 = vld [vmem:[%s1110 + $0x21] sm:$0xff]
      %v1211 = vld [vmem:[%s1110 + $0x31] sm:$0xff]
      %v1212 = vld [vmem:[%s1110 + $0x39] sm:$0xff]
      %v1213 = vld [vmem:[%s1110 + $0x49] sm:$0xff]
      %v1214 = vld [vmem:[%s1110 + $0x51] sm:$0xff]
      %v1215 = vld [vmem:[%s1110 + $0x61] sm:$0xff]
      %v1216 = vld [vmem:[%s1110 + $0x69] sm:$0xff]
      %v1217 = vld [vmem:[%s1110 + $0x79] sm:$0xff]
      %v1218 = vld [vmem:[%s1110 + $0x81] sm:$0xff]
      %v1219 = vld [vmem:[%s1110 + $0x91] sm:$0xff]
      %v1220 = vld [vmem:[%s1110 + $0x99] sm:$0xff]
      %v1221 = vld [vmem:[%s1110 + $0xa9] sm:$0xff]
      %v1222 = vld [vmem:[%s1110 + $0xb1] sm:$0xff]
      %v1223 = vpack.c.bf16 %v1208, %v1207
      %v1224 = vpack.c.bf16 %v1210, %v1209
      %v1225 = vpack.c.bf16 %v1212, %v1211
      %v1226 = vpack.c.bf16 %v1214, %v1213
      %v1227 = vpack.c.bf16 %v1216, %v1215
      %v1228 = vpack.c.bf16 %v1218, %v1217
      %v1229 = vpack.c.bf16 %v1220, %v1219
      %v1230 = vpack.c.bf16 %v1222, %v1221
      %v1239 = vunpack.c.l.b16 %v1223
      %v1240 = vunpack.c.h.b16 %v1223
      %v1241 = vunpack.c.l.b16 %v1224
      %v1242 = vunpack.c.h.b16 %v1224
      %v1243 = vunpack.c.l.b16 %v1225
      %v1244 = vunpack.c.h.b16 %v1225
      %v1245 = vunpack.c.l.b16 %v1226
      %v1246 = vunpack.c.h.b16 %v1226
      %v1247 = vunpack.c.l.b16 %v1227
      %v1248 = vunpack.c.h.b16 %v1227
      %v1249 = vunpack.c.l.b16 %v1228
      %v1250 = vunpack.c.h.b16 %v1228
      %v1251 = vunpack.c.l.b16 %v1229
      %v1252 = vunpack.c.h.b16 %v1229
      %v1253 = vunpack.c.l.b16 %v1230
      %v1254 = vunpack.c.h.b16 %v1230
      %v1255 = vpack.c.b16 %v1239, %v1239
      %v1256 = vpack.c.b16 %v1240, %v1240
      %v1257 = vpack.c.b16 %v1241, %v1241
      %v1258 = vpack.c.b16 %v1242, %v1242
      %v1259 = vpack.c.b16 %v1243, %v1243
      %v1260 = vpack.c.b16 %v1244, %v1244
      %v1261 = vpack.c.b16 %v1245, %v1245
      %v1262 = vpack.c.b16 %v1246, %v1246
      %v1263 = vpack.c.b16 %v1247, %v1247
      %v1264 = vpack.c.b16 %v1248, %v1248
      %v1265 = vpack.c.b16 %v1249, %v1249
      %v1266 = vpack.c.b16 %v1250, %v1250
      %v1267 = vpack.c.b16 %v1251, %v1251
      %v1268 = vpack.c.b16 %v1252, %v1252
      %v1269 = vpack.c.b16 %v1253, %v1253
      %v1270 = vpack.c.b16 %v1254, %v1254
      %1287 = vst [vmem:[#allocation3 + $0x1c] sm:$0xf] %v1255
      %1288 = vst [vmem:[#allocation3 + $0x40] sm:$0xf] %v1256
      %1289 = vst [vmem:[#allocation3 + $0x64] sm:$0xf] %v1257
      %1290 = vst [vmem:[#allocation3 + $0x88] sm:$0xf] %v1258
      %1291 = vst [vmem:[#allocation3 + $0xac] sm:$0xf] %v1259
      %1292 = vst [vmem:[#allocation3 + $0xd0] sm:$0xf] %v1260
      %1293 = vst [vmem:[#allocation3 + $0xf4] sm:$0xf] %v1261
      %1294 = vst [vmem:[#allocation3 + $0x118] sm:$0xf] %v1262
      %1295 = vst [vmem:[#allocation3 + $0x13c] sm:$0xf] %v1263
      %1296 = vst [vmem:[#allocation3 + $0x160] sm:$0xf] %v1264
      %1297 = vst [vmem:[#allocation3 + $0x184] sm:$0xf] %v1265
      %1298 = vst [vmem:[#allocation3 + $0x1a8] sm:$0xf] %v1266
      %1299 = vst [vmem:[#allocation3 + $0x1cc] sm:$0xf] %v1267
      %1300 = vst [vmem:[#allocation3 + $0x1f0] sm:$0xf] %v1268
      %1301 = vst [vmem:[#allocation3 + $0x214] sm:$0xf] %v1269
      %1302 = vst [vmem:[#allocation3 + $0x238] sm:$0xf] %v1270
      %v1303 = vld [vmem:[%s1110 + $0x2] sm:$0xff]
      %v1304 = vld [vmem:[%s1110 + $0xa] sm:$0xff]
      %v1305 = vld [vmem:[%s1110 + $0x1a] sm:$0xff]
      %v1306 = vld [vmem:[%s1110 + $0x22] sm:$0xff]
      %v1307 = vld [vmem:[%s1110 + $0x32] sm:$0xff]
      %v1308 = vld [vmem:[%s1110 + $0x3a] sm:$0xff]
      %v1309 = vld [vmem:[%s1110 + $0x4a] sm:$0xff]
      %v1310 = vld [vmem:[%s1110 + $0x52] sm:$0xff]
      %v1311 = vld [vmem:[%s1110 + $0x62] sm:$0xff]
      %v1312 = vld [vmem:[%s1110 + $0x6a] sm:$0xff]
      %v1313 = vld [vmem:[%s1110 + $0x7a] sm:$0xff]
      %v1314 = vld [vmem:[%s1110 + $0x82] sm:$0xff]
      %v1315 = vld [vmem:[%s1110 + $0x92] sm:$0xff]
      %v1316 = vld [vmem:[%s1110 + $0x9a] sm:$0xff]
      %v1317 = vld [vmem:[%s1110 + $0xaa] sm:$0xff]
      %v1318 = vld [vmem:[%s1110 + $0xb2] sm:$0xff]
      %v1319 = vpack.c.bf16 %v1304, %v1303
      %v1320 = vpack.c.bf16 %v1306, %v1305
      %v1321 = vpack.c.bf16 %v1308, %v1307
      %v1322 = vpack.c.bf16 %v1310, %v1309
      %v1323 = vpack.c.bf16 %v1312, %v1311
      %v1324 = vpack.c.bf16 %v1314, %v1313
      %v1325 = vpack.c.bf16 %v1316, %v1315
      %v1326 = vpack.c.bf16 %v1318, %v1317
      %v1335 = vunpack.c.l.b16 %v1319
      %v1336 = vunpack.c.h.b16 %v1319
      %v1337 = vunpack.c.l.b16 %v1320
      %v1338 = vunpack.c.h.b16 %v1320
      %v1339 = vunpack.c.l.b16 %v1321
      %v1340 = vunpack.c.h.b16 %v1321
      %v1341 = vunpack.c.l.b16 %v1322
      %v1342 = vunpack.c.h.b16 %v1322
      %v1343 = vunpack.c.l.b16 %v1323
      %v1344 = vunpack.c.h.b16 %v1323
      %v1345 = vunpack.c.l.b16 %v1324
      %v1346 = vunpack.c.h.b16 %v1324
      %v1347 = vunpack.c.l.b16 %v1325
      %v1348 = vunpack.c.h.b16 %v1325
      %v1349 = vunpack.c.l.b16 %v1326
      %v1350 = vunpack.c.h.b16 %v1326
      %v1351 = vpack.c.b16 %v1335, %v1335
      %v1352 = vpack.c.b16 %v1336, %v1336
      %v1353 = vpack.c.b16 %v1337, %v1337
      %v1354 = vpack.c.b16 %v1338, %v1338
      %v1355 = vpack.c.b16 %v1339, %v1339
      %v1356 = vpack.c.b16 %v1340, %v1340
      %v1357 = vpack.c.b16 %v1341, %v1341
      %v1358 = vpack.c.b16 %v1342, %v1342
      %v1359 = vpack.c.b16 %v1343, %v1343
      %v1360 = vpack.c.b16 %v1344, %v1344
      %v1361 = vpack.c.b16 %v1345, %v1345
      %v1362 = vpack.c.b16 %v1346, %v1346
      %v1363 = vpack.c.b16 %v1347, %v1347
      %v1364 = vpack.c.b16 %v1348, %v1348
      %v1365 = vpack.c.b16 %v1349, %v1349
      %v1366 = vpack.c.b16 %v1350, %v1350
      %1383 = vst [vmem:[#allocation3 + $0x20] sm:$0xf] %v1351
      %1384 = vst [vmem:[#allocation3 + $0x44] sm:$0xf] %v1352
      %1385 = vst [vmem:[#allocation3 + $0x68] sm:$0xf] %v1353
      %1386 = vst [vmem:[#allocation3 + $0x8c] sm:$0xf] %v1354
      %1387 = vst [vmem:[#allocation3 + $0xb0] sm:$0xf] %v1355
      %1388 = vst [vmem:[#allocation3 + $0xd4] sm:$0xf] %v1356
      %1389 = vst [vmem:[#allocation3 + $0xf8] sm:$0xf] %v1357
      %1390 = vst [vmem:[#allocation3 + $0x11c] sm:$0xf] %v1358
      %1391 = vst [vmem:[#allocation3 + $0x140] sm:$0xf] %v1359
      %1392 = vst [vmem:[#allocation3 + $0x164] sm:$0xf] %v1360
      %1393 = vst [vmem:[#allocation3 + $0x188] sm:$0xf] %v1361
      %1394 = vst [vmem:[#allocation3 + $0x1ac] sm:$0xf] %v1362
      %1395 = vst [vmem:[#allocation3 + $0x1d0] sm:$0xf] %v1363
      %1396 = vst [vmem:[#allocation3 + $0x1f4] sm:$0xf] %v1364
      %1397 = vst [vmem:[#allocation3 + $0x218] sm:$0xf] %v1365
      %1398 = vst [vmem:[#allocation3 + $0x23c] sm:$0xf] %v1366
      %v1399 = vld [vmem:[#allocation3] sm:$0xff]
      %v1400 = vld [vmem:[#allocation3 + $0x8] sm:$0xff]
      %v1401 = vld [vmem:[#allocation3 + $0x10] sm:$0xff]
      %v1402 = vld [vmem:[#allocation3 + $0x18] sm:$0xff]
      %v1403 = vld [vmem:[#allocation3 + $0x20] sm:$0xf]
      %v1404 = vld [vmem:[#allocation3 + $0x24] sm:$0xff]
      %v1405 = vld [vmem:[#allocation3 + $0x2c] sm:$0xff]
      %v1406 = vld [vmem:[#allocation3 + $0x34] sm:$0xff]
      %v1407 = vld [vmem:[#allocation3 + $0x3c] sm:$0xff]
      %v1408 = vld [vmem:[#allocation3 + $0x44] sm:$0xf]
      %v1409 = vld [vmem:[#allocation3 + $0x48] sm:$0xff]
      %v1410 = vld [vmem:[#allocation3 + $0x50] sm:$0xff]
      %v1411 = vld [vmem:[#allocation3 + $0x58] sm:$0xff]
      %v1412 = vld [vmem:[#allocation3 + $0x60] sm:$0xff]
      %v1413 = vld [vmem:[#allocation3 + $0x68] sm:$0xf]
      %v1414 = vld [vmem:[#allocation3 + $0x6c] sm:$0xff]
      %v1415 = vld [vmem:[#allocation3 + $0x74] sm:$0xff]
      %v1416 = vld [vmem:[#allocation3 + $0x7c] sm:$0xff]
      %v1417 = vld [vmem:[#allocation3 + $0x84] sm:$0xff]
      %v1418 = vld [vmem:[#allocation3 + $0x8c] sm:$0xf]
      %v1419 = vld [vmem:[#allocation3 + $0x90] sm:$0xff]
      %v1420 = vld [vmem:[#allocation3 + $0x98] sm:$0xff]
      %v1421 = vld [vmem:[#allocation3 + $0xa0] sm:$0xff]
      %v1422 = vld [vmem:[#allocation3 + $0xa8] sm:$0xff]
      %v1423 = vld [vmem:[#allocation3 + $0xb0] sm:$0xf]
      %v1424 = vld [vmem:[#allocation3 + $0xb4] sm:$0xff]
      %v1425 = vld [vmem:[#allocation3 + $0xbc] sm:$0xff]
      %v1426 = vld [vmem:[#allocation3 + $0xc4] sm:$0xff]
      %v1427 = vld [vmem:[#allocation3 + $0xcc] sm:$0xff]
      %v1428 = vld [vmem:[#allocation3 + $0xd4] sm:$0xf]
      %v1429 = vld [vmem:[#allocation3 + $0xd8] sm:$0xff]
      %v1430 = vld [vmem:[#allocation3 + $0xe0] sm:$0xff]
      %v1431 = vld [vmem:[#allocation3 + $0xe8] sm:$0xff]
      %v1432 = vld [vmem:[#allocation3 + $0xf0] sm:$0xff]
      %v1433 = vld [vmem:[#allocation3 + $0xf8] sm:$0xf]
      %v1434 = vld [vmem:[#allocation3 + $0xfc] sm:$0xff]
      %v1435 = vld [vmem:[#allocation3 + $0x104] sm:$0xff]
      %v1436 = vld [vmem:[#allocation3 + $0x10c] sm:$0xff]
      %v1437 = vld [vmem:[#allocation3 + $0x114] sm:$0xff]
      %v1438 = vld [vmem:[#allocation3 + $0x11c] sm:$0xf]
      %v1439 = vld [vmem:[#allocation3 + $0x120] sm:$0xff]
      %v1440 = vld [vmem:[#allocation3 + $0x128] sm:$0xff]
      %v1441 = vld [vmem:[#allocation3 + $0x130] sm:$0xff]
      %v1442 = vld [vmem:[#allocation3 + $0x138] sm:$0xff]
      %v1443 = vld [vmem:[#allocation3 + $0x140] sm:$0xf]
      %v1444 = vld [vmem:[#allocation3 + $0x144] sm:$0xff]
      %v1445 = vld [vmem:[#allocation3 + $0x14c] sm:$0xff]
      %v1446 = vld [vmem:[#allocation3 + $0x154] sm:$0xff]
      %v1447 = vld [vmem:[#allocation3 + $0x15c] sm:$0xff]
      %v1448 = vld [vmem:[#allocation3 + $0x164] sm:$0xf]
      %v1449 = vld [vmem:[#allocation3 + $0x168] sm:$0xff]
      %v1450 = vld [vmem:[#allocation3 + $0x170] sm:$0xff]
      %v1451 = vld [vmem:[#allocation3 + $0x178] sm:$0xff]
      %v1452 = vld [vmem:[#allocation3 + $0x180] sm:$0xff]
      %v1453 = vld [vmem:[#allocation3 + $0x188] sm:$0xf]
      %v1454 = vld [vmem:[#allocation3 + $0x18c] sm:$0xff]
      %v1455 = vld [vmem:[#allocation3 + $0x194] sm:$0xff]
      %v1456 = vld [vmem:[#allocation3 + $0x19c] sm:$0xff]
      %v1457 = vld [vmem:[#allocation3 + $0x1a4] sm:$0xff]
      %v1458 = vld [vmem:[#allocation3 + $0x1ac] sm:$0xf]
      %v1459 = vld [vmem:[#allocation3 + $0x1b0] sm:$0xff]
      %v1460 = vld [vmem:[#allocation3 + $0x1b8] sm:$0xff]
      %v1461 = vld [vmem:[#allocation3 + $0x1c0] sm:$0xff]
      %v1462 = vld [vmem:[#allocation3 + $0x1c8] sm:$0xff]
      %v1463 = vld [vmem:[#allocation3 + $0x1d0] sm:$0xf]
      %v1464 = vld [vmem:[#allocation3 + $0x1d4] sm:$0xff]
      %v1465 = vld [vmem:[#allocation3 + $0x1dc] sm:$0xff]
      %v1466 = vld [vmem:[#allocation3 + $0x1e4] sm:$0xff]
      %v1467 = vld [vmem:[#allocation3 + $0x1ec] sm:$0xff]
      %v1468 = vld [vmem:[#allocation3 + $0x1f4] sm:$0xf]
      %v1469 = vld [vmem:[#allocation3 + $0x1f8] sm:$0xff]
      %v1470 = vld [vmem:[#allocation3 + $0x200] sm:$0xff]
      %v1471 = vld [vmem:[#allocation3 + $0x208] sm:$0xff]
      %v1472 = vld [vmem:[#allocation3 + $0x210] sm:$0xff]
      %v1473 = vld [vmem:[#allocation3 + $0x218] sm:$0xf]
      %v1474 = vld [vmem:[#allocation3 + $0x21c] sm:$0xff]
      %v1475 = vld [vmem:[#allocation3 + $0x224] sm:$0xff]
      %v1476 = vld [vmem:[#allocation3 + $0x22c] sm:$0xff]
      %v1477 = vld [vmem:[#allocation3 + $0x234] sm:$0xff]
      %v1478 = vld [vmem:[#allocation3 + $0x23c] sm:$0xf]
      %v1479 = vld [vmem:[%s3] sm:$0xf]
      %v1480 = vld [vmem:[%s3 + $0x4] sm:$0xf]
      %v1481 = vld [vmem:[%s3 + $0x8] sm:$0xf]
      %v1482 = vld [vmem:[%s3 + $0xc] sm:$0xf]
      %v1483 = vld [vmem:[%s3 + $0x10] sm:$0xf]
      %v1484 = vld [vmem:[%s3 + $0x14] sm:$0xf]
      %v1485 = vld [vmem:[%s3 + $0x18] sm:$0xf]
      %v1486 = vld [vmem:[%s3 + $0x1c] sm:$0xf]
      %v1487 = vld [vmem:[%s3 + $0x20] sm:$0xf]
      %v1488 = vld [vmem:[%s3 + $0x24] sm:$0xf]
      %v1489 = vld [vmem:[%s3 + $0x28] sm:$0xf]
      %v1490 = vld [vmem:[%s3 + $0x2c] sm:$0xf]
      %v1491 = vld [vmem:[%s3 + $0x30] sm:$0xf]
      %v1492 = vld [vmem:[%s3 + $0x34] sm:$0xf]
      %v1493 = vld [vmem:[%s3 + $0x38] sm:$0xf]
      %v1494 = vld [vmem:[%s3 + $0x3c] sm:$0xf]
      %v1495 = vld [vmem:[%s3 + $0x40] sm:$0xf]
      %v1496 = vld [vmem:[%s3 + $0x44] sm:$0xf]
      %v1497 = vld [vmem:[%s3 + $0x48] sm:$0xf]
      %v1498 = vld [vmem:[%s3 + $0x4c] sm:$0xf]
      %v1499 = vld [vmem:[%s3 + $0x50] sm:$0xf]
      %v1500 = vld [vmem:[%s3 + $0x54] sm:$0xf]
      %v1501 = vld [vmem:[%s3 + $0x58] sm:$0xf]
      %v1502 = vld [vmem:[%s3 + $0x5c] sm:$0xf]
      %v1503 = vld [vmem:[%s3 + $0x60] sm:$0xf]
      %v1504 = vld [vmem:[%s3 + $0x64] sm:$0xf]
      %v1505 = vld [vmem:[%s3 + $0x68] sm:$0xf]
      %v1506 = vld [vmem:[%s3 + $0x6c] sm:$0xf]
      %v1507 = vld [vmem:[%s3 + $0x70] sm:$0xf]
      %v1508 = vld [vmem:[%s3 + $0x74] sm:$0xf]
      %v1509 = vld [vmem:[%s3 + $0x78] sm:$0xf]
      %v1510 = vld [vmem:[%s3 + $0x7c] sm:$0xf]
      %v1511 = vld [vmem:[%s3 + $0x80] sm:$0xf]
      %v1512 = vld [vmem:[%s3 + $0x84] sm:$0xf]
      %v1513 = vld [vmem:[%s3 + $0x88] sm:$0xf]
      %v1514 = vld [vmem:[%s3 + $0x8c] sm:$0xf]
      %v1515 = vld [vmem:[%s3 + $0x90] sm:$0xf]
      %v1516 = vld [vmem:[%s3 + $0x94] sm:$0xf]
      %v1517 = vld [vmem:[%s3 + $0x98] sm:$0xf]
      %v1518 = vld [vmem:[%s3 + $0x9c] sm:$0xf]
      %v1519 = vld [vmem:[%s3 + $0xa0] sm:$0xf]
      %v1520 = vld [vmem:[%s3 + $0xa4] sm:$0xf]
      %v1521 = vld [vmem:[%s3 + $0xa8] sm:$0xf]
      %v1522 = vld [vmem:[%s3 + $0xac] sm:$0xf]
      %v1523 = vld [vmem:[%s3 + $0xb0] sm:$0xf]
      %v1524 = vld [vmem:[%s3 + $0xb4] sm:$0xf]
      %v1525 = vld [vmem:[%s3 + $0xb8] sm:$0xf]
      %v1526 = vld [vmem:[%s3 + $0xbc] sm:$0xf]
      %v1527 = vld [vmem:[%s3 + $0xc0] sm:$0xf]
      %v1528 = vld [vmem:[%s3 + $0xc4] sm:$0xf]
      %v1529 = vld [vmem:[%s3 + $0xc8] sm:$0xf]
      %v1530 = vld [vmem:[%s3 + $0xcc] sm:$0xf]
      %v1531 = vld [vmem:[%s3 + $0xd0] sm:$0xf]
      %v1532 = vld [vmem:[%s3 + $0xd4] sm:$0xf]
      %v1533 = vld [vmem:[%s3 + $0xd8] sm:$0xf]
      %v1534 = vld [vmem:[%s3 + $0xdc] sm:$0xf]
      %v1535 = vld [vmem:[%s3 + $0xe0] sm:$0xf]
      %v1536 = vld [vmem:[%s3 + $0xe4] sm:$0xf]
      %v1537 = vld [vmem:[%s3 + $0xe8] sm:$0xf]
      %v1538 = vld [vmem:[%s3 + $0xec] sm:$0xf]
      %v1539 = vld [vmem:[%s3 + $0xf0] sm:$0xf]
      %v1540 = vld [vmem:[%s3 + $0xf4] sm:$0xf]
      %v1541 = vld [vmem:[%s3 + $0xf8] sm:$0xf]
      %v1542 = vld [vmem:[%s3 + $0xfc] sm:$0xf]
      %v1543 = vld [vmem:[%s3 + $0x100] sm:$0xf]
      %v1544 = vld [vmem:[%s3 + $0x104] sm:$0xf]
      %v1545 = vld [vmem:[%s3 + $0x108] sm:$0xf]
      %v1546 = vld [vmem:[%s3 + $0x10c] sm:$0xf]
      %v1547 = vld [vmem:[%s3 + $0x110] sm:$0xf]
      %v1548 = vld [vmem:[%s3 + $0x114] sm:$0xf]
      %v1549 = vld [vmem:[%s3 + $0x118] sm:$0xf]
      %v1550 = vld [vmem:[%s3 + $0x11c] sm:$0xf]
      %v1551 = vld [vmem:[%s3 + $0x120] sm:$0xf]
      %v1552 = vld [vmem:[%s3 + $0x124] sm:$0xf]
      %v1553 = vld [vmem:[%s3 + $0x128] sm:$0xf]
      %v1554 = vld [vmem:[%s3 + $0x12c] sm:$0xf]
      %v1555 = vld [vmem:[%s3 + $0x130] sm:$0xf]
      %v1556 = vld [vmem:[%s3 + $0x134] sm:$0xf]
      %v1557 = vld [vmem:[%s3 + $0x138] sm:$0xf]
      %v1558 = vld [vmem:[%s3 + $0x13c] sm:$0xf]
      %v1559 = vld [vmem:[%s3 + $0x140] sm:$0xf]
      %v1560 = vld [vmem:[%s3 + $0x144] sm:$0xf]
      %v1561 = vld [vmem:[%s3 + $0x148] sm:$0xf]
      %v1562 = vld [vmem:[%s3 + $0x14c] sm:$0xf]
      %v1563 = vld [vmem:[%s3 + $0x150] sm:$0xf]
      %v1564 = vld [vmem:[%s3 + $0x154] sm:$0xf]
      %v1565 = vld [vmem:[%s3 + $0x158] sm:$0xf]
      %v1566 = vld [vmem:[%s3 + $0x15c] sm:$0xf]
      %v1567 = vld [vmem:[%s3 + $0x160] sm:$0xf]
      %v1568 = vld [vmem:[%s3 + $0x164] sm:$0xf]
      %v1569 = vld [vmem:[%s3 + $0x168] sm:$0xf]
      %v1570 = vld [vmem:[%s3 + $0x16c] sm:$0xf]
      %v1571 = vld [vmem:[%s3 + $0x170] sm:$0xf]
      %v1572 = vld [vmem:[%s3 + $0x174] sm:$0xf]
      %v1573 = vld [vmem:[%s3 + $0x178] sm:$0xf]
      %v1574 = vld [vmem:[%s3 + $0x17c] sm:$0xf]
      %v1575 = vld [vmem:[%s3 + $0x180] sm:$0xf]
      %v1576 = vld [vmem:[%s3 + $0x184] sm:$0xf]
      %v1577 = vld [vmem:[%s3 + $0x188] sm:$0xf]
      %v1578 = vld [vmem:[%s3 + $0x18c] sm:$0xf]
      %v1579 = vld [vmem:[%s3 + $0x190] sm:$0xf]
      %v1580 = vld [vmem:[%s3 + $0x194] sm:$0xf]
      %v1581 = vld [vmem:[%s3 + $0x198] sm:$0xf]
      %v1582 = vld [vmem:[%s3 + $0x19c] sm:$0xf]
      %v1583 = vld [vmem:[%s3 + $0x1a0] sm:$0xf]
      %v1584 = vld [vmem:[%s3 + $0x1a4] sm:$0xf]
      %v1585 = vld [vmem:[%s3 + $0x1a8] sm:$0xf]
      %v1586 = vld [vmem:[%s3 + $0x1ac] sm:$0xf]
      %v1587 = vld [vmem:[%s3 + $0x1b0] sm:$0xf]
      %v1588 = vld [vmem:[%s3 + $0x1b4] sm:$0xf]
      %v1589 = vld [vmem:[%s3 + $0x1b8] sm:$0xf]
      %v1590 = vld [vmem:[%s3 + $0x1bc] sm:$0xf]
      %v1591 = vld [vmem:[%s3 + $0x1c0] sm:$0xf]
      %v1592 = vld [vmem:[%s3 + $0x1c4] sm:$0xf]
      %v1593 = vld [vmem:[%s3 + $0x1c8] sm:$0xf]
      %v1594 = vld [vmem:[%s3 + $0x1cc] sm:$0xf]
      %v1595 = vld [vmem:[%s3 + $0x1d0] sm:$0xf]
      %v1596 = vld [vmem:[%s3 + $0x1d4] sm:$0xf]
      %v1597 = vld [vmem:[%s3 + $0x1d8] sm:$0xf]
      %v1598 = vld [vmem:[%s3 + $0x1dc] sm:$0xf]
      %v1599 = vld [vmem:[%s3 + $0x1e0] sm:$0xf]
      %v1600 = vld [vmem:[%s3 + $0x1e4] sm:$0xf]
      %v1601 = vld [vmem:[%s3 + $0x1e8] sm:$0xf]
      %v1602 = vld [vmem:[%s3 + $0x1ec] sm:$0xf]
      %v1603 = vld [vmem:[%s3 + $0x1f0] sm:$0xf]
      %v1604 = vld [vmem:[%s3 + $0x1f4] sm:$0xf]
      %v1605 = vld [vmem:[%s3 + $0x1f8] sm:$0xf]
      %v1606 = vld [vmem:[%s3 + $0x1fc] sm:$0xf]
      %v1607 = vld [vmem:[%s3 + $0x200] sm:$0xf]
      %v1608 = vld [vmem:[%s3 + $0x204] sm:$0xf]
      %v1609 = vld [vmem:[%s3 + $0x208] sm:$0xf]
      %v1610 = vld [vmem:[%s3 + $0x20c] sm:$0xf]
      %v1611 = vld [vmem:[%s3 + $0x210] sm:$0xf]
      %v1612 = vld [vmem:[%s3 + $0x214] sm:$0xf]
      %v1613 = vld [vmem:[%s3 + $0x218] sm:$0xf]
      %v1614 = vld [vmem:[%s3 + $0x21c] sm:$0xf]
      %v1615 = vld [vmem:[%s3 + $0x220] sm:$0xf]
      %v1616 = vld [vmem:[%s3 + $0x224] sm:$0xf]
      %v1617 = vld [vmem:[%s3 + $0x228] sm:$0xf]
      %v1618 = vld [vmem:[%s3 + $0x22c] sm:$0xf]
      %v1619 = vld [vmem:[%s3 + $0x230] sm:$0xf]
      %v1620 = vld [vmem:[%s3 + $0x234] sm:$0xf]
      %v1621 = vld [vmem:[%s3 + $0x238] sm:$0xf]
      %v1622 = vld [vmem:[%s3 + $0x23c] sm:$0xf]
      %v1703 = vunpack.c.l.b16 %v1399
      %v1704 = vunpack.c.h.b16 %v1399
      %v1705 = vunpack.c.l.b16 %v1400
      %v1706 = vunpack.c.h.b16 %v1400
      %v1707 = vunpack.c.l.b16 %v1401
      %v1708 = vunpack.c.h.b16 %v1401
      %v1709 = vunpack.c.l.b16 %v1402
      %v1710 = vunpack.c.h.b16 %v1402
      %v1711 = vunpack.c.l.b16 %v1403
      %v1712 = vunpack.c.l.b16 %v1404
      %v1713 = vunpack.c.h.b16 %v1404
      %v1714 = vunpack.c.l.b16 %v1405
      %v1715 = vunpack.c.h.b16 %v1405
      %v1716 = vunpack.c.l.b16 %v1406
      %v1717 = vunpack.c.h.b16 %v1406
      %v1718 = vunpack.c.l.b16 %v1407
      %v1719 = vunpack.c.h.b16 %v1407
      %v1720 = vunpack.c.l.b16 %v1408
      %v1721 = vunpack.c.l.b16 %v1409
      %v1722 = vunpack.c.h.b16 %v1409
      %v1723 = vunpack.c.l.b16 %v1410
      %v1724 = vunpack.c.h.b16 %v1410
      %v1725 = vunpack.c.l.b16 %v1411
      %v1726 = vunpack.c.h.b16 %v1411
      %v1727 = vunpack.c.l.b16 %v1412
      %v1728 = vunpack.c.h.b16 %v1412
      %v1729 = vunpack.c.l.b16 %v1413
      %v1730 = vunpack.c.l.b16 %v1414
      %v1731 = vunpack.c.h.b16 %v1414
      %v1732 = vunpack.c.l.b16 %v1415
      %v1733 = vunpack.c.h.b16 %v1415
      %v1734 = vunpack.c.l.b16 %v1416
      %v1735 = vunpack.c.h.b16 %v1416
      %v1736 = vunpack.c.l.b16 %v1417
      %v1737 = vunpack.c.h.b16 %v1417
      %v1738 = vunpack.c.l.b16 %v1418
      %v1739 = vunpack.c.l.b16 %v1419
      %v1740 = vunpack.c.h.b16 %v1419
      %v1741 = vunpack.c.l.b16 %v1420
      %v1742 = vunpack.c.h.b16 %v1420
      %v1743 = vunpack.c.l.b16 %v1421
      %v1744 = vunpack.c.h.b16 %v1421
      %v1745 = vunpack.c.l.b16 %v1422
      %v1746 = vunpack.c.h.b16 %v1422
      %v1747 = vunpack.c.l.b16 %v1423
      %v1748 = vunpack.c.l.b16 %v1424
      %v1749 = vunpack.c.h.b16 %v1424
      %v1750 = vunpack.c.l.b16 %v1425
      %v1751 = vunpack.c.h.b16 %v1425
      %v1752 = vunpack.c.l.b16 %v1426
      %v1753 = vunpack.c.h.b16 %v1426
      %v1754 = vunpack.c.l.b16 %v1427
      %v1755 = vunpack.c.h.b16 %v1427
      %v1756 = vunpack.c.l.b16 %v1428
      %v1757 = vunpack.c.l.b16 %v1429
      %v1758 = vunpack.c.h.b16 %v1429
      %v1759 = vunpack.c.l.b16 %v1430
      %v1760 = vunpack.c.h.b16 %v1430
      %v1761 = vunpack.c.l.b16 %v1431
      %v1762 = vunpack.c.h.b16 %v1431
      %v1763 = vunpack.c.l.b16 %v1432
      %v1764 = vunpack.c.h.b16 %v1432
      %v1765 = vunpack.c.l.b16 %v1433
      %v1766 = vunpack.c.l.b16 %v1434
      %v1767 = vunpack.c.h.b16 %v1434
      %v1768 = vunpack.c.l.b16 %v1435
      %v1769 = vunpack.c.h.b16 %v1435
      %v1770 = vunpack.c.l.b16 %v1436
      %v1771 = vunpack.c.h.b16 %v1436
      %v1772 = vunpack.c.l.b16 %v1437
      %v1773 = vunpack.c.h.b16 %v1437
      %v1774 = vunpack.c.l.b16 %v1438
      %v1775 = vunpack.c.l.b16 %v1439
      %v1776 = vunpack.c.h.b16 %v1439
      %v1777 = vunpack.c.l.b16 %v1440
      %v1778 = vunpack.c.h.b16 %v1440
      %v1779 = vunpack.c.l.b16 %v1441
      %v1780 = vunpack.c.h.b16 %v1441
      %v1781 = vunpack.c.l.b16 %v1442
      %v1782 = vunpack.c.h.b16 %v1442
      %v1783 = vunpack.c.l.b16 %v1443
      %v1784 = vunpack.c.l.b16 %v1444
      %v1785 = vunpack.c.h.b16 %v1444
      %v1786 = vunpack.c.l.b16 %v1445
      %v1787 = vunpack.c.h.b16 %v1445
      %v1788 = vunpack.c.l.b16 %v1446
      %v1789 = vunpack.c.h.b16 %v1446
      %v1790 = vunpack.c.l.b16 %v1447
      %v1791 = vunpack.c.h.b16 %v1447
      %v1792 = vunpack.c.l.b16 %v1448
      %v1793 = vunpack.c.l.b16 %v1449
      %v1794 = vunpack.c.h.b16 %v1449
      %v1795 = vunpack.c.l.b16 %v1450
      %v1796 = vunpack.c.h.b16 %v1450
      %v1797 = vunpack.c.l.b16 %v1451
      %v1798 = vunpack.c.h.b16 %v1451
      %v1799 = vunpack.c.l.b16 %v1452
      %v1800 = vunpack.c.h.b16 %v1452
      %v1801 = vunpack.c.l.b16 %v1453
      %v1802 = vunpack.c.l.b16 %v1454
      %v1803 = vunpack.c.h.b16 %v1454
      %v1804 = vunpack.c.l.b16 %v1455
      %v1805 = vunpack.c.h.b16 %v1455
      %v1806 = vunpack.c.l.b16 %v1456
      %v1807 = vunpack.c.h.b16 %v1456
      %v1808 = vunpack.c.l.b16 %v1457
      %v1809 = vunpack.c.h.b16 %v1457
      %v1810 = vunpack.c.l.b16 %v1458
      %v1811 = vunpack.c.l.b16 %v1459
      %v1812 = vunpack.c.h.b16 %v1459
      %v1813 = vunpack.c.l.b16 %v1460
      %v1814 = vunpack.c.h.b16 %v1460
      %v1815 = vunpack.c.l.b16 %v1461
      %v1816 = vunpack.c.h.b16 %v1461
      %v1817 = vunpack.c.l.b16 %v1462
      %v1818 = vunpack.c.h.b16 %v1462
      %v1819 = vunpack.c.l.b16 %v1463
      %v1820 = vunpack.c.l.b16 %v1464
      %v1821 = vunpack.c.h.b16 %v1464
      %v1822 = vunpack.c.l.b16 %v1465
      %v1823 = vunpack.c.h.b16 %v1465
      %v1824 = vunpack.c.l.b16 %v1466
      %v1825 = vunpack.c.h.b16 %v1466
      %v1826 = vunpack.c.l.b16 %v1467
      %v1827 = vunpack.c.h.b16 %v1467
      %v1828 = vunpack.c.l.b16 %v1468
      %v1829 = vunpack.c.l.b16 %v1469
      %v1830 = vunpack.c.h.b16 %v1469
      %v1831 = vunpack.c.l.b16 %v1470
      %v1832 = vunpack.c.h.b16 %v1470
      %v1833 = vunpack.c.l.b16 %v1471
      %v1834 = vunpack.c.h.b16 %v1471
      %v1835 = vunpack.c.l.b16 %v1472
      %v1836 = vunpack.c.h.b16 %v1472
      %v1837 = vunpack.c.l.b16 %v1473
      %v1838 = vunpack.c.l.b16 %v1474
      %v1839 = vunpack.c.h.b16 %v1474
      %v1840 = vunpack.c.l.b16 %v1475
      %v1841 = vunpack.c.h.b16 %v1475
      %v1842 = vunpack.c.l.b16 %v1476
      %v1843 = vunpack.c.h.b16 %v1476
      %v1844 = vunpack.c.l.b16 %v1477
      %v1845 = vunpack.c.h.b16 %v1477
      %v1846 = vunpack.c.l.b16 %v1478
      %v1847 = vpack.c.b16 %v1712, %v1703
      %v1848 = vpack.c.b16 %v1713, %v1704
      %v1849 = vpack.c.b16 %v1714, %v1705
      %v1850 = vpack.c.b16 %v1715, %v1706
      %v1851 = vpack.c.b16 %v1716, %v1707
      %v1852 = vpack.c.b16 %v1717, %v1708
      %v1853 = vpack.c.b16 %v1718, %v1709
      %v1854 = vpack.c.b16 %v1719, %v1710
      %v1855 = vpack.c.b16 %v1720, %v1711
      %v1856 = vpack.c.b16 %v1730, %v1721
      %v1857 = vpack.c.b16 %v1731, %v1722
      %v1858 = vpack.c.b16 %v1732, %v1723
      %v1859 = vpack.c.b16 %v1733, %v1724
      %v1860 = vpack.c.b16 %v1734, %v1725
      %v1861 = vpack.c.b16 %v1735, %v1726
      %v1862 = vpack.c.b16 %v1736, %v1727
      %v1863 = vpack.c.b16 %v1737, %v1728
      %v1864 = vpack.c.b16 %v1738, %v1729
      %v1865 = vpack.c.b16 %v1748, %v1739
      %v1866 = vpack.c.b16 %v1749, %v1740
      %v1867 = vpack.c.b16 %v1750, %v1741
      %v1868 = vpack.c.b16 %v1751, %v1742
      %v1869 = vpack.c.b16 %v1752, %v1743
      %v1870 = vpack.c.b16 %v1753, %v1744
      %v1871 = vpack.c.b16 %v1754, %v1745
      %v1872 = vpack.c.b16 %v1755, %v1746
      %v1873 = vpack.c.b16 %v1756, %v1747
      %v1874 = vpack.c.b16 %v1766, %v1757
      %v1875 = vpack.c.b16 %v1767, %v1758
      %v1876 = vpack.c.b16 %v1768, %v1759
      %v1877 = vpack.c.b16 %v1769, %v1760
      %v1878 = vpack.c.b16 %v1770, %v1761
      %v1879 = vpack.c.b16 %v1771, %v1762
      %v1880 = vpack.c.b16 %v1772, %v1763
      %v1881 = vpack.c.b16 %v1773, %v1764
      %v1882 = vpack.c.b16 %v1774, %v1765
      %v1883 = vpack.c.b16 %v1784, %v1775
      %v1884 = vpack.c.b16 %v1785, %v1776
      %v1885 = vpack.c.b16 %v1786, %v1777
      %v1886 = vpack.c.b16 %v1787, %v1778
      %v1887 = vpack.c.b16 %v1788, %v1779
      %v1888 = vpack.c.b16 %v1789, %v1780
      %v1889 = vpack.c.b16 %v1790, %v1781
      %v1890 = vpack.c.b16 %v1791, %v1782
      %v1891 = vpack.c.b16 %v1792, %v1783
      %v1892 = vpack.c.b16 %v1802, %v1793
      %v1893 = vpack.c.b16 %v1803, %v1794
      %v1894 = vpack.c.b16 %v1804, %v1795
      %v1895 = vpack.c.b16 %v1805, %v1796
      %v1896 = vpack.c.b16 %v1806, %v1797
      %v1897 = vpack.c.b16 %v1807, %v1798
      %v1898 = vpack.c.b16 %v1808, %v1799
      %v1899 = vpack.c.b16 %v1809, %v1800
      %v1900 = vpack.c.b16 %v1810, %v1801
      %v1901 = vpack.c.b16 %v1820, %v1811
      %v1902 = vpack.c.b16 %v1821, %v1812
      %v1903 = vpack.c.b16 %v1822, %v1813
      %v1904 = vpack.c.b16 %v1823, %v1814
      %v1905 = vpack.c.b16 %v1824, %v1815
      %v1906 = vpack.c.b16 %v1825, %v1816
      %v1907 = vpack.c.b16 %v1826, %v1817
      %v1908 = vpack.c.b16 %v1827, %v1818
      %v1909 = vpack.c.b16 %v1828, %v1819
      %v1910 = vpack.c.b16 %v1838, %v1829
      %v1911 = vpack.c.b16 %v1839, %v1830
      %v1912 = vpack.c.b16 %v1840, %v1831
      %v1913 = vpack.c.b16 %v1841, %v1832
      %v1914 = vpack.c.b16 %v1842, %v1833
      %v1915 = vpack.c.b16 %v1843, %v1834
      %v1916 = vpack.c.b16 %v1844, %v1835
      %v1917 = vpack.c.b16 %v1845, %v1836
      %v1918 = vpack.c.b16 %v1846, %v1837
      %v2135 = vunpack.c.l.b16 %v1479
      %v2136 = vunpack.c.l.b16 %v1480
      %v2137 = vunpack.c.l.b16 %v1481
      %v2138 = vunpack.c.l.b16 %v1482
      %v2139 = vunpack.c.l.b16 %v1483
      %v2140 = vunpack.c.l.b16 %v1484
      %v2141 = vunpack.c.l.b16 %v1485
      %v2142 = vunpack.c.l.b16 %v1486
      %v2143 = vunpack.c.l.b16 %v1487
      %v2144 = vunpack.c.l.b16 %v1488
      %v2145 = vunpack.c.l.b16 %v1489
      %v2146 = vunpack.c.l.b16 %v1490
      %v2147 = vunpack.c.l.b16 %v1491
      %v2148 = vunpack.c.l.b16 %v1492
      %v2149 = vunpack.c.l.b16 %v1493
      %v2150 = vunpack.c.l.b16 %v1494
      %v2151 = vunpack.c.l.b16 %v1495
      %v2152 = vunpack.c.l.b16 %v1496
      %v2153 = vunpack.c.l.b16 %v1497
      %v2154 = vunpack.c.l.b16 %v1498
      %v2155 = vunpack.c.l.b16 %v1499
      %v2156 = vunpack.c.l.b16 %v1500
      %v2157 = vunpack.c.l.b16 %v1501
      %v2158 = vunpack.c.l.b16 %v1502
      %v2159 = vunpack.c.l.b16 %v1503
      %v2160 = vunpack.c.l.b16 %v1504
      %v2161 = vunpack.c.l.b16 %v1505
      %v2162 = vunpack.c.l.b16 %v1506
      %v2163 = vunpack.c.l.b16 %v1507
      %v2164 = vunpack.c.l.b16 %v1508
      %v2165 = vunpack.c.l.b16 %v1509
      %v2166 = vunpack.c.l.b16 %v1510
      %v2167 = vunpack.c.l.b16 %v1511
      %v2168 = vunpack.c.l.b16 %v1512
      %v2169 = vunpack.c.l.b16 %v1513
      %v2170 = vunpack.c.l.b16 %v1514
      %v2171 = vunpack.c.l.b16 %v1515
      %v2172 = vunpack.c.l.b16 %v1516
      %v2173 = vunpack.c.l.b16 %v1517
      %v2174 = vunpack.c.l.b16 %v1518
      %v2175 = vunpack.c.l.b16 %v1519
      %v2176 = vunpack.c.l.b16 %v1520
      %v2177 = vunpack.c.l.b16 %v1521
      %v2178 = vunpack.c.l.b16 %v1522
      %v2179 = vunpack.c.l.b16 %v1523
      %v2180 = vunpack.c.l.b16 %v1524
      %v2181 = vunpack.c.l.b16 %v1525
      %v2182 = vunpack.c.l.b16 %v1526
      %v2183 = vunpack.c.l.b16 %v1527
      %v2184 = vunpack.c.l.b16 %v1528
      %v2185 = vunpack.c.l.b16 %v1529
      %v2186 = vunpack.c.l.b16 %v1530
      %v2187 = vunpack.c.l.b16 %v1531
      %v2188 = vunpack.c.l.b16 %v1532
      %v2189 = vunpack.c.l.b16 %v1533
      %v2190 = vunpack.c.l.b16 %v1534
      %v2191 = vunpack.c.l.b16 %v1535
      %v2192 = vunpack.c.l.b16 %v1536
      %v2193 = vunpack.c.l.b16 %v1537
      %v2194 = vunpack.c.l.b16 %v1538
      %v2195 = vunpack.c.l.b16 %v1539
      %v2196 = vunpack.c.l.b16 %v1540
      %v2197 = vunpack.c.l.b16 %v1541
      %v2198 = vunpack.c.l.b16 %v1542
      %v2199 = vunpack.c.l.b16 %v1543
      %v2200 = vunpack.c.l.b16 %v1544
      %v2201 = vunpack.c.l.b16 %v1545
      %v2202 = vunpack.c.l.b16 %v1546
      %v2203 = vunpack.c.l.b16 %v1547
      %v2204 = vunpack.c.l.b16 %v1548
      %v2205 = vunpack.c.l.b16 %v1549
      %v2206 = vunpack.c.l.b16 %v1550
      %v2207 = vunpack.c.l.b16 %v1551
      %v2208 = vunpack.c.l.b16 %v1552
      %v2209 = vunpack.c.l.b16 %v1553
      %v2210 = vunpack.c.l.b16 %v1554
      %v2211 = vunpack.c.l.b16 %v1555
      %v2212 = vunpack.c.l.b16 %v1556
      %v2213 = vunpack.c.l.b16 %v1557
      %v2214 = vunpack.c.l.b16 %v1558
      %v2215 = vunpack.c.l.b16 %v1559
      %v2216 = vunpack.c.l.b16 %v1560
      %v2217 = vunpack.c.l.b16 %v1561
      %v2218 = vunpack.c.l.b16 %v1562
      %v2219 = vunpack.c.l.b16 %v1563
      %v2220 = vunpack.c.l.b16 %v1564
      %v2221 = vunpack.c.l.b16 %v1565
      %v2222 = vunpack.c.l.b16 %v1566
      %v2223 = vunpack.c.l.b16 %v1567
      %v2224 = vunpack.c.l.b16 %v1568
      %v2225 = vunpack.c.l.b16 %v1569
      %v2226 = vunpack.c.l.b16 %v1570
      %v2227 = vunpack.c.l.b16 %v1571
      %v2228 = vunpack.c.l.b16 %v1572
      %v2229 = vunpack.c.l.b16 %v1573
      %v2230 = vunpack.c.l.b16 %v1574
      %v2231 = vunpack.c.l.b16 %v1575
      %v2232 = vunpack.c.l.b16 %v1576
      %v2233 = vunpack.c.l.b16 %v1577
      %v2234 = vunpack.c.l.b16 %v1578
      %v2235 = vunpack.c.l.b16 %v1579
      %v2236 = vunpack.c.l.b16 %v1580
      %v2237 = vunpack.c.l.b16 %v1581
      %v2238 = vunpack.c.l.b16 %v1582
      %v2239 = vunpack.c.l.b16 %v1583
      %v2240 = vunpack.c.l.b16 %v1584
      %v2241 = vunpack.c.l.b16 %v1585
      %v2242 = vunpack.c.l.b16 %v1586
      %v2243 = vunpack.c.l.b16 %v1587
      %v2244 = vunpack.c.l.b16 %v1588
      %v2245 = vunpack.c.l.b16 %v1589
      %v2246 = vunpack.c.l.b16 %v1590
      %v2247 = vunpack.c.l.b16 %v1591
      %v2248 = vunpack.c.l.b16 %v1592
      %v2249 = vunpack.c.l.b16 %v1593
      %v2250 = vunpack.c.l.b16 %v1594
      %v2251 = vunpack.c.l.b16 %v1595
      %v2252 = vunpack.c.l.b16 %v1596
      %v2253 = vunpack.c.l.b16 %v1597
      %v2254 = vunpack.c.l.b16 %v1598
      %v2255 = vunpack.c.l.b16 %v1599
      %v2256 = vunpack.c.l.b16 %v1600
      %v2257 = vunpack.c.l.b16 %v1601
      %v2258 = vunpack.c.l.b16 %v1602
      %v2259 = vunpack.c.l.b16 %v1603
      %v2260 = vunpack.c.l.b16 %v1604
      %v2261 = vunpack.c.l.b16 %v1605
      %v2262 = vunpack.c.l.b16 %v1606
      %v2263 = vunpack.c.l.b16 %v1607
      %v2264 = vunpack.c.l.b16 %v1608
      %v2265 = vunpack.c.l.b16 %v1609
      %v2266 = vunpack.c.l.b16 %v1610
      %v2267 = vunpack.c.l.b16 %v1611
      %v2268 = vunpack.c.l.b16 %v1612
      %v2269 = vunpack.c.l.b16 %v1613
      %v2270 = vunpack.c.l.b16 %v1614
      %v2271 = vunpack.c.l.b16 %v1615
      %v2272 = vunpack.c.l.b16 %v1616
      %v2273 = vunpack.c.l.b16 %v1617
      %v2274 = vunpack.c.l.b16 %v1618
      %v2275 = vunpack.c.l.b16 %v1619
      %v2276 = vunpack.c.l.b16 %v1620
      %v2277 = vunpack.c.l.b16 %v1621
      %v2278 = vunpack.c.l.b16 %v1622
      %v2279 = vpack.c.b16 %v2136, %v2135
      %v2280 = vpack.c.b16 %v2138, %v2137
      %v2281 = vpack.c.b16 %v2140, %v2139
      %v2282 = vpack.c.b16 %v2142, %v2141
      %v2283 = vpack.c.b16 %v2144, %v2143
      %v2284 = vpack.c.b16 %v2146, %v2145
      %v2285 = vpack.c.b16 %v2148, %v2147
      %v2286 = vpack.c.b16 %v2150, %v2149
      %v2287 = vpack.c.b16 %v2152, %v2151
      %v2288 = vpack.c.b16 %v2154, %v2153
      %v2289 = vpack.c.b16 %v2156, %v2155
      %v2290 = vpack.c.b16 %v2158, %v2157
      %v2291 = vpack.c.b16 %v2160, %v2159
      %v2292 = vpack.c.b16 %v2162, %v2161
      %v2293 = vpack.c.b16 %v2164, %v2163
      %v2294 = vpack.c.b16 %v2166, %v2165
      %v2295 = vpack.c.b16 %v2168, %v2167
      %v2296 = vpack.c.b16 %v2170, %v2169
      %v2297 = vpack.c.b16 %v2172, %v2171
      %v2298 = vpack.c.b16 %v2174, %v2173
      %v2299 = vpack.c.b16 %v2176, %v2175
      %v2300 = vpack.c.b16 %v2178, %v2177
      %v2301 = vpack.c.b16 %v2180, %v2179
      %v2302 = vpack.c.b16 %v2182, %v2181
      %v2303 = vpack.c.b16 %v2184, %v2183
      %v2304 = vpack.c.b16 %v2186, %v2185
      %v2305 = vpack.c.b16 %v2188, %v2187
      %v2306 = vpack.c.b16 %v2190, %v2189
      %v2307 = vpack.c.b16 %v2192, %v2191
      %v2308 = vpack.c.b16 %v2194, %v2193
      %v2309 = vpack.c.b16 %v2196, %v2195
      %v2310 = vpack.c.b16 %v2198, %v2197
      %v2311 = vpack.c.b16 %v2200, %v2199
      %v2312 = vpack.c.b16 %v2202, %v2201
      %v2313 = vpack.c.b16 %v2204, %v2203
      %v2314 = vpack.c.b16 %v2206, %v2205
      %v2315 = vpack.c.b16 %v2208, %v2207
      %v2316 = vpack.c.b16 %v2210, %v2209
      %v2317 = vpack.c.b16 %v2212, %v2211
      %v2318 = vpack.c.b16 %v2214, %v2213
      %v2319 = vpack.c.b16 %v2216, %v2215
      %v2320 = vpack.c.b16 %v2218, %v2217
      %v2321 = vpack.c.b16 %v2220, %v2219
      %v2322 = vpack.c.b16 %v2222, %v2221
      %v2323 = vpack.c.b16 %v2224, %v2223
      %v2324 = vpack.c.b16 %v2226, %v2225
      %v2325 = vpack.c.b16 %v2228, %v2227
      %v2326 = vpack.c.b16 %v2230, %v2229
      %v2327 = vpack.c.b16 %v2232, %v2231
      %v2328 = vpack.c.b16 %v2234, %v2233
      %v2329 = vpack.c.b16 %v2236, %v2235
      %v2330 = vpack.c.b16 %v2238, %v2237
      %v2331 = vpack.c.b16 %v2240, %v2239
      %v2332 = vpack.c.b16 %v2242, %v2241
      %v2333 = vpack.c.b16 %v2244, %v2243
      %v2334 = vpack.c.b16 %v2246, %v2245
      %v2335 = vpack.c.b16 %v2248, %v2247
      %v2336 = vpack.c.b16 %v2250, %v2249
      %v2337 = vpack.c.b16 %v2252, %v2251
      %v2338 = vpack.c.b16 %v2254, %v2253
      %v2339 = vpack.c.b16 %v2256, %v2255
      %v2340 = vpack.c.b16 %v2258, %v2257
      %v2341 = vpack.c.b16 %v2260, %v2259
      %v2342 = vpack.c.b16 %v2262, %v2261
      %v2343 = vpack.c.b16 %v2264, %v2263
      %v2344 = vpack.c.b16 %v2266, %v2265
      %v2345 = vpack.c.b16 %v2268, %v2267
      %v2346 = vpack.c.b16 %v2270, %v2269
      %v2347 = vpack.c.b16 %v2272, %v2271
      %v2348 = vpack.c.b16 %v2274, %v2273
      %v2349 = vpack.c.b16 %v2276, %v2275
      %v2350 = vpack.c.b16 %v2278, %v2277
      %2423 = vmatprep.subr.bf16.mxu0 0
      %2424 = vmatpush1.bf16.msra.mxu0 %v2286
      %2425 = vmatprep.subr.bf16.mxu0 0
      %2426 = vmatpush1.bf16.msra.mxu0 %v2285
      %2427 = vmatprep.subr.bf16.mxu0 0
      %2428 = vmatpush1.bf16.msra.mxu0 %v2284
      %2429 = vmatprep.subr.bf16.mxu0 0
      %2430 = vmatpush1.bf16.msra.mxu0 %v2283
      %2431 = vmatprep.subr.bf16.mxu0 0
      %2432 = vmatpush1.bf16.msra.mxu0 %v2282
      %2433 = vmatprep.subr.bf16.mxu0 0
      %2434 = vmatpush1.bf16.msra.mxu0 %v2281
      %2435 = vmatprep.subr.bf16.mxu0 0
      %2436 = vmatpush1.bf16.msra.mxu0 %v2280
      %2437 = vmatprep.subr.bf16.mxu0 0
      %2438 = vmatpush1.bf16.msra.mxu0 %v2279
      %2439 = vmatprep.subr.bf16.mxu0 0
      %2440 = vmatpush2.bf16.msra.mxu0 %v2294
      %2441 = vmatprep.subr.bf16.mxu0 0
      %2442 = vmatpush2.bf16.msra.mxu0 %v2293
      %2443 = vmatprep.subr.bf16.mxu0 0
      %2444 = vmatpush2.bf16.msra.mxu0 %v2292
      %2445 = vmatprep.subr.bf16.mxu0 0
      %2446 = vmatpush2.bf16.msra.mxu0 %v2291
      %2447 = vmatprep.subr.bf16.mxu0 0
      %2448 = vmatpush2.bf16.msra.mxu0 %v2290
      %2449 = vmatprep.subr.bf16.mxu0 0
      %2450 = vmatpush2.bf16.msra.mxu0 %v2289
      %2451 = vmatprep.subr.bf16.mxu0 0
      %2452 = vmatpush2.bf16.msra.mxu0 %v2288
      %2453 = vmatprep.subr.bf16.mxu0 0
      %2454 = vmatpush2.bf16.msra.mxu0 %v2287
      %2455 = vmatprep.mubr.bf16.mxu0 %v1848
      %2456 = vmatmul.mubr.bf16.gmra.mxu0 %v1847
      %v2457 = vpop.f32.mrf.mxu0
      %v2458 = vadd.f32 0.0, %v2457
      %v2459 = vpop.f32.mrf.mxu0
      %v2460 = vpop.f32.mrf.mxu0
      %v2461 = vadd.f32 0.0, %v2460
      %v2462 = vpop.f32.mrf.mxu0
      %2463 = vmatprep.mubr.bf16.mxu0 %v1857
      %2464 = vmatmul.mubr.bf16.gmra.mxu0 %v1856
      %v2465 = vpop.f32.mrf.mxu0
      %v2466 = vadd.f32 0.0, %v2465
      %v2467 = vpop.f32.mrf.mxu0
      %v2468 = vpop.f32.mrf.mxu0
      %v2469 = vadd.f32 0.0, %v2468
      %v2470 = vpop.f32.mrf.mxu0
      %2471 = vmatprep.mubr.bf16.mxu0 %v1866
      %2472 = vmatmul.mubr.bf16.gmra.mxu0 %v1865
      %v2473 = vpop.f32.mrf.mxu0
      %v2474 = vadd.f32 0.0, %v2473
      %v2475 = vpop.f32.mrf.mxu0
      %v2476 = vpop.f32.mrf.mxu0
      %v2477 = vadd.f32 0.0, %v2476
      %v2478 = vpop.f32.mrf.mxu0
      %2479 = vmatprep.mubr.bf16.mxu0 %v1875
      %2480 = vmatmul.mubr.bf16.gmra.mxu0 %v1874
      %v2481 = vpop.f32.mrf.mxu0
      %v2482 = vadd.f32 0.0, %v2481
      %v2483 = vpop.f32.mrf.mxu0
      %v2484 = vpop.f32.mrf.mxu0
      %v2485 = vadd.f32 0.0, %v2484
      %v2486 = vpop.f32.mrf.mxu0
      %2487 = vmatprep.mubr.bf16.mxu0 %v1884
      %2488 = vmatmul.mubr.bf16.gmra.mxu0 %v1883
      %v2489 = vpop.f32.mrf.mxu0
      %v2490 = vadd.f32 0.0, %v2489
      %v2491 = vpop.f32.mrf.mxu0
      %v2492 = vpop.f32.mrf.mxu0
      %v2493 = vadd.f32 0.0, %v2492
      %v2494 = vpop.f32.mrf.mxu0
      %2495 = vmatprep.mubr.bf16.mxu0 %v1893
      %2496 = vmatmul.mubr.bf16.gmra.mxu0 %v1892
      %v2497 = vpop.f32.mrf.mxu0
      %v2498 = vadd.f32 0.0, %v2497
      %v2499 = vpop.f32.mrf.mxu0
      %v2500 = vpop.f32.mrf.mxu0
      %v2501 = vadd.f32 0.0, %v2500
      %v2502 = vpop.f32.mrf.mxu0
      %2503 = vmatprep.mubr.bf16.mxu0 %v1902
      %2504 = vmatmul.mubr.bf16.gmra.mxu0 %v1901
      %v2505 = vpop.f32.mrf.mxu0
      %v2506 = vadd.f32 0.0, %v2505
      %v2507 = vpop.f32.mrf.mxu0
      %v2508 = vpop.f32.mrf.mxu0
      %v2509 = vadd.f32 0.0, %v2508
      %v2510 = vpop.f32.mrf.mxu0
      %2511 = vmatprep.mubr.bf16.mxu0 %v1911
      %2512 = vmatmul.mubr.bf16.gmra.mxu0 %v1910
      %v2513 = vpop.f32.mrf.mxu0
      %v2514 = vadd.f32 0.0, %v2513
      %v2515 = vpop.f32.mrf.mxu0
      %v2516 = vpop.f32.mrf.mxu0
      %v2517 = vadd.f32 0.0, %v2516
      %v2518 = vpop.f32.mrf.mxu0
      %2519 = vdwg.mxu0
      %2520 = vmatprep.subr.bf16.mxu0 0
      %2521 = vmatpush1.bf16.msra.mxu0 %v2302
      %2522 = vmatprep.subr.bf16.mxu0 0
      %2523 = vmatpush1.bf16.msra.mxu0 %v2301
      %2524 = vmatprep.subr.bf16.mxu0 0
      %2525 = vmatpush1.bf16.msra.mxu0 %v2300
      %2526 = vmatprep.subr.bf16.mxu0 0
      %2527 = vmatpush1.bf16.msra.mxu0 %v2299
      %2528 = vmatprep.subr.bf16.mxu0 0
      %2529 = vmatpush1.bf16.msra.mxu0 %v2298
      %2530 = vmatprep.subr.bf16.mxu0 0
      %2531 = vmatpush1.bf16.msra.mxu0 %v2297
      %2532 = vmatprep.subr.bf16.mxu0 0
      %2533 = vmatpush1.bf16.msra.mxu0 %v2296
      %2534 = vmatprep.subr.bf16.mxu0 0
      %2535 = vmatpush1.bf16.msra.mxu0 %v2295
      %2536 = vmatprep.subr.bf16.mxu0 0
      %2537 = vmatpush2.bf16.msra.mxu0 %v2310
      %2538 = vmatprep.subr.bf16.mxu0 0
      %2539 = vmatpush2.bf16.msra.mxu0 %v2309
      %2540 = vmatprep.subr.bf16.mxu0 0
      %2541 = vmatpush2.bf16.msra.mxu0 %v2308
      %2542 = vmatprep.subr.bf16.mxu0 0
      %2543 = vmatpush2.bf16.msra.mxu0 %v2307
      %2544 = vmatprep.subr.bf16.mxu0 0
      %2545 = vmatpush2.bf16.msra.mxu0 %v2306
      %2546 = vmatprep.subr.bf16.mxu0 0
      %2547 = vmatpush2.bf16.msra.mxu0 %v2305
      %2548 = vmatprep.subr.bf16.mxu0 0
      %2549 = vmatpush2.bf16.msra.mxu0 %v2304
      %2550 = vmatprep.subr.bf16.mxu0 0
      %2551 = vmatpush2.bf16.msra.mxu0 %v2303
      %2552 = vmatprep.mubr.bf16.mxu0 %v1850
      %2553 = vmatmul.mubr.bf16.gmra.mxu0 %v1849
      %v2554 = vpop.f32.mrf.mxu0
      %v2555 = vadd.f32 %v2458, %v2554
      %v2556 = vpop.f32.mrf.mxu0
      %v2557 = vpop.f32.mrf.mxu0
      %v2558 = vadd.f32 %v2461, %v2557
      %v2559 = vpop.f32.mrf.mxu0
      %2560 = vmatprep.mubr.bf16.mxu0 %v1859
      %2561 = vmatmul.mubr.bf16.gmra.mxu0 %v1858
      %v2562 = vpop.f32.mrf.mxu0
      %v2563 = vadd.f32 %v2466, %v2562
      %v2564 = vpop.f32.mrf.mxu0
      %v2565 = vpop.f32.mrf.mxu0
      %v2566 = vadd.f32 %v2469, %v2565
      %v2567 = vpop.f32.mrf.mxu0
      %2568 = vmatprep.mubr.bf16.mxu0 %v1868
      %2569 = vmatmul.mubr.bf16.gmra.mxu0 %v1867
      %v2570 = vpop.f32.mrf.mxu0
      %v2571 = vadd.f32 %v2474, %v2570
      %v2572 = vpop.f32.mrf.mxu0
      %v2573 = vpop.f32.mrf.mxu0
      %v2574 = vadd.f32 %v2477, %v2573
      %v2575 = vpop.f32.mrf.mxu0
      %2576 = vmatprep.mubr.bf16.mxu0 %v1877
      %2577 = vmatmul.mubr.bf16.gmra.mxu0 %v1876
      %v2578 = vpop.f32.mrf.mxu0
      %v2579 = vadd.f32 %v2482, %v2578
      %v2580 = vpop.f32.mrf.mxu0
      %v2581 = vpop.f32.mrf.mxu0
      %v2582 = vadd.f32 %v2485, %v2581
      %v2583 = vpop.f32.mrf.mxu0
      %2584 = vmatprep.mubr.bf16.mxu0 %v1886
      %2585 = vmatmul.mubr.bf16.gmra.mxu0 %v1885
      %v2586 = vpop.f32.mrf.mxu0
      %v2587 = vadd.f32 %v2490, %v2586
      %v2588 = vpop.f32.mrf.mxu0
      %v2589 = vpop.f32.mrf.mxu0
      %v2590 = vadd.f32 %v2493, %v2589
      %v2591 = vpop.f32.mrf.mxu0
      %2592 = vmatprep.mubr.bf16.mxu0 %v1895
      %2593 = vmatmul.mubr.bf16.gmra.mxu0 %v1894
      %v2594 = vpop.f32.mrf.mxu0
      %v2595 = vadd.f32 %v2498, %v2594
      %v2596 = vpop.f32.mrf.mxu0
      %v2597 = vpop.f32.mrf.mxu0
      %v2598 = vadd.f32 %v2501, %v2597
      %v2599 = vpop.f32.mrf.mxu0
      %2600 = vmatprep.mubr.bf16.mxu0 %v1904
      %2601 = vmatmul.mubr.bf16.gmra.mxu0 %v1903
      %v2602 = vpop.f32.mrf.mxu0
      %v2603 = vadd.f32 %v2506, %v2602
      %v2604 = vpop.f32.mrf.mxu0
      %v2605 = vpop.f32.mrf.mxu0
      %v2606 = vadd.f32 %v2509, %v2605
      %v2607 = vpop.f32.mrf.mxu0
      %2608 = vmatprep.mubr.bf16.mxu0 %v1913
      %2609 = vmatmul.mubr.bf16.gmra.mxu0 %v1912
      %v2610 = vpop.f32.mrf.mxu0
      %v2611 = vadd.f32 %v2514, %v2610
      %v2612 = vpop.f32.mrf.mxu0
      %v2613 = vpop.f32.mrf.mxu0
      %v2614 = vadd.f32 %v2517, %v2613
      %v2615 = vpop.f32.mrf.mxu0
      %2616 = vdwg.mxu0
      %2617 = vmatprep.subr.bf16.mxu0 0
      %2618 = vmatpush1.bf16.msra.mxu0 %v2318
      %2619 = vmatprep.subr.bf16.mxu0 0
      %2620 = vmatpush1.bf16.msra.mxu0 %v2317
      %2621 = vmatprep.subr.bf16.mxu0 0
      %2622 = vmatpush1.bf16.msra.mxu0 %v2316
      %2623 = vmatprep.subr.bf16.mxu0 0
      %2624 = vmatpush1.bf16.msra.mxu0 %v2315
      %2625 = vmatprep.subr.bf16.mxu0 0
      %2626 = vmatpush1.bf16.msra.mxu0 %v2314
      %2627 = vmatprep.subr.bf16.mxu0 0
      %2628 = vmatpush1.bf16.msra.mxu0 %v2313
      %2629 = vmatprep.subr.bf16.mxu0 0
      %2630 = vmatpush1.bf16.msra.mxu0 %v2312
      %2631 = vmatprep.subr.bf16.mxu0 0
      %2632 = vmatpush1.bf16.msra.mxu0 %v2311
      %2633 = vmatprep.subr.bf16.mxu0 0
      %2634 = vmatpush2.bf16.msra.mxu0 %v2326
      %2635 = vmatprep.subr.bf16.mxu0 0
      %2636 = vmatpush2.bf16.msra.mxu0 %v2325
      %2637 = vmatprep.subr.bf16.mxu0 0
      %2638 = vmatpush2.bf16.msra.mxu0 %v2324
      %2639 = vmatprep.subr.bf16.mxu0 0
      %2640 = vmatpush2.bf16.msra.mxu0 %v2323
      %2641 = vmatprep.subr.bf16.mxu0 0
      %2642 = vmatpush2.bf16.msra.mxu0 %v2322
      %2643 = vmatprep.subr.bf16.mxu0 0
      %2644 = vmatpush2.bf16.msra.mxu0 %v2321
      %2645 = vmatprep.subr.bf16.mxu0 0
      %2646 = vmatpush2.bf16.msra.mxu0 %v2320
      %2647 = vmatprep.subr.bf16.mxu0 0
      %2648 = vmatpush2.bf16.msra.mxu0 %v2319
      %2649 = vmatprep.mubr.bf16.mxu0 %v1852
      %2650 = vmatmul.mubr.bf16.gmra.mxu0 %v1851
      %v2651 = vpop.f32.mrf.mxu0
      %v2652 = vadd.f32 %v2555, %v2651
      %v2653 = vpop.f32.mrf.mxu0
      %v2654 = vpop.f32.mrf.mxu0
      %v2655 = vadd.f32 %v2558, %v2654
      %v2656 = vpop.f32.mrf.mxu0
      %2657 = vmatprep.mubr.bf16.mxu0 %v1861
      %2658 = vmatmul.mubr.bf16.gmra.mxu0 %v1860
      %v2659 = vpop.f32.mrf.mxu0
      %v2660 = vadd.f32 %v2563, %v2659
      %v2661 = vpop.f32.mrf.mxu0
      %v2662 = vpop.f32.mrf.mxu0
      %v2663 = vadd.f32 %v2566, %v2662
      %v2664 = vpop.f32.mrf.mxu0
      %2665 = vmatprep.mubr.bf16.mxu0 %v1870
      %2666 = vmatmul.mubr.bf16.gmra.mxu0 %v1869
      %v2667 = vpop.f32.mrf.mxu0
      %v2668 = vadd.f32 %v2571, %v2667
      %v2669 = vpop.f32.mrf.mxu0
      %v2670 = vpop.f32.mrf.mxu0
      %v2671 = vadd.f32 %v2574, %v2670
      %v2672 = vpop.f32.mrf.mxu0
      %2673 = vmatprep.mubr.bf16.mxu0 %v1879
      %2674 = vmatmul.mubr.bf16.gmra.mxu0 %v1878
      %v2675 = vpop.f32.mrf.mxu0
      %v2676 = vadd.f32 %v2579, %v2675
      %v2677 = vpop.f32.mrf.mxu0
      %v2678 = vpop.f32.mrf.mxu0
      %v2679 = vadd.f32 %v2582, %v2678
      %v2680 = vpop.f32.mrf.mxu0
      %2681 = vmatprep.mubr.bf16.mxu0 %v1888
      %2682 = vmatmul.mubr.bf16.gmra.mxu0 %v1887
      %v2683 = vpop.f32.mrf.mxu0
      %v2684 = vadd.f32 %v2587, %v2683
      %v2685 = vpop.f32.mrf.mxu0
      %v2686 = vpop.f32.mrf.mxu0
      %v2687 = vadd.f32 %v2590, %v2686
      %v2688 = vpop.f32.mrf.mxu0
      %2689 = vmatprep.mubr.bf16.mxu0 %v1897
      %2690 = vmatmul.mubr.bf16.gmra.mxu0 %v1896
      %v2691 = vpop.f32.mrf.mxu0
      %v2692 = vadd.f32 %v2595, %v2691
      %v2693 = vpop.f32.mrf.mxu0
      %v2694 = vpop.f32.mrf.mxu0
      %v2695 = vadd.f32 %v2598, %v2694
      %v2696 = vpop.f32.mrf.mxu0
      %2697 = vmatprep.mubr.bf16.mxu0 %v1906
      %2698 = vmatmul.mubr.bf16.gmra.mxu0 %v1905
      %v2699 = vpop.f32.mrf.mxu0
      %v2700 = vadd.f32 %v2603, %v2699
      %v2701 = vpop.f32.mrf.mxu0
      %v2702 = vpop.f32.mrf.mxu0
      %v2703 = vadd.f32 %v2606, %v2702
      %v2704 = vpop.f32.mrf.mxu0
      %2705 = vmatprep.mubr.bf16.mxu0 %v1915
      %2706 = vmatmul.mubr.bf16.gmra.mxu0 %v1914
      %v2707 = vpop.f32.mrf.mxu0
      %v2708 = vadd.f32 %v2611, %v2707
      %v2709 = vpop.f32.mrf.mxu0
      %v2710 = vpop.f32.mrf.mxu0
      %v2711 = vadd.f32 %v2614, %v2710
      %v2712 = vpop.f32.mrf.mxu0
      %2713 = vdwg.mxu0
      %2714 = vmatprep.subr.bf16.mxu0 0
      %2715 = vmatpush1.bf16.msra.mxu0 %v2334
      %2716 = vmatprep.subr.bf16.mxu0 0
      %2717 = vmatpush1.bf16.msra.mxu0 %v2333
      %2718 = vmatprep.subr.bf16.mxu0 0
      %2719 = vmatpush1.bf16.msra.mxu0 %v2332
      %2720 = vmatprep.subr.bf16.mxu0 0
      %2721 = vmatpush1.bf16.msra.mxu0 %v2331
      %2722 = vmatprep.subr.bf16.mxu0 0
      %2723 = vmatpush1.bf16.msra.mxu0 %v2330
      %2724 = vmatprep.subr.bf16.mxu0 0
      %2725 = vmatpush1.bf16.msra.mxu0 %v2329
      %2726 = vmatprep.subr.bf16.mxu0 0
      %2727 = vmatpush1.bf16.msra.mxu0 %v2328
      %2728 = vmatprep.subr.bf16.mxu0 0
      %2729 = vmatpush1.bf16.msra.mxu0 %v2327
      %2730 = vmatprep.subr.bf16.mxu0 0
      %2731 = vmatpush2.bf16.msra.mxu0 %v2342
      %2732 = vmatprep.subr.bf16.mxu0 0
      %2733 = vmatpush2.bf16.msra.mxu0 %v2341
      %2734 = vmatprep.subr.bf16.mxu0 0
      %2735 = vmatpush2.bf16.msra.mxu0 %v2340
      %2736 = vmatprep.subr.bf16.mxu0 0
      %2737 = vmatpush2.bf16.msra.mxu0 %v2339
      %2738 = vmatprep.subr.bf16.mxu0 0
      %2739 = vmatpush2.bf16.msra.mxu0 %v2338
      %2740 = vmatprep.subr.bf16.mxu0 0
      %2741 = vmatpush2.bf16.msra.mxu0 %v2337
      %2742 = vmatprep.subr.bf16.mxu0 0
      %2743 = vmatpush2.bf16.msra.mxu0 %v2336
      %2744 = vmatprep.subr.bf16.mxu0 0
      %2745 = vmatpush2.bf16.msra.mxu0 %v2335
      %2746 = vmatprep.mubr.bf16.mxu0 %v1854
      %2747 = vmatmul.mubr.bf16.gmra.mxu0 %v1853
      %v2748 = vpop.f32.mrf.mxu0
      %v2749 = vadd.f32 %v2652, %v2748
      %v2750 = vpop.f32.mrf.mxu0
      %v2751 = vpop.f32.mrf.mxu0
      %v2752 = vadd.f32 %v2655, %v2751
      %v2753 = vpop.f32.mrf.mxu0
      %2754 = vmatprep.mubr.bf16.mxu0 %v1863
      %2755 = vmatmul.mubr.bf16.gmra.mxu0 %v1862
      %v2756 = vpop.f32.mrf.mxu0
      %v2757 = vadd.f32 %v2660, %v2756
      %v2758 = vpop.f32.mrf.mxu0
      %v2759 = vpop.f32.mrf.mxu0
      %v2760 = vadd.f32 %v2663, %v2759
      %v2761 = vpop.f32.mrf.mxu0
      %2762 = vmatprep.mubr.bf16.mxu0 %v1872
      %2763 = vmatmul.mubr.bf16.gmra.mxu0 %v1871
      %v2764 = vpop.f32.mrf.mxu0
      %v2765 = vadd.f32 %v2668, %v2764
      %v2766 = vpop.f32.mrf.mxu0
      %v2767 = vpop.f32.mrf.mxu0
      %v2768 = vadd.f32 %v2671, %v2767
      %v2769 = vpop.f32.mrf.mxu0
      %2770 = vmatprep.mubr.bf16.mxu0 %v1881
      %2771 = vmatmul.mubr.bf16.gmra.mxu0 %v1880
      %v2772 = vpop.f32.mrf.mxu0
      %v2773 = vadd.f32 %v2676, %v2772
      %v2774 = vpop.f32.mrf.mxu0
      %v2775 = vpop.f32.mrf.mxu0
      %v2776 = vadd.f32 %v2679, %v2775
      %v2777 = vpop.f32.mrf.mxu0
      %2778 = vmatprep.mubr.bf16.mxu0 %v1890
      %2779 = vmatmul.mubr.bf16.gmra.mxu0 %v1889
      %v2780 = vpop.f32.mrf.mxu0
      %v2781 = vadd.f32 %v2684, %v2780
      %v2782 = vpop.f32.mrf.mxu0
      %v2783 = vpop.f32.mrf.mxu0
      %v2784 = vadd.f32 %v2687, %v2783
      %v2785 = vpop.f32.mrf.mxu0
      %2786 = vmatprep.mubr.bf16.mxu0 %v1899
      %2787 = vmatmul.mubr.bf16.gmra.mxu0 %v1898
      %v2788 = vpop.f32.mrf.mxu0
      %v2789 = vadd.f32 %v2692, %v2788
      %v2790 = vpop.f32.mrf.mxu0
      %v2791 = vpop.f32.mrf.mxu0
      %v2792 = vadd.f32 %v2695, %v2791
      %v2793 = vpop.f32.mrf.mxu0
      %2794 = vmatprep.mubr.bf16.mxu0 %v1908
      %2795 = vmatmul.mubr.bf16.gmra.mxu0 %v1907
      %v2796 = vpop.f32.mrf.mxu0
      %v2797 = vadd.f32 %v2700, %v2796
      %v2798 = vpop.f32.mrf.mxu0
      %v2799 = vpop.f32.mrf.mxu0
      %v2800 = vadd.f32 %v2703, %v2799
      %v2801 = vpop.f32.mrf.mxu0
      %2802 = vmatprep.mubr.bf16.mxu0 %v1917
      %2803 = vmatmul.mubr.bf16.gmra.mxu0 %v1916
      %v2804 = vpop.f32.mrf.mxu0
      %v2805 = vadd.f32 %v2708, %v2804
      %v2806 = vpop.f32.mrf.mxu0
      %v2807 = vpop.f32.mrf.mxu0
      %v2808 = vadd.f32 %v2711, %v2807
      %v2809 = vpop.f32.mrf.mxu0
      %2810 = vdwg.mxu0
      %2811 = vmatprep.subr.bf16.mxu0 0
      %2812 = vmatpush1.bf16.msra.mxu0 %v2350
      %2813 = vmatprep.subr.bf16.mxu0 0
      %2814 = vmatpush1.bf16.msra.mxu0 %v2349
      %2815 = vmatprep.subr.bf16.mxu0 0
      %2816 = vmatpush1.bf16.msra.mxu0 %v2348
      %2817 = vmatprep.subr.bf16.mxu0 0
      %2818 = vmatpush1.bf16.msra.mxu0 %v2347
      %2819 = vmatprep.subr.bf16.mxu0 0
      %2820 = vmatpush1.bf16.msra.mxu0 %v2346
      %2821 = vmatprep.subr.bf16.mxu0 0
      %2822 = vmatpush1.bf16.msra.mxu0 %v2345
      %2823 = vmatprep.subr.bf16.mxu0 0
      %2824 = vmatpush1.bf16.msra.mxu0 %v2344
      %2825 = vmatprep.subr.bf16.mxu0 0
      %2826 = vmatpush1.bf16.msra.mxu0 %v2343
      %2827 = vmatprep.subr.bf16.mxu0 0
      %2828 = vmatpush2.bf16.msra.mxu0 0
      %2829 = vmatprep.subr.bf16.mxu0 0
      %2830 = vmatpush2.bf16.msra.mxu0 0
      %2831 = vmatprep.subr.bf16.mxu0 0
      %2832 = vmatpush2.bf16.msra.mxu0 0
      %2833 = vmatprep.subr.bf16.mxu0 0
      %2834 = vmatpush2.bf16.msra.mxu0 0
      %2835 = vmatprep.subr.bf16.mxu0 0
      %2836 = vmatpush2.bf16.msra.mxu0 0
      %2837 = vmatprep.subr.bf16.mxu0 0
      %2838 = vmatpush2.bf16.msra.mxu0 0
      %2839 = vmatprep.subr.bf16.mxu0 0
      %2840 = vmatpush2.bf16.msra.mxu0 0
      %2841 = vmatprep.subr.bf16.mxu0 0
      %2842 = vmatpush2.bf16.msra.mxu0 0
      %2843 = vmatprep.mubr.bf16.mxu0 0
      %2844 = vmatmul.mubr.bf16.gmra.mxu0 %v1855
      %v2845 = vpop.f32.mrf.mxu0
      %v2846 = vadd.f32 %v2749, %v2845
      %v2847 = vpop.f32.mrf.mxu0
      %v2848 = vpop.f32.mrf.mxu0
      %v2849 = vadd.f32 %v2752, %v2848
      %v2850 = vpop.f32.mrf.mxu0
      %2851 = vmatprep.mubr.bf16.mxu0 0
      %2852 = vmatmul.mubr.bf16.gmra.mxu0 %v1864
      %v2853 = vpop.f32.mrf.mxu0
      %v2854 = vadd.f32 %v2757, %v2853
      %v2855 = vpop.f32.mrf.mxu0
      %v2856 = vpop.f32.mrf.mxu0
      %v2857 = vadd.f32 %v2760, %v2856
      %v2858 = vpop.f32.mrf.mxu0
      %2859 = vmatprep.mubr.bf16.mxu0 0
      %2860 = vmatmul.mubr.bf16.gmra.mxu0 %v1873
      %v2861 = vpop.f32.mrf.mxu0
      %v2862 = vadd.f32 %v2765, %v2861
      %v2863 = vpop.f32.mrf.mxu0
      %v2864 = vpop.f32.mrf.mxu0
      %v2865 = vadd.f32 %v2768, %v2864
      %v2866 = vpop.f32.mrf.mxu0
      %2867 = vmatprep.mubr.bf16.mxu0 0
      %2868 = vmatmul.mubr.bf16.gmra.mxu0 %v1882
      %v2869 = vpop.f32.mrf.mxu0
      %v2870 = vadd.f32 %v2773, %v2869
      %v2871 = vpop.f32.mrf.mxu0
      %v2872 = vpop.f32.mrf.mxu0
      %v2873 = vadd.f32 %v2776, %v2872
      %v2874 = vpop.f32.mrf.mxu0
      %2875 = vmatprep.mubr.bf16.mxu0 0
      %2876 = vmatmul.mubr.bf16.gmra.mxu0 %v1891
      %v2877 = vpop.f32.mrf.mxu0
      %v2878 = vadd.f32 %v2781, %v2877
      %v2879 = vpop.f32.mrf.mxu0
      %v2880 = vpop.f32.mrf.mxu0
      %v2881 = vadd.f32 %v2784, %v2880
      %v2882 = vpop.f32.mrf.mxu0
      %2883 = vmatprep.mubr.bf16.mxu0 0
      %2884 = vmatmul.mubr.bf16.gmra.mxu0 %v1900
      %v2885 = vpop.f32.mrf.mxu0
      %v2886 = vadd.f32 %v2789, %v2885
      %v2887 = vpop.f32.mrf.mxu0
      %v2888 = vpop.f32.mrf.mxu0
      %v2889 = vadd.f32 %v2792, %v2888
      %v2890 = vpop.f32.mrf.mxu0
      %2891 = vmatprep.mubr.bf16.mxu0 0
      %2892 = vmatmul.mubr.bf16.gmra.mxu0 %v1909
      %v2893 = vpop.f32.mrf.mxu0
      %v2894 = vadd.f32 %v2797, %v2893
      %v2895 = vpop.f32.mrf.mxu0
      %v2896 = vpop.f32.mrf.mxu0
      %v2897 = vadd.f32 %v2800, %v2896
      %v2898 = vpop.f32.mrf.mxu0
      %2899 = vmatprep.mubr.bf16.mxu0 0
      %2900 = vmatmul.mubr.bf16.gmra.mxu0 %v1918
      %v2901 = vpop.f32.mrf.mxu0
      %v2902 = vadd.f32 %v2805, %v2901
      %v2903 = vpop.f32.mrf.mxu0
      %v2904 = vpop.f32.mrf.mxu0
      %v2905 = vadd.f32 %v2808, %v2904
      %v2906 = vpop.f32.mrf.mxu0
      %2907 = vdwg.mxu0
      %v2908 = vpack.c.bf16 %v2849, %v2846
      %v2909 = vpack.c.bf16 %v2857, %v2854
      %v2910 = vpack.c.bf16 %v2865, %v2862
      %v2911 = vpack.c.bf16 %v2873, %v2870
      %v2912 = vpack.c.bf16 %v2881, %v2878
      %v2913 = vpack.c.bf16 %v2889, %v2886
      %v2914 = vpack.c.bf16 %v2897, %v2894
      %v2915 = vpack.c.bf16 %v2905, %v2902
      %v2924 = vunpack.c.l.b16 %v2908
      %v2925 = vunpack.c.h.b16 %v2908
      %v2926 = vunpack.c.l.b16 %v2909
      %v2927 = vunpack.c.h.b16 %v2909
      %v2928 = vunpack.c.l.b16 %v2910
      %v2929 = vunpack.c.h.b16 %v2910
      %v2930 = vunpack.c.l.b16 %v2911
      %v2931 = vunpack.c.h.b16 %v2911
      %v2932 = vunpack.c.l.b16 %v2912
      %v2933 = vunpack.c.h.b16 %v2912
      %v2934 = vunpack.c.l.b16 %v2913
      %v2935 = vunpack.c.h.b16 %v2913
      %v2936 = vunpack.c.l.b16 %v2914
      %v2937 = vunpack.c.h.b16 %v2914
      %v2938 = vunpack.c.l.b16 %v2915
      %v2939 = vunpack.c.h.b16 %v2915
      %v2940 = vpack.c.b16 %v2924, %v2924
      %v2941 = vpack.c.b16 %v2925, %v2925
      %v2942 = vpack.c.b16 %v2926, %v2926
      %v2943 = vpack.c.b16 %v2927, %v2927
      %v2944 = vpack.c.b16 %v2928, %v2928
      %v2945 = vpack.c.b16 %v2929, %v2929
      %v2946 = vpack.c.b16 %v2930, %v2930
      %v2947 = vpack.c.b16 %v2931, %v2931
      %v2948 = vpack.c.b16 %v2932, %v2932
      %v2949 = vpack.c.b16 %v2933, %v2933
      %v2950 = vpack.c.b16 %v2934, %v2934
      %v2951 = vpack.c.b16 %v2935, %v2935
      %v2952 = vpack.c.b16 %v2936, %v2936
      %v2953 = vpack.c.b16 %v2937, %v2937
      %v2954 = vpack.c.b16 %v2938, %v2938
      %v2955 = vpack.c.b16 %v2939, %v2939
      %2972 = vst [vmem:[%s261] sm:$0xf] %v2940
      %2973 = vst [vmem:[%s261 + $0x4] sm:$0xf] %v2941
      %2974 = vst [vmem:[%s261 + $0x8] sm:$0xf] %v2942
      %2975 = vst [vmem:[%s261 + $0xc] sm:$0xf] %v2943
      %2976 = vst [vmem:[%s261 + $0x10] sm:$0xf] %v2944
      %2977 = vst [vmem:[%s261 + $0x14] sm:$0xf] %v2945
      %2978 = vst [vmem:[%s261 + $0x18] sm:$0xf] %v2946
      %2979 = vst [vmem:[%s261 + $0x1c] sm:$0xf] %v2947
      %2980 = vst [vmem:[%s261 + $0x20] sm:$0xf] %v2948
      %2981 = vst [vmem:[%s261 + $0x24] sm:$0xf] %v2949
      %2982 = vst [vmem:[%s261 + $0x28] sm:$0xf] %v2950
      %2983 = vst [vmem:[%s261 + $0x2c] sm:$0xf] %v2951
      %2984 = vst [vmem:[%s261 + $0x30] sm:$0xf] %v2952
      %2985 = vst [vmem:[%s261 + $0x34] sm:$0xf] %v2953
      %2986 = vst [vmem:[%s261 + $0x38] sm:$0xf] %v2954
      %2987 = vst [vmem:[%s261 + $0x3c] sm:$0xf] %v2955
      %v2988 = vadd.f32 %v2846, %v2849
      %v2989 = vadd.f32 %v2988, %v2854
      %v2990 = vadd.f32 %v2989, %v2857
      %v2991 = vadd.f32 %v2990, %v2862
      %v2992 = vadd.f32 %v2991, %v2865
      %v2993 = vadd.f32 %v2992, %v2870
      %v2994 = vadd.f32 %v2993, %v2873
      %v2995 = vadd.f32 %v2994, %v2878
      %v2996 = vadd.f32 %v2995, %v2881
      %v2997 = vadd.f32 %v2996, %v2886
      %v2998 = vadd.f32 %v2997, %v2889
      %v2999 = vadd.f32 %v2998, %v2894
      %v3000 = vadd.f32 %v2999, %v2897
      %v3001 = vadd.f32 %v3000, %v2902
      %v3002 = vadd.f32 %v3001, %v2905
      %v3003 = vrot.slane %v3002, 4
      %v3004 = vadd.f32 %v3002, %v3003
      %v3005 = vrot.slane %v3004, 2
      %v3006 = vadd.f32 %v3004, %v3005
      %v3007 = vrot.slane %v3006, 1
      %v3008 = vadd.f32 %v3006, %v3007
      %v3009 = vmul.f32 %v2846, %v2846
      %v3010 = vmul.f32 %v2849, %v2849
      %v3011 = vmul.f32 %v2854, %v2854
      %v3012 = vmul.f32 %v2857, %v2857
      %v3013 = vmul.f32 %v2862, %v2862
      %v3014 = vmul.f32 %v2865, %v2865
      %v3015 = vmul.f32 %v2870, %v2870
      %v3016 = vmul.f32 %v2873, %v2873
      %v3017 = vmul.f32 %v2878, %v2878
      %v3018 = vmul.f32 %v2881, %v2881
      %v3019 = vmul.f32 %v2886, %v2886
      %v3020 = vmul.f32 %v2889, %v2889
      %v3021 = vmul.f32 %v2894, %v2894
      %v3022 = vmul.f32 %v2897, %v2897
      %v3023 = vmul.f32 %v2902, %v2902
      %v3024 = vmul.f32 %v2905, %v2905
      %v3025 = vadd.f32 %v3009, %v3010
      %v3026 = vadd.f32 %v3025, %v3011
      %v3027 = vadd.f32 %v3026, %v3012
      %v3028 = vadd.f32 %v3027, %v3013
      %v3029 = vadd.f32 %v3028, %v3014
      %v3030 = vadd.f32 %v3029, %v3015
      %v3031 = vadd.f32 %v3030, %v3016
      %v3032 = vadd.f32 %v3031, %v3017
      %v3033 = vadd.f32 %v3032, %v3018
      %v3034 = vadd.f32 %v3033, %v3019
      %v3035 = vadd.f32 %v3034, %v3020
      %v3036 = vadd.f32 %v3035, %v3021
      %v3037 = vadd.f32 %v3036, %v3022
      %v3038 = vadd.f32 %v3037, %v3023
      %v3039 = vadd.f32 %v3038, %v3024
      %v3040 = vrot.slane %v3039, 4
      %v3041 = vadd.f32 %v3039, %v3040
      %v3042 = vrot.slane %v3041, 2
      %v3043 = vadd.f32 %v3041, %v3042
      %v3044 = vrot.slane %v3043, 1
      %v3045 = vadd.f32 %v3043, %v3044
      %vm3046 = vcmask 1040384
      %v3047 = vsel %vm3046, %v3008, %v3045
      %3048 = vst [vmem:[%s268] sm:$0x3] %v3047
      %s3049 = smul.u32 8, %s22
      %p3050 = scmp.lt.s32.totalorder %s21, 1
      %s3051 = scalar_select %p3050, %s21, 1
      %p3052 = scmp.lt.s32.totalorder %s3049, 15
      %s3053 = scalar_select %p3052, %s3049, 15
      %s3054 = smul.addr %s3053, 2
      %s3055 = smul.addr %s3051, 32
      %s3056 = sadd.s32 %s3054, %s3055
      %s3057 = smul.addr %s3056, 4
      %s3058 = scalar_lea.vmem %s4, %s3057
      %s3059 = smul.u32 %s21, 2
      %s3060 = sadd.s32 %s3059, %s22
      %p3061 = scmp.lt.s32.totalorder %s3060, 3
      %s3062 = scalar_select %p3061, %s3060, 3
      %s3063 = smul.addr %s3062, 2
      %s3064 = scalar_lea.vmem %s5, %s3063
      // Predicated region
      $region41: #{bottleneck_forward.5} parent=35 // pred_check
        %p3065 = pneg %p138
      $region42: #{bottleneck_forward.5} parent=35 // pred_check_branch
        %3067 = sbr.rel (%p3065) target = $region44
      $region43: #{bottleneck_forward.5} parent=35 // pred_region
        %s3068 = smul.u32 8, %s22
      $region44: #{bottleneck_forward.5} parent=35 // pred_fallthru
        _
      // Predicated region
      $region45: #{bottleneck_forward.5} parent=35 // pred_check
        %p3069 = pneg %p168
      $region46: #{bottleneck_forward.5} parent=35 // pred_check_branch
        %3071 = sbr.rel (%p3069) target = $region48
      $region47: #{bottleneck_forward.5} parent=35 // pred_region
        %s3072 = smul.u32 %s21, 2
        %s3073 = sadd.s32 %s3072, %s22
      $region48: #{bottleneck_forward.5} parent=35 // pred_fallthru
        _
    $region36: #{bottleneck_forward.5} parent=5 // pred_fallthru
      _
    %p3074 = scmp.le.s32.totalorder 2, %s12
    // Predicated region
    $region49: #{bottleneck_forward.5} parent=5 // pred_check
      %p3075 = pneg %p3074
    $region50: #{bottleneck_forward.5} parent=5 // pred_check_branch
      %3077 = sbr.rel (%p3075) target = $region52
    $region51: #{bottleneck_forward.5} parent=5 // pred_region
      %s3078 = ssub.s32 %s12, 2
      // Predicated region
      $region53: #{bottleneck_forward.5} parent=51 // pred_check
        %p3079 = pneg %p144
      $region54: #{bottleneck_forward.5} parent=51 // pred_check_branch
        %3081 = sbr.rel (%p3079) target = $region56
      $region55: #{bottleneck_forward.5} parent=51 // pred_region
        %s3082 = smul.u32 8, %s24
        %p3083 = scmp.lt.s32.totalorder %s23, 1
        %s3084 = scalar_select %p3083, %s23, 1
        %p3085 = scmp.lt.s32.totalorder %s3082, 15
        %s3086 = scalar_select %p3085, %s3082, 15
        %s3087 = smul.addr %s3086, 2
        %s3088 = smul.addr %s3084, 32
        %s3089 = sadd.s32 %s3087, %s3088
        %s3090 = smul.addr %s3089, 4
        %s3091 = scalar_lea.vmem %s4, %s3090
      $region56: #{bottleneck_forward.5} parent=51 // pred_fallthru
        _
      // Predicated region
      $region57: #{bottleneck_forward.5} parent=51 // pred_check
        %p3092 = pneg %p174
      $region58: #{bottleneck_forward.5} parent=51 // pred_check_branch
        %3094 = sbr.rel (%p3092) target = $region60
      $region59: #{bottleneck_forward.5} parent=51 // pred_region
        %s3095 = smul.u32 %s23, 2
        %s3096 = sadd.s32 %s3095, %s24
        %p3097 = scmp.lt.s32.totalorder %s3096, 3
        %s3098 = scalar_select %p3097, %s3096, 3
        %s3099 = smul.addr %s3098, 2
        %s3100 = scalar_lea.vmem %s5, %s3099
      $region60: #{bottleneck_forward.5} parent=51 // pred_fallthru
        _
    $region52: #{bottleneck_forward.5} parent=5 // pred_fallthru
      _
  $region6: #{bottleneck_forward.5} parent=0 // loop_footer
    %s16 = sadd.s32 1, %s12
  $region7: #{bottleneck_forward.5} parent=0 // loop_footer_branch
    %11 = sbr.rel target = $region3
  $region8: #{bottleneck_forward.5} parent=0 // loop_exit
    _

</llo_original>
